<compile_context>
chip_gen: v5e
topology: v5e:2x2
jax: 0.10.0
libtpu: 0.0.40
codegen_flags: <defaults>
</compile_context>

<pallas_src>
import functools

import jax
import jax.numpy as jnp
import numpy as np
from jax import lax
from jax.experimental import pallas as pl
from jax.experimental.pallas import tpu as pltpu


# ------------------------------ Pallas kernel -------------------------------

def _mp_conv_kernel(rows_ref, w_ref, out_ref, a_ref, *, gamma, n_rows, c_out,
                    d_len, block_i, inner_unroll):
    """One (C_out, TL) output tile of the MP "convolution".

    rows_ref: (M, TL)           im2col features x positions (positions in lanes)
    w_ref:    (M, 2*C_out, 1)   [+w | -w] per tap, trailing unit lane axis
                                (native lane splat when broadcasting over TL)
    out_ref:  (C_out, TL)       lane-dense output block
    a_ref:    (M, 2*C_out, TL)  scratch: magnitudes |rows +/- w| only
    """
    C2, TL = a_ref.shape[1], a_ref.shape[2]
    gamma_f = jnp.float32(gamma)
    m_f = jnp.float32(n_rows)

    # --- prologue: a[i, c] = |rows[i] + w2[i, c]|  (magnitudes only; the
    # signed values are cheap to recompute and never stored -> half the
    # prologue vst traffic and half the scratch of the previous version).
    a_ref[...] = jnp.abs(rows_ref[...][:, None, :] + w_ref[...])

    # --- hot loop: T_i = sum_j max(a_i, a_j), folded straight into k and S.
    # Outer loop is register-blocked over block_i rows of i so each a_ref[j]
    # load is reused block_i times; per (i, j) pair the work is 1 max + 1 add
    # (VALU-bound), 1/block_i vector loads.
    init = (jnp.zeros((C2, TL), jnp.float32),   # k  (support size)
            jnp.zeros((C2, TL), jnp.float32))   # S  (sum of selected z)

    def outer(ob, carry):
        k_acc, s_acc = carry
        i0 = ob * block_i

        # Magnitudes for this i-block stay resident in vregs across the inner
        # reduction over j.
        a_blk = [a_ref[i0 + b] for b in range(block_i)]

        def inner(j, ts):
            a_j = a_ref[j]
            return tuple(t + jnp.maximum(a_j, a_b) for t, a_b in zip(ts, a_blk))

        t0 = tuple(jnp.zeros((C2, TL), jnp.float32) for _ in range(block_i))
        ts = lax.fori_loop(0, n_rows, inner, t0, unroll=inner_unroll)

        # Signed z_i recomputed here (after the inner loop, so it is not live
        # through it): one add over a (2*C_out, TL) slab per i row.
        for b in range(block_i):
            z_b = rows_ref[pl.ds(i0 + b, 1), :] + w_ref[i0 + b]   # (C2, TL)
            f_pos = ts[b] - m_f * z_b          # support test for +z_i
            f_neg = ts[b] + m_f * z_b          # support test for -z_i
            sel_p = (f_pos <= gamma_f).astype(jnp.float32)
            sel_n = (f_neg <= gamma_f).astype(jnp.float32)
            k_acc = k_acc + (sel_p + sel_n)
            s_acc = s_acc + z_b * (sel_p - sel_n)
        return k_acc, s_acc

    k, s = lax.fori_loop(0, n_rows // block_i, outer, init)

    # --- epilogue: tau = (S - gamma)/k, MP value = gamma * D * tau.
    # NOTE: approx reciprocal rejected on purpose — alpha/beta nearly cancel in
    # 0.5*(res_p - res_q), so LUT error would be amplified past tolerance.
    inv_k = pl.reciprocal(jnp.maximum(k, 1.0))
    tau = (s - gamma_f) * inv_k
    res = jnp.where(k > 0.0, (gamma_f * jnp.float32(d_len)) * tau, 0.0)
    out_ref[...] = 0.5 * (res[:c_out, :] - res[c_out:, :])   # alpha - beta


# ------------------------------ host-side glue -------------------------------

def _im2col_rows_t(x, ksize, padding, stride):
    """im2col producing (M, B*L) directly (features x positions-in-lanes).

    Row ordering is c*k*k + i*k + j and column ordering is b*L + l, identical
    to torch.nn.functional.unfold, but built directly in the kernel's layout.
    """
    B, C, H, W = x.shape
    xp = jnp.pad(x, ((0, 0), (0, 0), (padding, padding), (padding, padding)))
    H_out = (H + 2 * padding - ksize) // stride + 1
    W_out = (W + 2 * padding - ksize) // stride + 1
    L = H_out * W_out
    blocks = []
    for c in range(C):
        taps = [xp[:, c, i:i + stride * H_out:stride, j:j + stride * W_out:stride]
                for i in range(ksize) for j in range(ksize)]
        blocks.append(jnp.stack(taps, axis=0).reshape(ksize * ksize, B * L))
    return jnp.concatenate(blocks, axis=0), H_out, W_out


def mp_conv2d(x, weight, *, kernel_size, padding=0, stride=1, gamma=1.0,
              tile_rows=512):
    """MPConv2d.forward (normalize=False) with the MP projection in Pallas."""
    assert gamma >= 0.0, "sort-free support test assumes gamma >= 0"
    B, C_in, H, W = x.shape
    C_out = weight.shape[0]
    M = C_in * kernel_size * kernel_size
    D_len = 2 * M

    # TODO(synk): the normalize=True branch (K*x/||x||) is not implemented;
    # the module defaults to normalize=False and that is what we reproduce.
    # TODO(synk): for very large M*C_out add a C_out grid axis (and an
    # O(M log^2 M) rank/suffix-sum hot loop) instead of shrinking tile_rows.

    rows_t, H_out, W_out = _im2col_rows_t(x.astype(jnp.float32), kernel_size,
                                          padding, stride)        # (M, B*L)
    N = B * H_out * W_out

    # --- position-tile size: lane aligned, >= 2 grid steps when possible
    # (amortizes per-step overhead; gives both v7x TensorCores work), and
    # scratch within a budget that is safe on every generation (v7x: 64 MiB
    # physical / 32 MiB scoped per TC).
    c2 = 2 * C_out
    c2_pad = -(-c2 // 8) * 8                     # sublane-padded 2*C_out
    tl = max(128, (int(tile_rows) // 128) * 128)
    while tl > 128 and -(-N // tl) < 2:
        tl //= 2

    def _vmem_bytes(t):
        scratch = M * c2_pad * t * 4                       # a_ref
        rows_blk = 2 * M * t * 4                           # double-buffered
        w_blk = 2 * M * c2_pad * 128 * 4                   # lane-padded weight
        out_blk = 2 * max(C_out, 8) * t * 4
        return scratch + rows_blk + w_blk + out_blk

    while tl > 128 and _vmem_bytes(tl) > 24 * 1024 * 1024:
        tl //= 2

    # --- register-blocking factor for the i loop: live set during the inner
    # loop is ~ (2*block_i + 2) slabs of (2*C_out, tl) f32; keep under 64 vregs.
    slab_vregs = max(1, (c2_pad * tl) // 1024)
    block_i = 1
    for bi in (4, 3, 2):
        if M % bi == 0 and (2 * bi + 2) * slab_vregs <= 56:
            block_i = bi
            break
    inner_unroll = True if M <= 64 else 8        # cap unroll for large M

    N_pad = (-(-N // tl)) * tl
    if N_pad != N:
        rows_t = jnp.pad(rows_t, ((0, 0), (0, N_pad - N)))

    # Weight folded as [+w | -w]: (M, 2*C_out, 1) with M on sublanes and a
    # trailing unit lane axis so the in-kernel broadcast over positions is a
    # native lane splat (small array; not worth risking a relayout in-kernel).
    w_mat = weight.reshape(C_out, M).T.astype(jnp.float32)          # (M, C_out)
    w2 = jnp.concatenate([w_mat, -w_mat], axis=1)[:, :, None]       # (M, 2C, 1)

    kernel = functools.partial(_mp_conv_kernel, gamma=float(gamma), n_rows=M,
                               c_out=C_out, d_len=D_len, block_i=block_i,
                               inner_unroll=inner_unroll)
    out_t = pl.pallas_call(
        kernel,
        out_shape=jax.ShapeDtypeStruct((C_out, N_pad), jnp.float32),
        grid_spec=pltpu.PrefetchScalarGridSpec(
            num_scalar_prefetch=0,
            grid=(N_pad // tl,),
            in_specs=[
                pl.BlockSpec((M, tl), lambda i: (0, i)),
                pl.BlockSpec((M, 2 * C_out, 1), lambda i: (0, 0, 0)),
            ],
            # Lane-dense output block (C_out sublanes x tl lanes).
            out_specs=pl.BlockSpec((C_out, tl), lambda i: (0, i)),
            scratch_shapes=[
                pltpu.VMEM((M, 2 * C_out, tl), jnp.float32),  # |z| magnitudes
            ],
        ),
        compiler_params=pltpu.CompilerParams(
            # Position tiles are independent -> shard across TensorCores on
            # v7x megacore; a no-op on single-TC v5e/v6e.
            dimension_semantics=("parallel",),
            # Explicit scoped-VMEM limit (raises v5e's 16 MiB default; well
            # under v7x's 64 MiB physical).  Actual usage here is ~1.3 MiB.
            vmem_limit_bytes=32 * 1024 * 1024,
        ),
    )(rows_t, w2)

    conv = out_t[:, :N].reshape(C_out, B, H_out * W_out)            # (C_out,B,L)
    return jnp.transpose(conv, (1, 0, 2)).reshape(B, C_out, H_out, W_out)


# ----------------------- pure-JAX reference (for check) ----------------------

def _unfold_nchw(x, ksize, padding, stride):
    """torch.nn.functional.unfold equivalent: (B, C, H, W) -> (B, C*k*k, L)."""
    B, C, H, W = x.shape
    xp = jnp.pad(x, ((0, 0), (0, 0), (padding, padding), (padding, padding)))
    H_out = (H + 2 * padding - ksize) // stride + 1
    W_out = (W + 2 * padding - ksize) // stride + 1
    cols = []
    for i in range(ksize):
        for j in range(ksize):
            cols.append(
                xp[:, :, i:i + stride * H_out:stride, j:j + stride * W_out:stride])
    patches = jnp.stack(cols, axis=2)              # (B, C, k*k, H_out, W_out)
    return patches.reshape(B, C * ksize * ksize, H_out * W_out)


def _mp_ref(z, gamma, D):
    # z: (R, Hdim); mirrors MPConv2d.MP (sort / cumsum / last-valid-k).
    s = -jnp.sort(-z, axis=1)                      # descending
    cs = jnp.cumsum(s, axis=1)
    idx = jnp.arange(1, z.shape[1] + 1)
    cond = s - (cs - gamma) / idx >= 0
    k = jnp.max(jnp.where(cond, idx, 0), axis=1)
    kc = jnp.clip(k, 1, None)
    cs_k = jnp.take_along_axis(cs, (kc - 1)[:, None], axis=1)[:, 0]
    tau = (cs_k - gamma) / kc
    return jnp.where(k > 0, gamma * D * tau, 0.0)


def mp_conv2d_ref(x, weight, *, kernel_size, padding, stride, gamma):
    B, C_in, H, W = x.shape
    C_out = weight.shape[0]
    H_out = (H + 2 * padding - kernel_size) // stride + 1
    W_out = (W + 2 * padding - kernel_size) // stride + 1
    L = H_out * W_out
    M = C_in * kernel_size * kernel_size
    patches = _unfold_nchw(x, kernel_size, padding, stride)        # (B, M, L)
    p_blo = jnp.transpose(patches, (0, 2, 1))[..., None]           # (B, L, M, 1)
    w = weight.reshape(C_out, M).T[None, None]                     # (1, 1, M, C_out)
    p = jnp.concatenate([p_blo + w, -p_blo - w], axis=2)           # (B, L, 2M, C_out)
    q = jnp.concatenate([p_blo - w, -p_blo + w], axis=2)
    D = p.shape[2]

    def mp4(t):
        r = jnp.transpose(t, (0, 1, 3, 2)).reshape(-1, D)
        return _mp_ref(r, gamma, D).reshape(B, L, C_out)

    conv = 0.5 * (mp4(p) - mp4(q))
    return jnp.transpose(conv, (0, 2, 1)).reshape(B, C_out, H_out, W_out)


# ----------------------------------- main ------------------------------------

if __name__ == "__main__":
    B, C_in, C_out = 2, 4, 8
    H = W = 16
    ksize, padding, stride, gamma = 3, 1, 1, 1.0

    key = jax.random.PRNGKey(0)
    kx, kw = jax.random.split(key)
    x = jax.random.normal(kx, (B, C_in, H, W), dtype=jnp.float32)

    # xavier_normal_ init for weight (C_out, C_in, k, k)
    fan_in = C_in * ksize * ksize
    fan_out = C_out * ksize * ksize
    std = float(np.sqrt(2.0 / (fan_in + fan_out)))
    weight = std * jax.random.normal(kw, (C_out, C_in, ksize, ksize),
                                     dtype=jnp.float32)

    out = mp_conv2d(x, weight, kernel_size=ksize, padding=padding,
                    stride=stride, gamma=gamma)
    out = jax.block_until_ready(out)
    assert out.shape == (B, C_out, H, W)

    ref = mp_conv2d_ref(x, weight, kernel_size=ksize, padding=padding,
                        stride=stride, gamma=gamma)
    np.testing.assert_allclose(np.asarray(out), np.asarray(ref),
                               rtol=2e-3, atol=2e-3)
    print("KERNEL_OK")
</pallas_src>

<mosaic_0001>
module attributes {stable_mosaic.version = 11 : i64} {
  func.func @_mp_conv_kernel(%arg0: i32, %arg1: memref<36x256xf32, #tpu.memory_space<vmem>>, %arg2: memref<36x16x1xf32, #tpu.memory_space<vmem>>, %arg3: memref<8x256xf32, #tpu.memory_space<vmem>>, %arg4: memref<36x16x256xf32, #tpu.memory_space<vmem>>) attributes {dimension_semantics = [#tpu.dimension_semantics<parallel>], iteration_bounds = array<i64: 2>, scalar_prefetch = 0 : i64, scratch_operands = 1 : i64, tpu.core_type = #tpu.core_type<tc>, window_params = [{transform_indices = @transform_0, window_bounds = array<i64: 36, 256>}, {pipeline_mode = #tpu.pipeline_mode<synchronous>, transform_indices = @transform_1, window_bounds = array<i64: 36, 16, 1>}, {transform_indices = @transform_2, window_bounds = array<i64: 8, 256>}]} {
    %c0 = arith.constant 0 : index
    %c0_0 = arith.constant 0 : index
    %0 = vector.load %arg1[%c0, %c0_0] : memref<36x256xf32, #tpu.memory_space<vmem>>, vector<36x256xf32>
    %1 = vector.shape_cast %0 : vector<36x256xf32> to vector<36x1x256xf32>
    %c0_1 = arith.constant 0 : index
    %c0_2 = arith.constant 0 : index
    %c0_3 = arith.constant 0 : index
    %2 = vector.load %arg2[%c0_1, %c0_2, %c0_3] : memref<36x16x1xf32, #tpu.memory_space<vmem>>, vector<36x16x1xf32>
    %3 = vector.broadcast %1 : vector<36x1x256xf32> to vector<36x16x256xf32>
    %4 = vector.broadcast %2 : vector<36x16x1xf32> to vector<36x16x256xf32>
    %5 = arith.addf %3, %4 : vector<36x16x256xf32>
    %6 = math.absf %5 : vector<36x16x256xf32>
    %c0_4 = arith.constant 0 : index
    %c0_5 = arith.constant 0 : index
    %c0_6 = arith.constant 0 : index
    %7 = vector.load %arg4[%c0_4, %c0_5, %c0_6] : memref<36x16x256xf32, #tpu.memory_space<vmem>>, vector<36x16x256xf32>
    tpu.vector_store %arg4[%c0_4, %c0_5, %c0_6], %6 {strides = array<i32>} : memref<36x16x256xf32, #tpu.memory_space<vmem>>, vector<36x16x256xf32>,
    %cst = arith.constant 0.000000e+00 : f32
    %8 = vector.broadcast %cst : f32 to vector<16x256xf32>
    %cst_7 = arith.constant 0.000000e+00 : f32
    %9 = vector.broadcast %cst_7 : f32 to vector<16x256xf32>
    %cst_8 = arith.constant 3.600000e+01 : f32
    %cst_9 = arith.constant 1.000000e+00 : f32
    %c0_i32 = arith.constant 0 : i32
    %c9_i32 = arith.constant 9 : i32
    %10 = arith.addi %c0_i32, %c9_i32 : i32
    %c1_i32 = arith.constant 1 : i32
    %11:2 = scf.for %arg5 = %c0_i32 to %10 step %c1_i32 iter_args(%arg6 = %8, %arg7 = %9) -> (vector<16x256xf32>, vector<16x256xf32>)  : i32 {
      %c4_i32 = arith.constant 4 : i32
      %31 = arith.muli %arg5, %c4_i32 : i32
      %c0_i32_20 = arith.constant 0 : i32
      %32 = arith.addi %31, %c0_i32_20 : i32
      %33 = arith.index_cast %32 : i32 to index
      %c0_21 = arith.constant 0 : index
      %c0_22 = arith.constant 0 : index
      %34 = vector.load %arg4[%33, %c0_21, %c0_22] : memref<36x16x256xf32, #tpu.memory_space<vmem>>, vector<1x16x256xf32>
      %35 = vector.shape_cast %34 : vector<1x16x256xf32> to vector<16x256xf32>
      %c1_i32_23 = arith.constant 1 : i32
      %36 = arith.addi %31, %c1_i32_23 : i32
      %37 = arith.index_cast %36 : i32 to index
      %c0_24 = arith.constant 0 : index
      %c0_25 = arith.constant 0 : index
      %38 = vector.load %arg4[%37, %c0_24, %c0_25] : memref<36x16x256xf32, #tpu.memory_space<vmem>>, vector<1x16x256xf32>
      %39 = vector.shape_cast %38 : vector<1x16x256xf32> to vector<16x256xf32>
      %c2_i32 = arith.constant 2 : i32
      %40 = arith.addi %31, %c2_i32 : i32
      %41 = arith.index_cast %40 : i32 to index
      %c0_26 = arith.constant 0 : index
      %c0_27 = arith.constant 0 : index
      %42 = vector.load %arg4[%41, %c0_26, %c0_27] : memref<36x16x256xf32, #tpu.memory_space<vmem>>, vector<1x16x256xf32>
      %43 = vector.shape_cast %42 : vector<1x16x256xf32> to vector<16x256xf32>
      %c3_i32 = arith.constant 3 : i32
      %44 = arith.addi %31, %c3_i32 : i32
      %45 = arith.index_cast %44 : i32 to index
      %c0_28 = arith.constant 0 : index
      %c0_29 = arith.constant 0 : index
      %46 = vector.load %arg4[%45, %c0_28, %c0_29] : memref<36x16x256xf32, #tpu.memory_space<vmem>>, vector<1x16x256xf32>
      %47 = vector.shape_cast %46 : vector<1x16x256xf32> to vector<16x256xf32>
      %cst_30 = arith.constant 0.000000e+00 : f32
      %48 = vector.broadcast %cst_30 : f32 to vector<16x256xf32>
      %cst_31 = arith.constant 0.000000e+00 : f32
      %49 = vector.broadcast %cst_31 : f32 to vector<16x256xf32>
      %cst_32 = arith.constant 0.000000e+00 : f32
      %50 = vector.broadcast %cst_32 : f32 to vector<16x256xf32>
      %cst_33 = arith.constant 0.000000e+00 : f32
      %51 = vector.broadcast %cst_33 : f32 to vector<16x256xf32>
      %c0_i32_34 = arith.constant 0 : i32
      %52 = arith.index_cast %c0_i32_34 : i32 to index
      %c0_35 = arith.constant 0 : index
      %c0_36 = arith.constant 0 : index
      %53 = vector.load %arg4[%52, %c0_35, %c0_36] : memref<36x16x256xf32, #tpu.memory_space<vmem>>, vector<1x16x256xf32>
      %54 = vector.shape_cast %53 : vector<1x16x256xf32> to vector<16x256xf32>
      %55 = arith.maximumf %54, %35 : vector<16x256xf32>
      %56 = arith.addf %48, %55 : vector<16x256xf32>
      %57 = arith.maximumf %54, %39 : vector<16x256xf32>
      %58 = arith.addf %49, %57 : vector<16x256xf32>
      %59 = arith.maximumf %54, %43 : vector<16x256xf32>
      %60 = arith.addf %50, %59 : vector<16x256xf32>
      %61 = arith.maximumf %54, %47 : vector<16x256xf32>
      %62 = arith.addf %51, %61 : vector<16x256xf32>
      %c1_i32_37 = arith.constant 1 : i32
      %63 = arith.index_cast %c1_i32_37 : i32 to index
      %c0_38 = arith.constant 0 : index
      %c0_39 = arith.constant 0 : index
      %64 = vector.load %arg4[%63, %c0_38, %c0_39] : memref<36x16x256xf32, #tpu.memory_space<vmem>>, vector<1x16x256xf32>
      %65 = vector.shape_cast %64 : vector<1x16x256xf32> to vector<16x256xf32>
      %66 = arith.maximumf %65, %35 : vector<16x256xf32>
      %67 = arith.addf %56, %66 : vector<16x256xf32>
      %68 = arith.maximumf %65, %39 : vector<16x256xf32>
      %69 = arith.addf %58, %68 : vector<16x256xf32>
      %70 = arith.maximumf %65, %43 : vector<16x256xf32>
      %71 = arith.addf %60, %70 : vector<16x256xf32>
      %72 = arith.maximumf %65, %47 : vector<16x256xf32>
      %73 = arith.addf %62, %72 : vector<16x256xf32>
      %c2_i32_40 = arith.constant 2 : i32
      %74 = arith.index_cast %c2_i32_40 : i32 to index
      %c0_41 = arith.constant 0 : index
      %c0_42 = arith.constant 0 : index
      %75 = vector.load %arg4[%74, %c0_41, %c0_42] : memref<36x16x256xf32, #tpu.memory_space<vmem>>, vector<1x16x256xf32>
      %76 = vector.shape_cast %75 : vector<1x16x256xf32> to vector<16x256xf32>
      %77 = arith.maximumf %76, %35 : vector<16x256xf32>
      %78 = arith.addf %67, %77 : vector<16x256xf32>
      %79 = arith.maximumf %76, %39 : vector<16x256xf32>
      %80 = arith.addf %69, %79 : vector<16x256xf32>
      %81 = arith.maximumf %76, %43 : vector<16x256xf32>
      %82 = arith.addf %71, %81 : vector<16x256xf32>
      %83 = arith.maximumf %76, %47 : vector<16x256xf32>
      %84 = arith.addf %73, %83 : vector<16x256xf32>
      %c3_i32_43 = arith.constant 3 : i32
      %85 = arith.index_cast %c3_i32_43 : i32 to index
      %c0_44 = arith.constant 0 : index
      %c0_45 = arith.constant 0 : index
      %86 = vector.load %arg4[%85, %c0_44, %c0_45] : memref<36x16x256xf32, #tpu.memory_space<vmem>>, vector<1x16x256xf32>
      %87 = vector.shape_cast %86 : vector<1x16x256xf32> to vector<16x256xf32>
      %88 = arith.maximumf %87, %35 : vector<16x256xf32>
      %89 = arith.addf %78, %88 : vector<16x256xf32>
      %90 = arith.maximumf %87, %39 : vector<16x256xf32>
      %91 = arith.addf %80, %90 : vector<16x256xf32>
      %92 = arith.maximumf %87, %43 : vector<16x256xf32>
      %93 = arith.addf %82, %92 : vector<16x256xf32>
      %94 = arith.maximumf %87, %47 : vector<16x256xf32>
      %95 = arith.addf %84, %94 : vector<16x256xf32>
      %c4_i32_46 = arith.constant 4 : i32
      %96 = arith.index_cast %c4_i32_46 : i32 to index
      %c0_47 = arith.constant 0 : index
      %c0_48 = arith.constant 0 : index
      %97 = vector.load %arg4[%96, %c0_47, %c0_48] : memref<36x16x256xf32, #tpu.memory_space<vmem>>, vector<1x16x256xf32>
      %98 = vector.shape_cast %97 : vector<1x16x256xf32> to vector<16x256xf32>
      %99 = arith.maximumf %98, %35 : vector<16x256xf32>
      %100 = arith.addf %89, %99 : vector<16x256xf32>
      %101 = arith.maximumf %98, %39 : vector<16x256xf32>
      %102 = arith.addf %91, %101 : vector<16x256xf32>
      %103 = arith.maximumf %98, %43 : vector<16x256xf32>
      %104 = arith.addf %93, %103 : vector<16x256xf32>
      %105 = arith.maximumf %98, %47 : vector<16x256xf32>
      %106 = arith.addf %95, %105 : vector<16x256xf32>
      %c5_i32 = arith.constant 5 : i32
      %107 = arith.index_cast %c5_i32 : i32 to index
      %c0_49 = arith.constant 0 : index
      %c0_50 = arith.constant 0 : index
      %108 = vector.load %arg4[%107, %c0_49, %c0_50] : memref<36x16x256xf32, #tpu.memory_space<vmem>>, vector<1x16x256xf32>
      %109 = vector.shape_cast %108 : vector<1x16x256xf32> to vector<16x256xf32>
      %110 = arith.maximumf %109, %35 : vector<16x256xf32>
      %111 = arith.addf %100, %110 : vector<16x256xf32>
      %112 = arith.maximumf %109, %39 : vector<16x256xf32>
      %113 = arith.addf %102, %112 : vector<16x256xf32>
      %114 = arith.maximumf %109, %43 : vector<16x256xf32>
      %115 = arith.addf %104, %114 : vector<16x256xf32>
      %116 = arith.maximumf %109, %47 : vector<16x256xf32>
      %117 = arith.addf %106, %116 : vector<16x256xf32>
      %c6_i32 = arith.constant 6 : i32
      %118 = arith.index_cast %c6_i32 : i32 to index
      %c0_51 = arith.constant 0 : index
      %c0_52 = arith.constant 0 : index
      %119 = vector.load %arg4[%118, %c0_51, %c0_52] : memref<36x16x256xf32, #tpu.memory_space<vmem>>, vector<1x16x256xf32>
      %120 = vector.shape_cast %119 : vector<1x16x256xf32> to vector<16x256xf32>
      %121 = arith.maximumf %120, %35 : vector<16x256xf32>
      %122 = arith.addf %111, %121 : vector<16x256xf32>
      %123 = arith.maximumf %120, %39 : vector<16x256xf32>
      %124 = arith.addf %113, %123 : vector<16x256xf32>
      %125 = arith.maximumf %120, %43 : vector<16x256xf32>
      %126 = arith.addf %115, %125 : vector<16x256xf32>
      %127 = arith.maximumf %120, %47 : vector<16x256xf32>
      %128 = arith.addf %117, %127 : vector<16x256xf32>
      %c7_i32 = arith.constant 7 : i32
      %129 = arith.index_cast %c7_i32 : i32 to index
      %c0_53 = arith.constant 0 : index
      %c0_54 = arith.constant 0 : index
      %130 = vector.load %arg4[%129, %c0_53, %c0_54] : memref<36x16x256xf32, #tpu.memory_space<vmem>>, vector<1x16x256xf32>
      %131 = vector.shape_cast %130 : vector<1x16x256xf32> to vector<16x256xf32>
      %132 = arith.maximumf %131, %35 : vector<16x256xf32>
      %133 = arith.addf %122, %132 : vector<16x256xf32>
      %134 = arith.maximumf %131, %39 : vector<16x256xf32>
      %135 = arith.addf %124, %134 : vector<16x256xf32>
      %136 = arith.maximumf %131, %43 : vector<16x256xf32>
      %137 = arith.addf %126, %136 : vector<16x256xf32>
      %138 = arith.maximumf %131, %47 : vector<16x256xf32>
      %139 = arith.addf %128, %138 : vector<16x256xf32>
      %c8_i32 = arith.constant 8 : i32
      %140 = arith.index_cast %c8_i32 : i32 to index
      %c0_55 = arith.constant 0 : index
      %c0_56 = arith.constant 0 : index
      %141 = vector.load %arg4[%140, %c0_55, %c0_56] : memref<36x16x256xf32, #tpu.memory_space<vmem>>, vector<1x16x256xf32>
      %142 = vector.shape_cast %141 : vector<1x16x256xf32> to vector<16x256xf32>
      %143 = arith.maximumf %142, %35 : vector<16x256xf32>
      %144 = arith.addf %133, %143 : vector<16x256xf32>
      %145 = arith.maximumf %142, %39 : vector<16x256xf32>
      %146 = arith.addf %135, %145 : vector<16x256xf32>
      %147 = arith.maximumf %142, %43 : vector<16x256xf32>
      %148 = arith.addf %137, %147 : vector<16x256xf32>
      %149 = arith.maximumf %142, %47 : vector<16x256xf32>
      %150 = arith.addf %139, %149 : vector<16x256xf32>
      %c9_i32_57 = arith.constant 9 : i32
      %151 = arith.index_cast %c9_i32_57 : i32 to index
      %c0_58 = arith.constant 0 : index
      %c0_59 = arith.constant 0 : index
      %152 = vector.load %arg4[%151, %c0_58, %c0_59] : memref<36x16x256xf32, #tpu.memory_space<vmem>>, vector<1x16x256xf32>
      %153 = vector.shape_cast %152 : vector<1x16x256xf32> to vector<16x256xf32>
      %154 = arith.maximumf %153, %35 : vector<16x256xf32>
      %155 = arith.addf %144, %154 : vector<16x256xf32>
      %156 = arith.maximumf %153, %39 : vector<16x256xf32>
      %157 = arith.addf %146, %156 : vector<16x256xf32>
      %158 = arith.maximumf %153, %43 : vector<16x256xf32>
      %159 = arith.addf %148, %158 : vector<16x256xf32>
      %160 = arith.maximumf %153, %47 : vector<16x256xf32>
      %161 = arith.addf %150, %160 : vector<16x256xf32>
      %c10_i32 = arith.constant 10 : i32
      %162 = arith.index_cast %c10_i32 : i32 to index
      %c0_60 = arith.constant 0 : index
      %c0_61 = arith.constant 0 : index
      %163 = vector.load %arg4[%162, %c0_60, %c0_61] : memref<36x16x256xf32, #tpu.memory_space<vmem>>, vector<1x16x256xf32>
      %164 = vector.shape_cast %163 : vector<1x16x256xf32> to vector<16x256xf32>
      %165 = arith.maximumf %164, %35 : vector<16x256xf32>
      %166 = arith.addf %155, %165 : vector<16x256xf32>
      %167 = arith.maximumf %164, %39 : vector<16x256xf32>
      %168 = arith.addf %157, %167 : vector<16x256xf32>
      %169 = arith.maximumf %164, %43 : vector<16x256xf32>
      %170 = arith.addf %159, %169 : vector<16x256xf32>
      %171 = arith.maximumf %164, %47 : vector<16x256xf32>
      %172 = arith.addf %161, %171 : vector<16x256xf32>
      %c11_i32 = arith.constant 11 : i32
      %173 = arith.index_cast %c11_i32 : i32 to index
      %c0_62 = arith.constant 0 : index
      %c0_63 = arith.constant 0 : index
      %174 = vector.load %arg4[%173, %c0_62, %c0_63] : memref<36x16x256xf32, #tpu.memory_space<vmem>>, vector<1x16x256xf32>
      %175 = vector.shape_cast %174 : vector<1x16x256xf32> to vector<16x256xf32>
      %176 = arith.maximumf %175, %35 : vector<16x256xf32>
      %177 = arith.addf %166, %176 : vector<16x256xf32>
      %178 = arith.maximumf %175, %39 : vector<16x256xf32>
      %179 = arith.addf %168, %178 : vector<16x256xf32>
      %180 = arith.maximumf %175, %43 : vector<16x256xf32>
      %181 = arith.addf %170, %180 : vector<16x256xf32>
      %182 = arith.maximumf %175, %47 : vector<16x256xf32>
      %183 = arith.addf %172, %182 : vector<16x256xf32>
      %c12_i32 = arith.constant 12 : i32
      %184 = arith.index_cast %c12_i32 : i32 to index
      %c0_64 = arith.constant 0 : index
      %c0_65 = arith.constant 0 : index
      %185 = vector.load %arg4[%184, %c0_64, %c0_65] : memref<36x16x256xf32, #tpu.memory_space<vmem>>, vector<1x16x256xf32>
      %186 = vector.shape_cast %185 : vector<1x16x256xf32> to vector<16x256xf32>
      %187 = arith.maximumf %186, %35 : vector<16x256xf32>
      %188 = arith.addf %177, %187 : vector<16x256xf32>
      %189 = arith.maximumf %186, %39 : vector<16x256xf32>
      %190 = arith.addf %179, %189 : vector<16x256xf32>
      %191 = arith.maximumf %186, %43 : vector<16x256xf32>
      %192 = arith.addf %181, %191 : vector<16x256xf32>
      %193 = arith.maximumf %186, %47 : vector<16x256xf32>
      %194 = arith.addf %183, %193 : vector<16x256xf32>
      %c13_i32 = arith.constant 13 : i32
      %195 = arith.index_cast %c13_i32 : i32 to index
      %c0_66 = arith.constant 0 : index
      %c0_67 = arith.constant 0 : index
      %196 = vector.load %arg4[%195, %c0_66, %c0_67] : memref<36x16x256xf32, #tpu.memory_space<vmem>>, vector<1x16x256xf32>
      %197 = vector.shape_cast %196 : vector<1x16x256xf32> to vector<16x256xf32>
      %198 = arith.maximumf %197, %35 : vector<16x256xf32>
      %199 = arith.addf %188, %198 : vector<16x256xf32>
      %200 = arith.maximumf %197, %39 : vector<16x256xf32>
      %201 = arith.addf %190, %200 : vector<16x256xf32>
      %202 = arith.maximumf %197, %43 : vector<16x256xf32>
      %203 = arith.addf %192, %202 : vector<16x256xf32>
      %204 = arith.maximumf %197, %47 : vector<16x256xf32>
      %205 = arith.addf %194, %204 : vector<16x256xf32>
      %c14_i32 = arith.constant 14 : i32
      %206 = arith.index_cast %c14_i32 : i32 to index
      %c0_68 = arith.constant 0 : index
      %c0_69 = arith.constant 0 : index
      %207 = vector.load %arg4[%206, %c0_68, %c0_69] : memref<36x16x256xf32, #tpu.memory_space<vmem>>, vector<1x16x256xf32>
      %208 = vector.shape_cast %207 : vector<1x16x256xf32> to vector<16x256xf32>
      %209 = arith.maximumf %208, %35 : vector<16x256xf32>
      %210 = arith.addf %199, %209 : vector<16x256xf32>
      %211 = arith.maximumf %208, %39 : vector<16x256xf32>
      %212 = arith.addf %201, %211 : vector<16x256xf32>
      %213 = arith.maximumf %208, %43 : vector<16x256xf32>
      %214 = arith.addf %203, %213 : vector<16x256xf32>
      %215 = arith.maximumf %208, %47 : vector<16x256xf32>
      %216 = arith.addf %205, %215 : vector<16x256xf32>
      %c15_i32 = arith.constant 15 : i32
      %217 = arith.index_cast %c15_i32 : i32 to index
      %c0_70 = arith.constant 0 : index
      %c0_71 = arith.constant 0 : index
      %218 = vector.load %arg4[%217, %c0_70, %c0_71] : memref<36x16x256xf32, #tpu.memory_space<vmem>>, vector<1x16x256xf32>
      %219 = vector.shape_cast %218 : vector<1x16x256xf32> to vector<16x256xf32>
      %220 = arith.maximumf %219, %35 : vector<16x256xf32>
      %221 = arith.addf %210, %220 : vector<16x256xf32>
      %222 = arith.maximumf %219, %39 : vector<16x256xf32>
      %223 = arith.addf %212, %222 : vector<16x256xf32>
      %224 = arith.maximumf %219, %43 : vector<16x256xf32>
      %225 = arith.addf %214, %224 : vector<16x256xf32>
      %226 = arith.maximumf %219, %47 : vector<16x256xf32>
      %227 = arith.addf %216, %226 : vector<16x256xf32>
      %c16_i32 = arith.constant 16 : i32
      %228 = arith.index_cast %c16_i32 : i32 to index
      %c0_72 = arith.constant 0 : index
      %c0_73 = arith.constant 0 : index
      %229 = vector.load %arg4[%228, %c0_72, %c0_73] : memref<36x16x256xf32, #tpu.memory_space<vmem>>, vector<1x16x256xf32>
      %230 = vector.shape_cast %229 : vector<1x16x256xf32> to vector<16x256xf32>
      %231 = arith.maximumf %230, %35 : vector<16x256xf32>
      %232 = arith.addf %221, %231 : vector<16x256xf32>
      %233 = arith.maximumf %230, %39 : vector<16x256xf32>
      %234 = arith.addf %223, %233 : vector<16x256xf32>
      %235 = arith.maximumf %230, %43 : vector<16x256xf32>
      %236 = arith.addf %225, %235 : vector<16x256xf32>
      %237 = arith.maximumf %230, %47 : vector<16x256xf32>
      %238 = arith.addf %227, %237 : vector<16x256xf32>
      %c17_i32 = arith.constant 17 : i32
      %239 = arith.index_cast %c17_i32 : i32 to index
      %c0_74 = arith.constant 0 : index
      %c0_75 = arith.constant 0 : index
      %240 = vector.load %arg4[%239, %c0_74, %c0_75] : memref<36x16x256xf32, #tpu.memory_space<vmem>>, vector<1x16x256xf32>
      %241 = vector.shape_cast %240 : vector<1x16x256xf32> to vector<16x256xf32>
      %242 = arith.maximumf %241, %35 : vector<16x256xf32>
      %243 = arith.addf %232, %242 : vector<16x256xf32>
      %244 = arith.maximumf %241, %39 : vector<16x256xf32>
      %245 = arith.addf %234, %244 : vector<16x256xf32>
      %246 = arith.maximumf %241, %43 : vector<16x256xf32>
      %247 = arith.addf %236, %246 : vector<16x256xf32>
      %248 = arith.maximumf %241, %47 : vector<16x256xf32>
      %249 = arith.addf %238, %248 : vector<16x256xf32>
      %c18_i32 = arith.constant 18 : i32
      %250 = arith.index_cast %c18_i32 : i32 to index
      %c0_76 = arith.constant 0 : index
      %c0_77 = arith.constant 0 : index
      %251 = vector.load %arg4[%250, %c0_76, %c0_77] : memref<36x16x256xf32, #tpu.memory_space<vmem>>, vector<1x16x256xf32>
      %252 = vector.shape_cast %251 : vector<1x16x256xf32> to vector<16x256xf32>
      %253 = arith.maximumf %252, %35 : vector<16x256xf32>
      %254 = arith.addf %243, %253 : vector<16x256xf32>
      %255 = arith.maximumf %252, %39 : vector<16x256xf32>
      %256 = arith.addf %245, %255 : vector<16x256xf32>
      %257 = arith.maximumf %252, %43 : vector<16x256xf32>
      %258 = arith.addf %247, %257 : vector<16x256xf32>
      %259 = arith.maximumf %252, %47 : vector<16x256xf32>
      %260 = arith.addf %249, %259 : vector<16x256xf32>
      %c19_i32 = arith.constant 19 : i32
      %261 = arith.index_cast %c19_i32 : i32 to index
      %c0_78 = arith.constant 0 : index
      %c0_79 = arith.constant 0 : index
      %262 = vector.load %arg4[%261, %c0_78, %c0_79] : memref<36x16x256xf32, #tpu.memory_space<vmem>>, vector<1x16x256xf32>
      %263 = vector.shape_cast %262 : vector<1x16x256xf32> to vector<16x256xf32>
      %264 = arith.maximumf %263, %35 : vector<16x256xf32>
      %265 = arith.addf %254, %264 : vector<16x256xf32>
      %266 = arith.maximumf %263, %39 : vector<16x256xf32>
      %267 = arith.addf %256, %266 : vector<16x256xf32>
      %268 = arith.maximumf %263, %43 : vector<16x256xf32>
      %269 = arith.addf %258, %268 : vector<16x256xf32>
      %270 = arith.maximumf %263, %47 : vector<16x256xf32>
      %271 = arith.addf %260, %270 : vector<16x256xf32>
      %c20_i32 = arith.constant 20 : i32
      %272 = arith.index_cast %c20_i32 : i32 to index
      %c0_80 = arith.constant 0 : index
      %c0_81 = arith.constant 0 : index
      %273 = vector.load %arg4[%272, %c0_80, %c0_81] : memref<36x16x256xf32, #tpu.memory_space<vmem>>, vector<1x16x256xf32>
      %274 = vector.shape_cast %273 : vector<1x16x256xf32> to vector<16x256xf32>
      %275 = arith.maximumf %274, %35 : vector<16x256xf32>
      %276 = arith.addf %265, %275 : vector<16x256xf32>
      %277 = arith.maximumf %274, %39 : vector<16x256xf32>
      %278 = arith.addf %267, %277 : vector<16x256xf32>
      %279 = arith.maximumf %274, %43 : vector<16x256xf32>
      %280 = arith.addf %269, %279 : vector<16x256xf32>
      %281 = arith.maximumf %274, %47 : vector<16x256xf32>
      %282 = arith.addf %271, %281 : vector<16x256xf32>
      %c21_i32 = arith.constant 21 : i32
      %283 = arith.index_cast %c21_i32 : i32 to index
      %c0_82 = arith.constant 0 : index
      %c0_83 = arith.constant 0 : index
      %284 = vector.load %arg4[%283, %c0_82, %c0_83] : memref<36x16x256xf32, #tpu.memory_space<vmem>>, vector<1x16x256xf32>
      %285 = vector.shape_cast %284 : vector<1x16x256xf32> to vector<16x256xf32>
      %286 = arith.maximumf %285, %35 : vector<16x256xf32>
      %287 = arith.addf %276, %286 : vector<16x256xf32>
      %288 = arith.maximumf %285, %39 : vector<16x256xf32>
      %289 = arith.addf %278, %288 : vector<16x256xf32>
      %290 = arith.maximumf %285, %43 : vector<16x256xf32>
      %291 = arith.addf %280, %290 : vector<16x256xf32>
      %292 = arith.maximumf %285, %47 : vector<16x256xf32>
      %293 = arith.addf %282, %292 : vector<16x256xf32>
      %c22_i32 = arith.constant 22 : i32
      %294 = arith.index_cast %c22_i32 : i32 to index
      %c0_84 = arith.constant 0 : index
      %c0_85 = arith.constant 0 : index
      %295 = vector.load %arg4[%294, %c0_84, %c0_85] : memref<36x16x256xf32, #tpu.memory_space<vmem>>, vector<1x16x256xf32>
      %296 = vector.shape_cast %295 : vector<1x16x256xf32> to vector<16x256xf32>
      %297 = arith.maximumf %296, %35 : vector<16x256xf32>
      %298 = arith.addf %287, %297 : vector<16x256xf32>
      %299 = arith.maximumf %296, %39 : vector<16x256xf32>
      %300 = arith.addf %289, %299 : vector<16x256xf32>
      %301 = arith.maximumf %296, %43 : vector<16x256xf32>
      %302 = arith.addf %291, %301 : vector<16x256xf32>
      %303 = arith.maximumf %296, %47 : vector<16x256xf32>
      %304 = arith.addf %293, %303 : vector<16x256xf32>
      %c23_i32 = arith.constant 23 : i32
      %305 = arith.index_cast %c23_i32 : i32 to index
      %c0_86 = arith.constant 0 : index
      %c0_87 = arith.constant 0 : index
      %306 = vector.load %arg4[%305, %c0_86, %c0_87] : memref<36x16x256xf32, #tpu.memory_space<vmem>>, vector<1x16x256xf32>
      %307 = vector.shape_cast %306 : vector<1x16x256xf32> to vector<16x256xf32>
      %308 = arith.maximumf %307, %35 : vector<16x256xf32>
      %309 = arith.addf %298, %308 : vector<16x256xf32>
      %310 = arith.maximumf %307, %39 : vector<16x256xf32>
      %311 = arith.addf %300, %310 : vector<16x256xf32>
      %312 = arith.maximumf %307, %43 : vector<16x256xf32>
      %313 = arith.addf %302, %312 : vector<16x256xf32>
      %314 = arith.maximumf %307, %47 : vector<16x256xf32>
      %315 = arith.addf %304, %314 : vector<16x256xf32>
      %c24_i32 = arith.constant 24 : i32
      %316 = arith.index_cast %c24_i32 : i32 to index
      %c0_88 = arith.constant 0 : index
      %c0_89 = arith.constant 0 : index
      %317 = vector.load %arg4[%316, %c0_88, %c0_89] : memref<36x16x256xf32, #tpu.memory_space<vmem>>, vector<1x16x256xf32>
      %318 = vector.shape_cast %317 : vector<1x16x256xf32> to vector<16x256xf32>
      %319 = arith.maximumf %318, %35 : vector<16x256xf32>
      %320 = arith.addf %309, %319 : vector<16x256xf32>
      %321 = arith.maximumf %318, %39 : vector<16x256xf32>
      %322 = arith.addf %311, %321 : vector<16x256xf32>
      %323 = arith.maximumf %318, %43 : vector<16x256xf32>
      %324 = arith.addf %313, %323 : vector<16x256xf32>
      %325 = arith.maximumf %318, %47 : vector<16x256xf32>
      %326 = arith.addf %315, %325 : vector<16x256xf32>
      %c25_i32 = arith.constant 25 : i32
      %327 = arith.index_cast %c25_i32 : i32 to index
      %c0_90 = arith.constant 0 : index
      %c0_91 = arith.constant 0 : index
      %328 = vector.load %arg4[%327, %c0_90, %c0_91] : memref<36x16x256xf32, #tpu.memory_space<vmem>>, vector<1x16x256xf32>
      %329 = vector.shape_cast %328 : vector<1x16x256xf32> to vector<16x256xf32>
      %330 = arith.maximumf %329, %35 : vector<16x256xf32>
      %331 = arith.addf %320, %330 : vector<16x256xf32>
      %332 = arith.maximumf %329, %39 : vector<16x256xf32>
      %333 = arith.addf %322, %332 : vector<16x256xf32>
      %334 = arith.maximumf %329, %43 : vector<16x256xf32>
      %335 = arith.addf %324, %334 : vector<16x256xf32>
      %336 = arith.maximumf %329, %47 : vector<16x256xf32>
      %337 = arith.addf %326, %336 : vector<16x256xf32>
      %c26_i32 = arith.constant 26 : i32
      %338 = arith.index_cast %c26_i32 : i32 to index
      %c0_92 = arith.constant 0 : index
      %c0_93 = arith.constant 0 : index
      %339 = vector.load %arg4[%338, %c0_92, %c0_93] : memref<36x16x256xf32, #tpu.memory_space<vmem>>, vector<1x16x256xf32>
      %340 = vector.shape_cast %339 : vector<1x16x256xf32> to vector<16x256xf32>
      %341 = arith.maximumf %340, %35 : vector<16x256xf32>
      %342 = arith.addf %331, %341 : vector<16x256xf32>
      %343 = arith.maximumf %340, %39 : vector<16x256xf32>
      %344 = arith.addf %333, %343 : vector<16x256xf32>
      %345 = arith.maximumf %340, %43 : vector<16x256xf32>
      %346 = arith.addf %335, %345 : vector<16x256xf32>
      %347 = arith.maximumf %340, %47 : vector<16x256xf32>
      %348 = arith.addf %337, %347 : vector<16x256xf32>
      %c27_i32 = arith.constant 27 : i32
      %349 = arith.index_cast %c27_i32 : i32 to index
      %c0_94 = arith.constant 0 : index
      %c0_95 = arith.constant 0 : index
      %350 = vector.load %arg4[%349, %c0_94, %c0_95] : memref<36x16x256xf32, #tpu.memory_space<vmem>>, vector<1x16x256xf32>
      %351 = vector.shape_cast %350 : vector<1x16x256xf32> to vector<16x256xf32>
      %352 = arith.maximumf %351, %35 : vector<16x256xf32>
      %353 = arith.addf %342, %352 : vector<16x256xf32>
      %354 = arith.maximumf %351, %39 : vector<16x256xf32>
      %355 = arith.addf %344, %354 : vector<16x256xf32>
      %356 = arith.maximumf %351, %43 : vector<16x256xf32>
      %357 = arith.addf %346, %356 : vector<16x256xf32>
      %358 = arith.maximumf %351, %47 : vector<16x256xf32>
      %359 = arith.addf %348, %358 : vector<16x256xf32>
      %c28_i32 = arith.constant 28 : i32
      %360 = arith.index_cast %c28_i32 : i32 to index
      %c0_96 = arith.constant 0 : index
      %c0_97 = arith.constant 0 : index
      %361 = vector.load %arg4[%360, %c0_96, %c0_97] : memref<36x16x256xf32, #tpu.memory_space<vmem>>, vector<1x16x256xf32>
      %362 = vector.shape_cast %361 : vector<1x16x256xf32> to vector<16x256xf32>
      %363 = arith.maximumf %362, %35 : vector<16x256xf32>
      %364 = arith.addf %353, %363 : vector<16x256xf32>
      %365 = arith.maximumf %362, %39 : vector<16x256xf32>
      %366 = arith.addf %355, %365 : vector<16x256xf32>
      %367 = arith.maximumf %362, %43 : vector<16x256xf32>
      %368 = arith.addf %357, %367 : vector<16x256xf32>
      %369 = arith.maximumf %362, %47 : vector<16x256xf32>
      %370 = arith.addf %359, %369 : vector<16x256xf32>
      %c29_i32 = arith.constant 29 : i32
      %371 = arith.index_cast %c29_i32 : i32 to index
      %c0_98 = arith.constant 0 : index
      %c0_99 = arith.constant 0 : index
      %372 = vector.load %arg4[%371, %c0_98, %c0_99] : memref<36x16x256xf32, #tpu.memory_space<vmem>>, vector<1x16x256xf32>
      %373 = vector.shape_cast %372 : vector<1x16x256xf32> to vector<16x256xf32>
      %374 = arith.maximumf %373, %35 : vector<16x256xf32>
      %375 = arith.addf %364, %374 : vector<16x256xf32>
      %376 = arith.maximumf %373, %39 : vector<16x256xf32>
      %377 = arith.addf %366, %376 : vector<16x256xf32>
      %378 = arith.maximumf %373, %43 : vector<16x256xf32>
      %379 = arith.addf %368, %378 : vector<16x256xf32>
      %380 = arith.maximumf %373, %47 : vector<16x256xf32>
      %381 = arith.addf %370, %380 : vector<16x256xf32>
      %c30_i32 = arith.constant 30 : i32
      %382 = arith.index_cast %c30_i32 : i32 to index
      %c0_100 = arith.constant 0 : index
      %c0_101 = arith.constant 0 : index
      %383 = vector.load %arg4[%382, %c0_100, %c0_101] : memref<36x16x256xf32, #tpu.memory_space<vmem>>, vector<1x16x256xf32>
      %384 = vector.shape_cast %383 : vector<1x16x256xf32> to vector<16x256xf32>
      %385 = arith.maximumf %384, %35 : vector<16x256xf32>
      %386 = arith.addf %375, %385 : vector<16x256xf32>
      %387 = arith.maximumf %384, %39 : vector<16x256xf32>
      %388 = arith.addf %377, %387 : vector<16x256xf32>
      %389 = arith.maximumf %384, %43 : vector<16x256xf32>
      %390 = arith.addf %379, %389 : vector<16x256xf32>
      %391 = arith.maximumf %384, %47 : vector<16x256xf32>
      %392 = arith.addf %381, %391 : vector<16x256xf32>
      %c31_i32 = arith.constant 31 : i32
      %393 = arith.index_cast %c31_i32 : i32 to index
      %c0_102 = arith.constant 0 : index
      %c0_103 = arith.constant 0 : index
      %394 = vector.load %arg4[%393, %c0_102, %c0_103] : memref<36x16x256xf32, #tpu.memory_space<vmem>>, vector<1x16x256xf32>
      %395 = vector.shape_cast %394 : vector<1x16x256xf32> to vector<16x256xf32>
      %396 = arith.maximumf %395, %35 : vector<16x256xf32>
      %397 = arith.addf %386, %396 : vector<16x256xf32>
      %398 = arith.maximumf %395, %39 : vector<16x256xf32>
      %399 = arith.addf %388, %398 : vector<16x256xf32>
      %400 = arith.maximumf %395, %43 : vector<16x256xf32>
      %401 = arith.addf %390, %400 : vector<16x256xf32>
      %402 = arith.maximumf %395, %47 : vector<16x256xf32>
      %403 = arith.addf %392, %402 : vector<16x256xf32>
      %c32_i32 = arith.constant 32 : i32
      %404 = arith.index_cast %c32_i32 : i32 to index
      %c0_104 = arith.constant 0 : index
      %c0_105 = arith.constant 0 : index
      %405 = vector.load %arg4[%404, %c0_104, %c0_105] : memref<36x16x256xf32, #tpu.memory_space<vmem>>, vector<1x16x256xf32>
      %406 = vector.shape_cast %405 : vector<1x16x256xf32> to vector<16x256xf32>
      %407 = arith.maximumf %406, %35 : vector<16x256xf32>
      %408 = arith.addf %397, %407 : vector<16x256xf32>
      %409 = arith.maximumf %406, %39 : vector<16x256xf32>
      %410 = arith.addf %399, %409 : vector<16x256xf32>
      %411 = arith.maximumf %406, %43 : vector<16x256xf32>
      %412 = arith.addf %401, %411 : vector<16x256xf32>
      %413 = arith.maximumf %406, %47 : vector<16x256xf32>
      %414 = arith.addf %403, %413 : vector<16x256xf32>
      %c33_i32 = arith.constant 33 : i32
      %415 = arith.index_cast %c33_i32 : i32 to index
      %c0_106 = arith.constant 0 : index
      %c0_107 = arith.constant 0 : index
      %416 = vector.load %arg4[%415, %c0_106, %c0_107] : memref<36x16x256xf32, #tpu.memory_space<vmem>>, vector<1x16x256xf32>
      %417 = vector.shape_cast %416 : vector<1x16x256xf32> to vector<16x256xf32>
      %418 = arith.maximumf %417, %35 : vector<16x256xf32>
      %419 = arith.addf %408, %418 : vector<16x256xf32>
      %420 = arith.maximumf %417, %39 : vector<16x256xf32>
      %421 = arith.addf %410, %420 : vector<16x256xf32>
      %422 = arith.maximumf %417, %43 : vector<16x256xf32>
      %423 = arith.addf %412, %422 : vector<16x256xf32>
      %424 = arith.maximumf %417, %47 : vector<16x256xf32>
      %425 = arith.addf %414, %424 : vector<16x256xf32>
      %c34_i32 = arith.constant 34 : i32
      %426 = arith.index_cast %c34_i32 : i32 to index
      %c0_108 = arith.constant 0 : index
      %c0_109 = arith.constant 0 : index
      %427 = vector.load %arg4[%426, %c0_108, %c0_109] : memref<36x16x256xf32, #tpu.memory_space<vmem>>, vector<1x16x256xf32>
      %428 = vector.shape_cast %427 : vector<1x16x256xf32> to vector<16x256xf32>
      %429 = arith.maximumf %428, %35 : vector<16x256xf32>
      %430 = arith.addf %419, %429 : vector<16x256xf32>
      %431 = arith.maximumf %428, %39 : vector<16x256xf32>
      %432 = arith.addf %421, %431 : vector<16x256xf32>
      %433 = arith.maximumf %428, %43 : vector<16x256xf32>
      %434 = arith.addf %423, %433 : vector<16x256xf32>
      %435 = arith.maximumf %428, %47 : vector<16x256xf32>
      %436 = arith.addf %425, %435 : vector<16x256xf32>
      %c35_i32 = arith.constant 35 : i32
      %437 = arith.index_cast %c35_i32 : i32 to index
      %c0_110 = arith.constant 0 : index
      %c0_111 = arith.constant 0 : index
      %438 = vector.load %arg4[%437, %c0_110, %c0_111] : memref<36x16x256xf32, #tpu.memory_space<vmem>>, vector<1x16x256xf32>
      %439 = vector.shape_cast %438 : vector<1x16x256xf32> to vector<16x256xf32>
      %440 = arith.maximumf %439, %35 : vector<16x256xf32>
      %441 = arith.addf %430, %440 : vector<16x256xf32>
      %442 = arith.maximumf %439, %39 : vector<16x256xf32>
      %443 = arith.addf %432, %442 : vector<16x256xf32>
      %444 = arith.maximumf %439, %43 : vector<16x256xf32>
      %445 = arith.addf %434, %444 : vector<16x256xf32>
      %446 = arith.maximumf %439, %47 : vector<16x256xf32>
      %447 = arith.addf %436, %446 : vector<16x256xf32>
      %c36_i32 = arith.constant 36 : i32
      %c0_i32_112 = arith.constant 0 : i32
      %448 = arith.addi %31, %c0_i32_112 : i32
      %449 = arith.index_cast %448 : i32 to index
      %c0_113 = arith.constant 0 : index
      %450 = vector.load %arg1[%449, %c0_113] : memref<36x256xf32, #tpu.memory_space<vmem>>, vector<1x256xf32>
      %c0_i32_114 = arith.constant 0 : i32
      %451 = arith.addi %31, %c0_i32_114 : i32
      %452 = arith.index_cast %451 : i32 to index
      %c0_115 = arith.constant 0 : index
      %c0_116 = arith.constant 0 : index
      %453 = vector.load %arg2[%452, %c0_115, %c0_116] : memref<36x16x1xf32, #tpu.memory_space<vmem>>, vector<1x16x1xf32>
      %454 = vector.shape_cast %453 : vector<1x16x1xf32> to vector<16x1xf32>
      %455 = vector.broadcast %450 : vector<1x256xf32> to vector<16x256xf32>
      %456 = vector.broadcast %454 : vector<16x1xf32> to vector<16x256xf32>
      %457 = arith.addf %455, %456 : vector<16x256xf32>
      %458 = vector.broadcast %cst_8 : f32 to vector<16x256xf32>
      %459 = arith.mulf %458, %457 : vector<16x256xf32>
      %460 = arith.subf %441, %459 : vector<16x256xf32>
      %461 = vector.broadcast %cst_8 : f32 to vector<16x256xf32>
      %462 = arith.mulf %461, %457 : vector<16x256xf32>
      %463 = arith.addf %441, %462 : vector<16x256xf32>
      %464 = vector.broadcast %cst_9 : f32 to vector<16x256xf32>
      %465 = arith.cmpf ole, %460, %464 : vector<16x256xf32>
      %466 = arith.extui %465 : vector<16x256xi1> to vector<16x256xi32>
      %467 = arith.sitofp %466 : vector<16x256xi32> to vector<16x256xf32>
      %468 = vector.broadcast %cst_9 : f32 to vector<16x256xf32>
      %469 = arith.cmpf ole, %463, %468 : vector<16x256xf32>
      %470 = arith.extui %469 : vector<16x256xi1> to vector<16x256xi32>
      %471 = arith.sitofp %470 : vector<16x256xi32> to vector<16x256xf32>
      %472 = arith.addf %467, %471 : vector<16x256xf32>
      %473 = arith.addf %arg6, %472 : vector<16x256xf32>
      %474 = arith.subf %467, %471 : vector<16x256xf32>
      %475 = arith.mulf %457, %474 : vector<16x256xf32>
      %476 = arith.addf %arg7, %475 : vector<16x256xf32>
      %c1_i32_117 = arith.constant 1 : i32
      %477 = arith.addi %31, %c1_i32_117 : i32
      %478 = arith.index_cast %477 : i32 to index
      %c0_118 = arith.constant 0 : index
      %479 = vector.load %arg1[%478, %c0_118] : memref<36x256xf32, #tpu.memory_space<vmem>>, vector<1x256xf32>
      %c1_i32_119 = arith.constant 1 : i32
      %480 = arith.addi %31, %c1_i32_119 : i32
      %481 = arith.index_cast %480 : i32 to index
      %c0_120 = arith.constant 0 : index
      %c0_121 = arith.constant 0 : index
      %482 = vector.load %arg2[%481, %c0_120, %c0_121] : memref<36x16x1xf32, #tpu.memory_space<vmem>>, vector<1x16x1xf32>
      %483 = vector.shape_cast %482 : vector<1x16x1xf32> to vector<16x1xf32>
      %484 = vector.broadcast %479 : vector<1x256xf32> to vector<16x256xf32>
      %485 = vector.broadcast %483 : vector<16x1xf32> to vector<16x256xf32>
      %486 = arith.addf %484, %485 : vector<16x256xf32>
      %487 = vector.broadcast %cst_8 : f32 to vector<16x256xf32>
      %488 = arith.mulf %487, %486 : vector<16x256xf32>
      %489 = arith.subf %443, %488 : vector<16x256xf32>
      %490 = vector.broadcast %cst_8 : f32 to vector<16x256xf32>
      %491 = arith.mulf %490, %486 : vector<16x256xf32>
      %492 = arith.addf %443, %491 : vector<16x256xf32>
      %493 = vector.broadcast %cst_9 : f32 to vector<16x256xf32>
      %494 = arith.cmpf ole, %489, %493 : vector<16x256xf32>
      %495 = arith.extui %494 : vector<16x256xi1> to vector<16x256xi32>
      %496 = arith.sitofp %495 : vector<16x256xi32> to vector<16x256xf32>
      %497 = vector.broadcast %cst_9 : f32 to vector<16x256xf32>
      %498 = arith.cmpf ole, %492, %497 : vector<16x256xf32>
      %499 = arith.extui %498 : vector<16x256xi1> to vector<16x256xi32>
      %500 = arith.sitofp %499 : vector<16x256xi32> to vector<16x256xf32>
      %501 = arith.addf %496, %500 : vector<16x256xf32>
      %502 = arith.addf %473, %501 : vector<16x256xf32>
      %503 = arith.subf %496, %500 : vector<16x256xf32>
      %504 = arith.mulf %486, %503 : vector<16x256xf32>
      %505 = arith.addf %476, %504 : vector<16x256xf32>
      %c2_i32_122 = arith.constant 2 : i32
      %506 = arith.addi %31, %c2_i32_122 : i32
      %507 = arith.index_cast %506 : i32 to index
      %c0_123 = arith.constant 0 : index
      %508 = vector.load %arg1[%507, %c0_123] : memref<36x256xf32, #tpu.memory_space<vmem>>, vector<1x256xf32>
      %c2_i32_124 = arith.constant 2 : i32
      %509 = arith.addi %31, %c2_i32_124 : i32
      %510 = arith.index_cast %509 : i32 to index
      %c0_125 = arith.constant 0 : index
      %c0_126 = arith.constant 0 : index
      %511 = vector.load %arg2[%510, %c0_125, %c0_126] : memref<36x16x1xf32, #tpu.memory_space<vmem>>, vector<1x16x1xf32>
      %512 = vector.shape_cast %511 : vector<1x16x1xf32> to vector<16x1xf32>
      %513 = vector.broadcast %508 : vector<1x256xf32> to vector<16x256xf32>
      %514 = vector.broadcast %512 : vector<16x1xf32> to vector<16x256xf32>
      %515 = arith.addf %513, %514 : vector<16x256xf32>
      %516 = vector.broadcast %cst_8 : f32 to vector<16x256xf32>
      %517 = arith.mulf %516, %515 : vector<16x256xf32>
      %518 = arith.subf %445, %517 : vector<16x256xf32>
      %519 = vector.broadcast %cst_8 : f32 to vector<16x256xf32>
      %520 = arith.mulf %519, %515 : vector<16x256xf32>
      %521 = arith.addf %445, %520 : vector<16x256xf32>
      %522 = vector.broadcast %cst_9 : f32 to vector<16x256xf32>
      %523 = arith.cmpf ole, %518, %522 : vector<16x256xf32>
      %524 = arith.extui %523 : vector<16x256xi1> to vector<16x256xi32>
      %525 = arith.sitofp %524 : vector<16x256xi32> to vector<16x256xf32>
      %526 = vector.broadcast %cst_9 : f32 to vector<16x256xf32>
      %527 = arith.cmpf ole, %521, %526 : vector<16x256xf32>
      %528 = arith.extui %527 : vector<16x256xi1> to vector<16x256xi32>
      %529 = arith.sitofp %528 : vector<16x256xi32> to vector<16x256xf32>
      %530 = arith.addf %525, %529 : vector<16x256xf32>
      %531 = arith.addf %502, %530 : vector<16x256xf32>
      %532 = arith.subf %525, %529 : vector<16x256xf32>
      %533 = arith.mulf %515, %532 : vector<16x256xf32>
      %534 = arith.addf %505, %533 : vector<16x256xf32>
      %c3_i32_127 = arith.constant 3 : i32
      %535 = arith.addi %31, %c3_i32_127 : i32
      %536 = arith.index_cast %535 : i32 to index
      %c0_128 = arith.constant 0 : index
      %537 = vector.load %arg1[%536, %c0_128] : memref<36x256xf32, #tpu.memory_space<vmem>>, vector<1x256xf32>
      %c3_i32_129 = arith.constant 3 : i32
      %538 = arith.addi %31, %c3_i32_129 : i32
      %539 = arith.index_cast %538 : i32 to index
      %c0_130 = arith.constant 0 : index
      %c0_131 = arith.constant 0 : index
      %540 = vector.load %arg2[%539, %c0_130, %c0_131] : memref<36x16x1xf32, #tpu.memory_space<vmem>>, vector<1x16x1xf32>
      %541 = vector.shape_cast %540 : vector<1x16x1xf32> to vector<16x1xf32>
      %542 = vector.broadcast %537 : vector<1x256xf32> to vector<16x256xf32>
      %543 = vector.broadcast %541 : vector<16x1xf32> to vector<16x256xf32>
      %544 = arith.addf %542, %543 : vector<16x256xf32>
      %545 = vector.broadcast %cst_8 : f32 to vector<16x256xf32>
      %546 = arith.mulf %545, %544 : vector<16x256xf32>
      %547 = arith.subf %447, %546 : vector<16x256xf32>
      %548 = vector.broadcast %cst_8 : f32 to vector<16x256xf32>
      %549 = arith.mulf %548, %544 : vector<16x256xf32>
      %550 = arith.addf %447, %549 : vector<16x256xf32>
      %551 = vector.broadcast %cst_9 : f32 to vector<16x256xf32>
      %552 = arith.cmpf ole, %547, %551 : vector<16x256xf32>
      %553 = arith.extui %552 : vector<16x256xi1> to vector<16x256xi32>
      %554 = arith.sitofp %553 : vector<16x256xi32> to vector<16x256xf32>
      %555 = vector.broadcast %cst_9 : f32 to vector<16x256xf32>
      %556 = arith.cmpf ole, %550, %555 : vector<16x256xf32>
      %557 = arith.extui %556 : vector<16x256xi1> to vector<16x256xi32>
      %558 = arith.sitofp %557 : vector<16x256xi32> to vector<16x256xf32>
      %559 = arith.addf %554, %558 : vector<16x256xf32>
      %560 = arith.addf %531, %559 : vector<16x256xf32>
      %561 = arith.subf %554, %558 : vector<16x256xf32>
      %562 = arith.mulf %544, %561 : vector<16x256xf32>
      %563 = arith.addf %534, %562 : vector<16x256xf32>
      scf.yield %560, %563 : vector<16x256xf32>, vector<16x256xf32>
    }
    %c9_i32_10 = arith.constant 9 : i32
    %cst_11 = arith.constant 1.000000e+00 : f32
    %12 = vector.broadcast %cst_11 : f32 to vector<16x256xf32>
    %13 = arith.maximumf %11#0, %12 : vector<16x256xf32>
    %14 = tpu.reciprocal %13 : vector<16x256xf32> -> vector<16x256xf32>
    %cst_12 = arith.constant 1.000000e+00 : f32
    %15 = vector.broadcast %cst_12 : f32 to vector<16x256xf32>
    %16 = arith.subf %11#1, %15 : vector<16x256xf32>
    %17 = arith.mulf %16, %14 : vector<16x256xf32>
    %cst_13 = arith.constant 0.000000e+00 : f32
    %18 = vector.broadcast %cst_13 : f32 to vector<16x256xf32>
    %19 = arith.cmpf ogt, %11#0, %18 : vector<16x256xf32>
    %cst_14 = arith.constant 1.000000e+00 : f32
    %cst_15 = arith.constant 7.200000e+01 : f32
    %20 = arith.mulf %cst_14, %cst_15 : f32
    %21 = vector.broadcast %20 : f32 to vector<16x256xf32>
    %22 = arith.mulf %21, %17 : vector<16x256xf32>
    %cst_16 = arith.constant 0.000000e+00 : f32
    %23 = vector.broadcast %cst_16 : f32 to vector<16x256xf32>
    %24 = arith.select %19, %22, %23 : vector<16x256xi1>, vector<16x256xf32>
    %25 = vector.extract_strided_slice %24 {offsets = [0, 0], sizes = [8, 256], strides = [1, 1]} : vector<16x256xf32> to vector<8x256xf32>
    %26 = vector.extract_strided_slice %24 {offsets = [8, 0], sizes = [8, 256], strides = [1, 1]} : vector<16x256xf32> to vector<8x256xf32>
    %27 = arith.subf %25, %26 : vector<8x256xf32>
    %cst_17 = arith.constant 5.000000e-01 : f32
    %28 = vector.broadcast %cst_17 : f32 to vector<8x256xf32>
    %29 = arith.mulf %28, %27 : vector<8x256xf32>
    %c0_18 = arith.constant 0 : index
    %c0_19 = arith.constant 0 : index
    %30 = vector.load %arg3[%c0_18, %c0_19] : memref<8x256xf32, #tpu.memory_space<vmem>>, vector<8x256xf32>
    tpu.vector_store %arg3[%c0_18, %c0_19], %29 {strides = array<i32>} : memref<8x256xf32, #tpu.memory_space<vmem>>, vector<8x256xf32>,
    return
  }
  func.func @transform_0(%arg0: i32) -> (i32, i32) {
    %c0_i32 = arith.constant 0 : i32
    %c0_i32_0 = arith.constant 0 : i32
    return %c0_i32, %arg0 : i32, i32
  }
  func.func @transform_1(%arg0: i32) -> (i32, i32, i32) {
    %c0_i32 = arith.constant 0 : i32
    %c0_i32_0 = arith.constant 0 : i32
    %c0_i32_1 = arith.constant 0 : i32
    %c0_i32_2 = arith.constant 0 : i32
    return %c0_i32, %c0_i32_0, %c0_i32_1 : i32, i32, i32
  }
  func.func @transform_2(%arg0: i32) -> (i32, i32) {
    %c0_i32 = arith.constant 0 : i32
    %c0_i32_0 = arith.constant 0 : i32
    return %c0_i32, %arg0 : i32, i32
  }
}

</mosaic_0001>

<llo_original>
// kernel: tpu_custom_call.1
$region0: #{tpu_custom_call.1}
  #allocation0 [shape = 'u32[]', space=smem, size = 0x4, offset = 0x4, fixed_abs, tag = 'smem constant byte address 0x4 - core index']
  #allocation1 [shape = 'u32[72,128]{1,0:T(1,128)}', space=vmem, size = 0x9000, scoped, tag = 'internal scratch']
  #allocation2 [shape = 'f32[36,16,256]{2,1,0:T(8,128)}', space=vmem, size = 0x90000, scoped, tag = 'scratch operand']
  %s0 = inlined_call_operand.vmem [shape: f32[36,512], index: 0, kind: input, shape index: {}]
  %s1 = inlined_call_operand.vmem [shape: f32[36,16,1], index: 1, kind: input, shape index: {}]
  %s2 = inlined_call_operand.hbm [shape: f32[8,512], index: 2, kind: output, shape index: {}]
  %s3 = sld [smem:[#allocation0]]
  $region71: #{tpu_custom_call.1} parent=0
    _
  %s5 = ssub.s32 1, %s3
  %s6 = scalar_select 0, %s5, %s3
  $region1: #{tpu_custom_call.1} parent=0
    #allocation3 [shape = 'u8[81920]{0}', space=vmem, size = 0x14000, scoped, tag = 'input window, operand 0']
    #allocation4 [shape = 'u8[16384]{0}', space=vmem, size = 0x4000, scoped, tag = 'output window, operand 0']
    #allocation5 [shape = 's32[2]{0}', space=sflag, size = 0x8, scoped, tag = 'scoped memory for tpu_custom_call.1']
    %7 = vsyncpa [#allocation5], 0
    %s8 = scalar_lea.sflag [#allocation5], 1
    %9 = vsyncpa %s8, 0
    loop: start=0, step=1, limit=4
    $region2: #{tpu_custom_call.1} parent=1 // loop_pre_header
      _
    $region3: #{tpu_custom_call.1} parent=1 // loop_header
      %s11 = sphi 0, %s15
      %p12 = scmp.ge.s32.totalorder %s11, 4
      %s21 = sphi 0, %s23
      %s24 = sphi 0, %s21
      %s25 = sphi 0, %s24
      %s41 = sphi 0, %s25
      %s45 = sphi 0, %s45
      %s47 = sphi 0, %s45
      %s48 = sphi 0, %s47
      %s62 = sphi 0, %s48
      %s68 = sphi 0, %s70
      %s71 = sphi 0, %s68
      %s72 = sphi 0, %s71
      %s88 = sphi 0, %s72
    $region4: #{tpu_custom_call.1} parent=1 // loop_header_branch
      %14 = sbr.rel (%p12) target = $region8
    $region5: #{tpu_custom_call.1} parent=1 // loop_body
      %s16 = ssub.s32 %s11, 1
      %s17 = ssub.s32 %s11, 2
      %s18 = sadd.s32 %s11, 1
      %s19 = ssub.s32 %s11, %s18
      %p20 = scmp.eq.s32.totalorder %s19, 0
      %s22 = sadd.s32 %s21, 1
      %s23 = scalar_select %p20, %s21, %s22
      %p26 = pneg %p20
      %p27 = scmp.eq.s32.totalorder %s11, 1
      %p28 = por %p26, %p27
      %p29 = scmp.ne.s32.totalorder %s21, %s24
      %p30 = scmp.eq.s32.totalorder %s11, 0
      %p31 = por %p29, %p30
      %p32 = scmp.ne.s32.totalorder %s21, %s24
      %p33 = scmp.eq.s32.totalorder %s16, 1
      %p34 = por %p32, %p33
      %p35 = scmp.ne.s32.totalorder %s24, %s25
      %p36 = scmp.eq.s32.totalorder %s16, 0
      %p37 = por %p35, %p36
      %p38 = scmp.ne.s32.totalorder %s24, %s25
      %p39 = scmp.eq.s32.totalorder %s17, 1
      %p40 = por %p38, %p39
      %p42 = scmp.ne.s32.totalorder %s25, %s41
      %p43 = scmp.eq.s32.totalorder %s17, 0
      %p44 = por %p42, %p43
      %s46 = sadd.s32 %s45, 1
      %p49 = scmp.eq.s32.totalorder %s11, 1
      %p50 = scmp.ne.s32.totalorder %s45, %s47
      %p51 = scmp.eq.s32.totalorder %s11, 0
      %p52 = por %p50, %p51
      %p53 = scmp.ne.s32.totalorder %s45, %s47
      %p54 = scmp.eq.s32.totalorder %s16, 1
      %p55 = por %p53, %p54
      %p56 = scmp.ne.s32.totalorder %s47, %s48
      %p57 = scmp.eq.s32.totalorder %s16, 0
      %p58 = por %p56, %p57
      %p59 = scmp.ne.s32.totalorder %s47, %s48
      %p60 = scmp.eq.s32.totalorder %s17, 1
      %p61 = por %p59, %p60
      %p63 = scmp.ne.s32.totalorder %s48, %s62
      %p64 = scmp.eq.s32.totalorder %s17, 0
      %p65 = por %p63, %p64
      %s66 = ssub.s32 %s11, %s18
      %p67 = scmp.eq.s32.totalorder %s66, 0
      %s69 = sadd.s32 %s68, 1
      %s70 = scalar_select %p67, %s68, %s69
      %p73 = pneg %p67
      %p74 = scmp.eq.s32.totalorder %s11, 1
      %p75 = por %p73, %p74
      %p76 = scmp.ne.s32.totalorder %s68, %s71
      %p77 = scmp.eq.s32.totalorder %s11, 0
      %p78 = por %p76, %p77
      %p79 = scmp.ne.s32.totalorder %s68, %s71
      %p80 = scmp.eq.s32.totalorder %s16, 1
      %p81 = por %p79, %p80
      %p82 = scmp.ne.s32.totalorder %s71, %s72
      %p83 = scmp.eq.s32.totalorder %s16, 0
      %p84 = por %p82, %p83
      %p85 = scmp.ne.s32.totalorder %s71, %s72
      %p86 = scmp.eq.s32.totalorder %s17, 1
      %p87 = por %p85, %p86
      %p89 = scmp.ne.s32.totalorder %s72, %s88
      %p90 = scmp.eq.s32.totalorder %s17, 0
      %p91 = por %p89, %p90
      %p92 = scmp.le.s32.totalorder 1, %s11
      %p93 = scmp.lt.s32.totalorder %s11, 3
      %p94 = pnand %p92, %p93
      %p95 = pneg %p94
      // Predicated region
      $region9: #{tpu_custom_call.1} parent=5 // pred_check
        _
      $region10: #{tpu_custom_call.1} parent=5 // pred_check_branch
        %97 = sbr.rel (%p94) target = $region12
      $region11: #{tpu_custom_call.1} parent=5 // pred_region
        %s98 = ssub.s32 %s11, 1
        // Predicated region
        $region13: #{tpu_custom_call.1} parent=11 // pred_check
          %p99 = pneg %p58
        $region14: #{tpu_custom_call.1} parent=11 // pred_check_branch
          %101 = sbr.rel (%p99) target = $region16
        $region15: #{tpu_custom_call.1} parent=11 // pred_region
          _
        $region16: #{tpu_custom_call.1} parent=11 // pred_fallthru
          _
      $region12: #{tpu_custom_call.1} parent=5 // pred_fallthru
        _
      %p102 = scmp.lt.s32.totalorder %s11, 2
      // Predicated region
      $region17: #{tpu_custom_call.1} parent=5 // pred_check
        %p103 = pneg %p102
      $region18: #{tpu_custom_call.1} parent=5 // pred_check_branch
        %105 = sbr.rel (%p103) target = $region20
      $region19: #{tpu_custom_call.1} parent=5 // pred_region
        // Predicated region
        $region21: #{tpu_custom_call.1} parent=19 // pred_check
          %p106 = pneg %p31
        $region22: #{tpu_custom_call.1} parent=19 // pred_check_branch
          %108 = sbr.rel (%p106) target = $region24
        $region23: #{tpu_custom_call.1} parent=19 // pred_region
          %s109 = sand.u32 %s21, 1
          %s110 = sand.u32 %s21, 1
          %s111 = smul.addr %s110, 80
          %s112 = scalar_lea.vmem [#allocation3], %s111
          %s113 = smul.u32 2, %s11
          %s114 = smul.addr %s113, 8
          %s115 = scalar_lea.vmem %s0, %s114
          // Predicated region
          $region25: #{tpu_custom_call.1} parent=23 // pred_check
            _
          $region26: #{tpu_custom_call.1} parent=23 // pred_check_branch
            %117 = sbr.rel (0) target = $region28
          $region27: #{tpu_custom_call.1} parent=23 // pred_region
            // Predicated region
            $region29: #{tpu_custom_call.1} parent=27 // pred_check
              _
            $region30: #{tpu_custom_call.1} parent=27 // pred_check_branch
              %119 = sbr.rel (0) target = $region32
            $region31: #{tpu_custom_call.1} parent=27 // pred_region
              loop: start=0, step=1, limit=1
              $region33: #{tpu_custom_call.1} parent=31 // loop_pre_header
                _
              $region34: #{tpu_custom_call.1} parent=31 // loop_header
                %s121 = sphi 0, %s125
                %p122 = scmp.ge.s32.totalorder %s121, 1
                %s126 = sphi %s115, %s115
                %s127 = sphi %s112, %s112
              $region35: #{tpu_custom_call.1} parent=31 // loop_header_branch
                %124 = sbr.rel (%p122) target = $region39
              $region36: #{tpu_custom_call.1} parent=31 // loop_body
                %v128 = vld [vmem:[%s126] sm:$0xff]
                %129 = vst [vmem:[%s127] sm:$0xff] %v128
                %v130 = vld [vmem:[%s126 + $0x8] sm:$0xff]
                %131 = vst [vmem:[%s127 + $0x8] sm:$0xff] %v130
                %v132 = vld [vmem:[%s126 + $0x20] sm:$0xff]
                %133 = vst [vmem:[%s127 + $0x10] sm:$0xff] %v132
                %v134 = vld [vmem:[%s126 + $0x28] sm:$0xff]
                %135 = vst [vmem:[%s127 + $0x18] sm:$0xff] %v134
                %v136 = vld [vmem:[%s126 + $0x40] sm:$0xff]
                %137 = vst [vmem:[%s127 + $0x20] sm:$0xff] %v136
                %v138 = vld [vmem:[%s126 + $0x48] sm:$0xff]
                %139 = vst [vmem:[%s127 + $0x28] sm:$0xff] %v138
                %v140 = vld [vmem:[%s126 + $0x60] sm:$0xff]
                %141 = vst [vmem:[%s127 + $0x30] sm:$0xff] %v140
                %v142 = vld [vmem:[%s126 + $0x68] sm:$0xff]
                %143 = vst [vmem:[%s127 + $0x38] sm:$0xff] %v142
                %v144 = vld [vmem:[%s126 + $0x80] sm:$0xff]
                %145 = vst [vmem:[%s127 + $0x40] sm:$0xff] %v144
                %v146 = vld [vmem:[%s126 + $0x88] sm:$0xff]
                %147 = vst [vmem:[%s127 + $0x48] sm:$0xff] %v146
              $region37: #{tpu_custom_call.1} parent=31 // loop_footer
                %s125 = sadd.s32 1, %s121
              $region38: #{tpu_custom_call.1} parent=31 // loop_footer_branch
                %120 = sbr.rel target = $region34
              $region39: #{tpu_custom_call.1} parent=31 // loop_exit
                _
            $region32: #{tpu_custom_call.1} parent=27 // pred_fallthru
              _
            // Predicated region
            $region40: #{tpu_custom_call.1} parent=27 // pred_check
              _
            $region41: #{tpu_custom_call.1} parent=27 // pred_check_branch
              %149 = sbr.rel target = $region43
            $region42: #{tpu_custom_call.1} parent=27 // pred_region
              _
            $region43: #{tpu_custom_call.1} parent=27 // pred_fallthru
              _
          $region28: #{tpu_custom_call.1} parent=23 // pred_fallthru
            _
          %150 = vnop
        $region24: #{tpu_custom_call.1} parent=19 // pred_fallthru
          _
      $region20: #{tpu_custom_call.1} parent=5 // pred_fallthru
        _
      %p151 = scmp.le.s32.totalorder 1, %s11
      %p152 = scmp.lt.s32.totalorder %s11, 3
      %p153 = pnand %p151, %p152
      %p154 = pneg %p153
      // Predicated region
      $region44: #{tpu_custom_call.1} parent=5 // pred_check
        _
      $region45: #{tpu_custom_call.1} parent=5 // pred_check_branch
        %156 = sbr.rel (%p153) target = $region47
      $region46: #{tpu_custom_call.1} parent=5 // pred_region
        %s157 = ssub.s32 %s11, 1
        %s158 = sand.u32 %s24, 1
        %s159 = sand.u32 %s24, 1
        %s160 = smul.addr %s159, 80
        %s161 = scalar_lea.vmem [#allocation3], %s160
        // Predicated region
        $region48: #{tpu_custom_call.1} parent=46 // pred_check
          %p162 = pneg %p37
        $region49: #{tpu_custom_call.1} parent=46 // pred_check_branch
          %164 = sbr.rel (%p162) target = $region51
        $region50: #{tpu_custom_call.1} parent=46 // pred_region
          _
        $region51: #{tpu_custom_call.1} parent=46 // pred_fallthru
          _
        %s165 = sand.u32 %s24, 1
        %s166 = sand.u32 %s24, 1
        %s167 = smul.addr %s166, 80
        %s168 = scalar_lea.vmem [#allocation3], %s167
        %p169 = pneg %p37
        %p170 = pneg %p34
        %p171 = pneg %p58
        %p172 = pneg %p55
        %p173 = pneg %p84
        %p174 = pneg %p81
        %s175 = sand.u32 %s71, 1
        %s176 = scalar_lea.sflag [#allocation5], %s175
        %s177 = sand.u32 %s71, 1
        %s178 = smul.addr %s177, 16
        %s179 = scalar_lea.vmem [#allocation4], %s178
        %s180 = smul.u32 2, %s16
        %s181 = smul.u32 2, %s16
        %v182 = vld [vmem:[%s161] sm:$0xff]
        %v183 = vld [vmem:[%s161 + $0x8] sm:$0xff]
        %v184 = vld [vmem:[%s161 + $0x10] sm:$0xff]
        %v185 = vld [vmem:[%s161 + $0x18] sm:$0xff]
        %v186 = vld [vmem:[%s161 + $0x20] sm:$0xff]
        %v187 = vld [vmem:[%s161 + $0x28] sm:$0xff]
        %v188 = vld [vmem:[%s161 + $0x30] sm:$0xff]
        %v189 = vld [vmem:[%s161 + $0x38] sm:$0xff]
        %v190 = vld [vmem:[%s161 + $0x40] sm:$0xf]
        %v191 = vld [vmem:[%s161 + $0x48] sm:$0xf]
        %v202 = vrot.slane %v183, 7
        %v203 = vrot.slane %v185, 7
        %v204 = vrot.slane %v187, 7
        %v205 = vrot.slane %v189, 7
        %v206 = vrot.slane %v191, 7
        %vm207 = vcmask 1040384
        %v208 = vsel %vm207, %v182, %v202
        %vm209 = vcmask 1041409
        %v210 = vsel %vm209, %v182, %v202
        %v211 = vrot.slane %v210, 1
        %vm212 = vcmask 1042434
        %v213 = vsel %vm212, %v182, %v202
        %v214 = vrot.slane %v213, 2
        %vm215 = vcmask 1043459
        %v216 = vsel %vm215, %v182, %v202
        %v217 = vrot.slane %v216, 3
        %vm218 = vcmask 1044484
        %v219 = vsel %vm218, %v182, %v202
        %v220 = vrot.slane %v219, 4
        %vm221 = vcmask 1045509
        %v222 = vsel %vm221, %v182, %v202
        %v223 = vrot.slane %v222, 5
        %vm224 = vcmask 1046534
        %v225 = vsel %vm224, %v182, %v202
        %v226 = vrot.slane %v225, 6
        %vm227 = vcmask 1046528
        %v228 = vsel %vm227, %v202, %v182
        %v229 = vrot.slane %v228, 7
        %v230 = vsel %vm207, %v184, %v203
        %v231 = vsel %vm209, %v184, %v203
        %v232 = vrot.slane %v231, 1
        %v233 = vsel %vm212, %v184, %v203
        %v234 = vrot.slane %v233, 2
        %v235 = vsel %vm215, %v184, %v203
        %v236 = vrot.slane %v235, 3
        %v237 = vsel %vm218, %v184, %v203
        %v238 = vrot.slane %v237, 4
        %v239 = vsel %vm221, %v184, %v203
        %v240 = vrot.slane %v239, 5
        %v241 = vsel %vm224, %v184, %v203
        %v242 = vrot.slane %v241, 6
        %v243 = vsel %vm227, %v203, %v184
        %v244 = vrot.slane %v243, 7
        %v245 = vsel %vm207, %v186, %v204
        %v246 = vsel %vm209, %v186, %v204
        %v247 = vrot.slane %v246, 1
        %v248 = vsel %vm212, %v186, %v204
        %v249 = vrot.slane %v248, 2
        %v250 = vsel %vm215, %v186, %v204
        %v251 = vrot.slane %v250, 3
        %v252 = vsel %vm218, %v186, %v204
        %v253 = vrot.slane %v252, 4
        %v254 = vsel %vm221, %v186, %v204
        %v255 = vrot.slane %v254, 5
        %v256 = vsel %vm224, %v186, %v204
        %v257 = vrot.slane %v256, 6
        %v258 = vsel %vm227, %v204, %v186
        %v259 = vrot.slane %v258, 7
        %v260 = vsel %vm207, %v188, %v205
        %v261 = vsel %vm209, %v188, %v205
        %v262 = vrot.slane %v261, 1
        %v263 = vsel %vm212, %v188, %v205
        %v264 = vrot.slane %v263, 2
        %v265 = vsel %vm215, %v188, %v205
        %v266 = vrot.slane %v265, 3
        %v267 = vsel %vm218, %v188, %v205
        %v268 = vrot.slane %v267, 4
        %v269 = vsel %vm221, %v188, %v205
        %v270 = vrot.slane %v269, 5
        %v271 = vsel %vm224, %v188, %v205
        %v272 = vrot.slane %v271, 6
        %v273 = vsel %vm227, %v205, %v188
        %v274 = vrot.slane %v273, 7
        %v275 = vsel %vm207, %v190, %v206
        %v276 = vsel %vm209, %v190, %v206
        %v277 = vrot.slane %v276, 1
        %v278 = vsel %vm212, %v190, %v206
        %v279 = vrot.slane %v278, 2
        %v280 = vsel %vm215, %v190, %v206
        %v281 = vrot.slane %v280, 3
        %v282 = vld [vmem:[%s1] sm:$0xff]
        %v283 = vld [vmem:[%s1 + $0x8] sm:$0xff]
        %v284 = vld [vmem:[%s1 + $0x10] sm:$0xff]
        %v285 = vld [vmem:[%s1 + $0x18] sm:$0xff]
        %v286 = vld [vmem:[%s1 + $0x20] sm:$0xff]
        %v287 = vld [vmem:[%s1 + $0x28] sm:$0xff]
        %v288 = vld [vmem:[%s1 + $0x30] sm:$0xff]
        %v289 = vld [vmem:[%s1 + $0x38] sm:$0xff]
        %v290 = vld [vmem:[%s1 + $0x40] sm:$0xff]
        %v291 = vld [vmem:[%s1 + $0x48] sm:$0xff]
        %v292 = vld [vmem:[%s1 + $0x50] sm:$0xff]
        %v293 = vld [vmem:[%s1 + $0x58] sm:$0xff]
        %v294 = vld [vmem:[%s1 + $0x60] sm:$0xff]
        %v295 = vld [vmem:[%s1 + $0x68] sm:$0xff]
        %v296 = vld [vmem:[%s1 + $0x70] sm:$0xff]
        %v297 = vld [vmem:[%s1 + $0x78] sm:$0xff]
        %v298 = vld [vmem:[%s1 + $0x80] sm:$0xff]
        %v299 = vld [vmem:[%s1 + $0x88] sm:$0xff]
        %v300 = vld [vmem:[%s1 + $0x90] sm:$0xff]
        %v301 = vld [vmem:[%s1 + $0x98] sm:$0xff]
        %v302 = vld [vmem:[%s1 + $0xa0] sm:$0xff]
        %v303 = vld [vmem:[%s1 + $0xa8] sm:$0xff]
        %v304 = vld [vmem:[%s1 + $0xb0] sm:$0xff]
        %v305 = vld [vmem:[%s1 + $0xb8] sm:$0xff]
        %v306 = vld [vmem:[%s1 + $0xc0] sm:$0xff]
        %v307 = vld [vmem:[%s1 + $0xc8] sm:$0xff]
        %v308 = vld [vmem:[%s1 + $0xd0] sm:$0xff]
        %v309 = vld [vmem:[%s1 + $0xd8] sm:$0xff]
        %v310 = vld [vmem:[%s1 + $0xe0] sm:$0xff]
        %v311 = vld [vmem:[%s1 + $0xe8] sm:$0xff]
        %v312 = vld [vmem:[%s1 + $0xf0] sm:$0xff]
        %v313 = vld [vmem:[%s1 + $0xf8] sm:$0xff]
        %v314 = vld [vmem:[%s1 + $0x100] sm:$0xff]
        %v315 = vld [vmem:[%s1 + $0x108] sm:$0xff]
        %v316 = vld [vmem:[%s1 + $0x110] sm:$0xff]
        %v317 = vld [vmem:[%s1 + $0x118] sm:$0xff]
        %v318 = vld [vmem:[%s1 + $0x120] sm:$0xff]
        %v319 = vld [vmem:[%s1 + $0x128] sm:$0xff]
        %v320 = vld [vmem:[%s1 + $0x130] sm:$0xff]
        %v321 = vld [vmem:[%s1 + $0x138] sm:$0xff]
        %v322 = vld [vmem:[%s1 + $0x140] sm:$0xff]
        %v323 = vld [vmem:[%s1 + $0x148] sm:$0xff]
        %v324 = vld [vmem:[%s1 + $0x150] sm:$0xff]
        %v325 = vld [vmem:[%s1 + $0x158] sm:$0xff]
        %v326 = vld [vmem:[%s1 + $0x160] sm:$0xff]
        %v327 = vld [vmem:[%s1 + $0x168] sm:$0xff]
        %v328 = vld [vmem:[%s1 + $0x170] sm:$0xff]
        %v329 = vld [vmem:[%s1 + $0x178] sm:$0xff]
        %v330 = vld [vmem:[%s1 + $0x180] sm:$0xff]
        %v331 = vld [vmem:[%s1 + $0x188] sm:$0xff]
        %v332 = vld [vmem:[%s1 + $0x190] sm:$0xff]
        %v333 = vld [vmem:[%s1 + $0x198] sm:$0xff]
        %v334 = vld [vmem:[%s1 + $0x1a0] sm:$0xff]
        %v335 = vld [vmem:[%s1 + $0x1a8] sm:$0xff]
        %v336 = vld [vmem:[%s1 + $0x1b0] sm:$0xff]
        %v337 = vld [vmem:[%s1 + $0x1b8] sm:$0xff]
        %v338 = vld [vmem:[%s1 + $0x1c0] sm:$0xff]
        %v339 = vld [vmem:[%s1 + $0x1c8] sm:$0xff]
        %v340 = vld [vmem:[%s1 + $0x1d0] sm:$0xff]
        %v341 = vld [vmem:[%s1 + $0x1d8] sm:$0xff]
        %v342 = vld [vmem:[%s1 + $0x1e0] sm:$0xff]
        %v343 = vld [vmem:[%s1 + $0x1e8] sm:$0xff]
        %v344 = vld [vmem:[%s1 + $0x1f0] sm:$0xff]
        %v345 = vld [vmem:[%s1 + $0x1f8] sm:$0xff]
        %v346 = vld [vmem:[%s1 + $0x200] sm:$0xff]
        %v347 = vld [vmem:[%s1 + $0x208] sm:$0xff]
        %v348 = vld [vmem:[%s1 + $0x210] sm:$0xff]
        %v349 = vld [vmem:[%s1 + $0x218] sm:$0xff]
        %v350 = vld [vmem:[%s1 + $0x220] sm:$0xff]
        %v351 = vld [vmem:[%s1 + $0x228] sm:$0xff]
        %v352 = vld [vmem:[%s1 + $0x230] sm:$0xff]
        %v353 = vld [vmem:[%s1 + $0x238] sm:$0xff]
        %v354 = vperm.slane %v208, 0
        %v355 = vperm.slane %v208, 1
        %v356 = vperm.slane %v211, 0
        %v357 = vperm.slane %v211, 1
        %v358 = vperm.slane %v214, 0
        %v359 = vperm.slane %v214, 1
        %v360 = vperm.slane %v217, 0
        %v361 = vperm.slane %v217, 1
        %v362 = vperm.slane %v220, 0
        %v363 = vperm.slane %v220, 1
        %v364 = vperm.slane %v223, 0
        %v365 = vperm.slane %v223, 1
        %v366 = vperm.slane %v226, 0
        %v367 = vperm.slane %v226, 1
        %v368 = vperm.slane %v229, 0
        %v369 = vperm.slane %v229, 1
        %v370 = vperm.slane %v230, 0
        %v371 = vperm.slane %v230, 1
        %v372 = vperm.slane %v232, 0
        %v373 = vperm.slane %v232, 1
        %v374 = vperm.slane %v234, 0
        %v375 = vperm.slane %v234, 1
        %v376 = vperm.slane %v236, 0
        %v377 = vperm.slane %v236, 1
        %v378 = vperm.slane %v238, 0
        %v379 = vperm.slane %v238, 1
        %v380 = vperm.slane %v240, 0
        %v381 = vperm.slane %v240, 1
        %v382 = vperm.slane %v242, 0
        %v383 = vperm.slane %v242, 1
        %v384 = vperm.slane %v244, 0
        %v385 = vperm.slane %v244, 1
        %v386 = vperm.slane %v245, 0
        %v387 = vperm.slane %v245, 1
        %v388 = vperm.slane %v247, 0
        %v389 = vperm.slane %v247, 1
        %v390 = vperm.slane %v249, 0
        %v391 = vperm.slane %v249, 1
        %v392 = vperm.slane %v251, 0
        %v393 = vperm.slane %v251, 1
        %v394 = vperm.slane %v253, 0
        %v395 = vperm.slane %v253, 1
        %v396 = vperm.slane %v255, 0
        %v397 = vperm.slane %v255, 1
        %v398 = vperm.slane %v257, 0
        %v399 = vperm.slane %v257, 1
        %v400 = vperm.slane %v259, 0
        %v401 = vperm.slane %v259, 1
        %v402 = vperm.slane %v260, 0
        %v403 = vperm.slane %v260, 1
        %v404 = vperm.slane %v262, 0
        %v405 = vperm.slane %v262, 1
        %v406 = vperm.slane %v264, 0
        %v407 = vperm.slane %v264, 1
        %v408 = vperm.slane %v266, 0
        %v409 = vperm.slane %v266, 1
        %v410 = vperm.slane %v268, 0
        %v411 = vperm.slane %v268, 1
        %v412 = vperm.slane %v270, 0
        %v413 = vperm.slane %v270, 1
        %v414 = vperm.slane %v272, 0
        %v415 = vperm.slane %v272, 1
        %v416 = vperm.slane %v274, 0
        %v417 = vperm.slane %v274, 1
        %v418 = vperm.slane %v275, 0
        %v419 = vperm.slane %v275, 1
        %v420 = vperm.slane %v277, 0
        %v421 = vperm.slane %v277, 1
        %v422 = vperm.slane %v279, 0
        %v423 = vperm.slane %v279, 1
        %v424 = vperm.slane %v281, 0
        %v425 = vperm.slane %v281, 1
        %499 = vset.pattern.permute.xlu0 0
        %500 = vperm.xlu0 %499, %v282
        %v501 = vpop.permute.xlu0 %500
        %504 = vset.pattern.permute.xlu0 0
        %505 = vperm.xlu0 %504, %v283
        %v506 = vpop.permute.xlu0 %505
        %509 = vset.pattern.permute.xlu0 0
        %510 = vperm.xlu0 %509, %v284
        %v511 = vpop.permute.xlu0 %510
        %514 = vset.pattern.permute.xlu0 0
        %515 = vperm.xlu0 %514, %v285
        %v516 = vpop.permute.xlu0 %515
        %519 = vset.pattern.permute.xlu0 0
        %520 = vperm.xlu0 %519, %v286
        %v521 = vpop.permute.xlu0 %520
        %524 = vset.pattern.permute.xlu0 0
        %525 = vperm.xlu0 %524, %v287
        %v526 = vpop.permute.xlu0 %525
        %529 = vset.pattern.permute.xlu0 0
        %530 = vperm.xlu0 %529, %v288
        %v531 = vpop.permute.xlu0 %530
        %534 = vset.pattern.permute.xlu0 0
        %535 = vperm.xlu0 %534, %v289
        %v536 = vpop.permute.xlu0 %535
        %539 = vset.pattern.permute.xlu0 0
        %540 = vperm.xlu0 %539, %v290
        %v541 = vpop.permute.xlu0 %540
        %544 = vset.pattern.permute.xlu0 0
        %545 = vperm.xlu0 %544, %v291
        %v546 = vpop.permute.xlu0 %545
        %549 = vset.pattern.permute.xlu0 0
        %550 = vperm.xlu0 %549, %v292
        %v551 = vpop.permute.xlu0 %550
        %554 = vset.pattern.permute.xlu0 0
        %555 = vperm.xlu0 %554, %v293
        %v556 = vpop.permute.xlu0 %555
        %559 = vset.pattern.permute.xlu0 0
        %560 = vperm.xlu0 %559, %v294
        %v561 = vpop.permute.xlu0 %560
        %564 = vset.pattern.permute.xlu0 0
        %565 = vperm.xlu0 %564, %v295
        %v566 = vpop.permute.xlu0 %565
        %569 = vset.pattern.permute.xlu0 0
        %570 = vperm.xlu0 %569, %v296
        %v571 = vpop.permute.xlu0 %570
        %574 = vset.pattern.permute.xlu0 0
        %575 = vperm.xlu0 %574, %v297
        %v576 = vpop.permute.xlu0 %575
        %579 = vset.pattern.permute.xlu0 0
        %580 = vperm.xlu0 %579, %v298
        %v581 = vpop.permute.xlu0 %580
        %584 = vset.pattern.permute.xlu0 0
        %585 = vperm.xlu0 %584, %v299
        %v586 = vpop.permute.xlu0 %585
        %589 = vset.pattern.permute.xlu0 0
        %590 = vperm.xlu0 %589, %v300
        %v591 = vpop.permute.xlu0 %590
        %594 = vset.pattern.permute.xlu0 0
        %595 = vperm.xlu0 %594, %v301
        %v596 = vpop.permute.xlu0 %595
        %599 = vset.pattern.permute.xlu0 0
        %600 = vperm.xlu0 %599, %v302
        %v601 = vpop.permute.xlu0 %600
        %604 = vset.pattern.permute.xlu0 0
        %605 = vperm.xlu0 %604, %v303
        %v606 = vpop.permute.xlu0 %605
        %609 = vset.pattern.permute.xlu0 0
        %610 = vperm.xlu0 %609, %v304
        %v611 = vpop.permute.xlu0 %610
        %614 = vset.pattern.permute.xlu0 0
        %615 = vperm.xlu0 %614, %v305
        %v616 = vpop.permute.xlu0 %615
        %619 = vset.pattern.permute.xlu0 0
        %620 = vperm.xlu0 %619, %v306
        %v621 = vpop.permute.xlu0 %620
        %624 = vset.pattern.permute.xlu0 0
        %625 = vperm.xlu0 %624, %v307
        %v626 = vpop.permute.xlu0 %625
        %629 = vset.pattern.permute.xlu0 0
        %630 = vperm.xlu0 %629, %v308
        %v631 = vpop.permute.xlu0 %630
        %634 = vset.pattern.permute.xlu0 0
        %635 = vperm.xlu0 %634, %v309
        %v636 = vpop.permute.xlu0 %635
        %639 = vset.pattern.permute.xlu0 0
        %640 = vperm.xlu0 %639, %v310
        %v641 = vpop.permute.xlu0 %640
        %644 = vset.pattern.permute.xlu0 0
        %645 = vperm.xlu0 %644, %v311
        %v646 = vpop.permute.xlu0 %645
        %649 = vset.pattern.permute.xlu0 0
        %650 = vperm.xlu0 %649, %v312
        %v651 = vpop.permute.xlu0 %650
        %654 = vset.pattern.permute.xlu0 0
        %655 = vperm.xlu0 %654, %v313
        %v656 = vpop.permute.xlu0 %655
        %659 = vset.pattern.permute.xlu0 0
        %660 = vperm.xlu0 %659, %v314
        %v661 = vpop.permute.xlu0 %660
        %664 = vset.pattern.permute.xlu0 0
        %665 = vperm.xlu0 %664, %v315
        %v666 = vpop.permute.xlu0 %665
        %669 = vset.pattern.permute.xlu0 0
        %670 = vperm.xlu0 %669, %v316
        %v671 = vpop.permute.xlu0 %670
        %674 = vset.pattern.permute.xlu0 0
        %675 = vperm.xlu0 %674, %v317
        %v676 = vpop.permute.xlu0 %675
        %679 = vset.pattern.permute.xlu0 0
        %680 = vperm.xlu0 %679, %v318
        %v681 = vpop.permute.xlu0 %680
        %684 = vset.pattern.permute.xlu0 0
        %685 = vperm.xlu0 %684, %v319
        %v686 = vpop.permute.xlu0 %685
        %689 = vset.pattern.permute.xlu0 0
        %690 = vperm.xlu0 %689, %v320
        %v691 = vpop.permute.xlu0 %690
        %694 = vset.pattern.permute.xlu0 0
        %695 = vperm.xlu0 %694, %v321
        %v696 = vpop.permute.xlu0 %695
        %699 = vset.pattern.permute.xlu0 0
        %700 = vperm.xlu0 %699, %v322
        %v701 = vpop.permute.xlu0 %700
        %704 = vset.pattern.permute.xlu0 0
        %705 = vperm.xlu0 %704, %v323
        %v706 = vpop.permute.xlu0 %705
        %709 = vset.pattern.permute.xlu0 0
        %710 = vperm.xlu0 %709, %v324
        %v711 = vpop.permute.xlu0 %710
        %714 = vset.pattern.permute.xlu0 0
        %715 = vperm.xlu0 %714, %v325
        %v716 = vpop.permute.xlu0 %715
        %719 = vset.pattern.permute.xlu0 0
        %720 = vperm.xlu0 %719, %v326
        %v721 = vpop.permute.xlu0 %720
        %724 = vset.pattern.permute.xlu0 0
        %725 = vperm.xlu0 %724, %v327
        %v726 = vpop.permute.xlu0 %725
        %729 = vset.pattern.permute.xlu0 0
        %730 = vperm.xlu0 %729, %v328
        %v731 = vpop.permute.xlu0 %730
        %734 = vset.pattern.permute.xlu0 0
        %735 = vperm.xlu0 %734, %v329
        %v736 = vpop.permute.xlu0 %735
        %739 = vset.pattern.permute.xlu0 0
        %740 = vperm.xlu0 %739, %v330
        %v741 = vpop.permute.xlu0 %740
        %744 = vset.pattern.permute.xlu0 0
        %745 = vperm.xlu0 %744, %v331
        %v746 = vpop.permute.xlu0 %745
        %749 = vset.pattern.permute.xlu0 0
        %750 = vperm.xlu0 %749, %v332
        %v751 = vpop.permute.xlu0 %750
        %754 = vset.pattern.permute.xlu0 0
        %755 = vperm.xlu0 %754, %v333
        %v756 = vpop.permute.xlu0 %755
        %759 = vset.pattern.permute.xlu0 0
        %760 = vperm.xlu0 %759, %v334
        %v761 = vpop.permute.xlu0 %760
        %764 = vset.pattern.permute.xlu0 0
        %765 = vperm.xlu0 %764, %v335
        %v766 = vpop.permute.xlu0 %765
        %769 = vset.pattern.permute.xlu0 0
        %770 = vperm.xlu0 %769, %v336
        %v771 = vpop.permute.xlu0 %770
        %774 = vset.pattern.permute.xlu0 0
        %775 = vperm.xlu0 %774, %v337
        %v776 = vpop.permute.xlu0 %775
        %779 = vset.pattern.permute.xlu0 0
        %780 = vperm.xlu0 %779, %v338
        %v781 = vpop.permute.xlu0 %780
        %784 = vset.pattern.permute.xlu0 0
        %785 = vperm.xlu0 %784, %v339
        %v786 = vpop.permute.xlu0 %785
        %789 = vset.pattern.permute.xlu0 0
        %790 = vperm.xlu0 %789, %v340
        %v791 = vpop.permute.xlu0 %790
        %794 = vset.pattern.permute.xlu0 0
        %795 = vperm.xlu0 %794, %v341
        %v796 = vpop.permute.xlu0 %795
        %799 = vset.pattern.permute.xlu0 0
        %800 = vperm.xlu0 %799, %v342
        %v801 = vpop.permute.xlu0 %800
        %804 = vset.pattern.permute.xlu0 0
        %805 = vperm.xlu0 %804, %v343
        %v806 = vpop.permute.xlu0 %805
        %809 = vset.pattern.permute.xlu0 0
        %810 = vperm.xlu0 %809, %v344
        %v811 = vpop.permute.xlu0 %810
        %814 = vset.pattern.permute.xlu0 0
        %815 = vperm.xlu0 %814, %v345
        %v816 = vpop.permute.xlu0 %815
        %819 = vset.pattern.permute.xlu0 0
        %820 = vperm.xlu0 %819, %v346
        %v821 = vpop.permute.xlu0 %820
        %824 = vset.pattern.permute.xlu0 0
        %825 = vperm.xlu0 %824, %v347
        %v826 = vpop.permute.xlu0 %825
        %829 = vset.pattern.permute.xlu0 0
        %830 = vperm.xlu0 %829, %v348
        %v831 = vpop.permute.xlu0 %830
        %834 = vset.pattern.permute.xlu0 0
        %835 = vperm.xlu0 %834, %v349
        %v836 = vpop.permute.xlu0 %835
        %839 = vset.pattern.permute.xlu0 0
        %840 = vperm.xlu0 %839, %v350
        %v841 = vpop.permute.xlu0 %840
        %844 = vset.pattern.permute.xlu0 0
        %845 = vperm.xlu0 %844, %v351
        %v846 = vpop.permute.xlu0 %845
        %849 = vset.pattern.permute.xlu0 0
        %850 = vperm.xlu0 %849, %v352
        %v851 = vpop.permute.xlu0 %850
        %854 = vset.pattern.permute.xlu0 0
        %855 = vperm.xlu0 %854, %v353
        %v856 = vpop.permute.xlu0 %855
        %v858 = vadd.f32 %v354, %v501
        %v859 = vadd.f32 %v355, %v501
        %v860 = vadd.f32 %v354, %v506
        %v861 = vadd.f32 %v355, %v506
        %v862 = vadd.f32 %v356, %v511
        %v863 = vadd.f32 %v357, %v511
        %v864 = vadd.f32 %v356, %v516
        %v865 = vadd.f32 %v357, %v516
        %v866 = vadd.f32 %v358, %v521
        %v867 = vadd.f32 %v359, %v521
        %v868 = vadd.f32 %v358, %v526
        %v869 = vadd.f32 %v359, %v526
        %v870 = vadd.f32 %v360, %v531
        %v871 = vadd.f32 %v361, %v531
        %v872 = vadd.f32 %v360, %v536
        %v873 = vadd.f32 %v361, %v536
        %v874 = vadd.f32 %v362, %v541
        %v875 = vadd.f32 %v363, %v541
        %v876 = vadd.f32 %v362, %v546
        %v877 = vadd.f32 %v363, %v546
        %v878 = vadd.f32 %v364, %v551
        %v879 = vadd.f32 %v365, %v551
        %v880 = vadd.f32 %v364, %v556
        %v881 = vadd.f32 %v365, %v556
        %v882 = vadd.f32 %v366, %v561
        %v883 = vadd.f32 %v367, %v561
        %v884 = vadd.f32 %v366, %v566
        %v885 = vadd.f32 %v367, %v566
        %v886 = vadd.f32 %v368, %v571
        %v887 = vadd.f32 %v369, %v571
        %v888 = vadd.f32 %v368, %v576
        %v889 = vadd.f32 %v369, %v576
        %v890 = vadd.f32 %v370, %v581
        %v891 = vadd.f32 %v371, %v581
        %v892 = vadd.f32 %v370, %v586
        %v893 = vadd.f32 %v371, %v586
        %v894 = vadd.f32 %v372, %v591
        %v895 = vadd.f32 %v373, %v591
        %v896 = vadd.f32 %v372, %v596
        %v897 = vadd.f32 %v373, %v596
        %v898 = vadd.f32 %v374, %v601
        %v899 = vadd.f32 %v375, %v601
        %v900 = vadd.f32 %v374, %v606
        %v901 = vadd.f32 %v375, %v606
        %v902 = vadd.f32 %v376, %v611
        %v903 = vadd.f32 %v377, %v611
        %v904 = vadd.f32 %v376, %v616
        %v905 = vadd.f32 %v377, %v616
        %v906 = vadd.f32 %v378, %v621
        %v907 = vadd.f32 %v379, %v621
        %v908 = vadd.f32 %v378, %v626
        %v909 = vadd.f32 %v379, %v626
        %v910 = vadd.f32 %v380, %v631
        %v911 = vadd.f32 %v381, %v631
        %v912 = vadd.f32 %v380, %v636
        %v913 = vadd.f32 %v381, %v636
        %v914 = vadd.f32 %v382, %v641
        %v915 = vadd.f32 %v383, %v641
        %v916 = vadd.f32 %v382, %v646
        %v917 = vadd.f32 %v383, %v646
        %v918 = vadd.f32 %v384, %v651
        %v919 = vadd.f32 %v385, %v651
        %v920 = vadd.f32 %v384, %v656
        %v921 = vadd.f32 %v385, %v656
        %v922 = vadd.f32 %v386, %v661
        %v923 = vadd.f32 %v387, %v661
        %v924 = vadd.f32 %v386, %v666
        %v925 = vadd.f32 %v387, %v666
        %v926 = vadd.f32 %v388, %v671
        %v927 = vadd.f32 %v389, %v671
        %v928 = vadd.f32 %v388, %v676
        %v929 = vadd.f32 %v389, %v676
        %v930 = vadd.f32 %v390, %v681
        %v931 = vadd.f32 %v391, %v681
        %v932 = vadd.f32 %v390, %v686
        %v933 = vadd.f32 %v391, %v686
        %v934 = vadd.f32 %v392, %v691
        %v935 = vadd.f32 %v393, %v691
        %v936 = vadd.f32 %v392, %v696
        %v937 = vadd.f32 %v393, %v696
        %v938 = vadd.f32 %v394, %v701
        %v939 = vadd.f32 %v395, %v701
        %v940 = vadd.f32 %v394, %v706
        %v941 = vadd.f32 %v395, %v706
        %v942 = vadd.f32 %v396, %v711
        %v943 = vadd.f32 %v397, %v711
        %v944 = vadd.f32 %v396, %v716
        %v945 = vadd.f32 %v397, %v716
        %v946 = vadd.f32 %v398, %v721
        %v947 = vadd.f32 %v399, %v721
        %v948 = vadd.f32 %v398, %v726
        %v949 = vadd.f32 %v399, %v726
        %v950 = vadd.f32 %v400, %v731
        %v951 = vadd.f32 %v401, %v731
        %v952 = vadd.f32 %v400, %v736
        %v953 = vadd.f32 %v401, %v736
        %v954 = vadd.f32 %v402, %v741
        %v955 = vadd.f32 %v403, %v741
        %v956 = vadd.f32 %v402, %v746
        %v957 = vadd.f32 %v403, %v746
        %v958 = vadd.f32 %v404, %v751
        %v959 = vadd.f32 %v405, %v751
        %v960 = vadd.f32 %v404, %v756
        %v961 = vadd.f32 %v405, %v756
        %v962 = vadd.f32 %v406, %v761
        %v963 = vadd.f32 %v407, %v761
        %v964 = vadd.f32 %v406, %v766
        %v965 = vadd.f32 %v407, %v766
        %v966 = vadd.f32 %v408, %v771
        %v967 = vadd.f32 %v409, %v771
        %v968 = vadd.f32 %v408, %v776
        %v969 = vadd.f32 %v409, %v776
        %v970 = vadd.f32 %v410, %v781
        %v971 = vadd.f32 %v411, %v781
        %v972 = vadd.f32 %v410, %v786
        %v973 = vadd.f32 %v411, %v786
        %v974 = vadd.f32 %v412, %v791
        %v975 = vadd.f32 %v413, %v791
        %v976 = vadd.f32 %v412, %v796
        %v977 = vadd.f32 %v413, %v796
        %v978 = vadd.f32 %v414, %v801
        %v979 = vadd.f32 %v415, %v801
        %v980 = vadd.f32 %v414, %v806
        %v981 = vadd.f32 %v415, %v806
        %v982 = vadd.f32 %v416, %v811
        %v983 = vadd.f32 %v417, %v811
        %v984 = vadd.f32 %v416, %v816
        %v985 = vadd.f32 %v417, %v816
        %v986 = vadd.f32 %v418, %v821
        %v987 = vadd.f32 %v419, %v821
        %v988 = vadd.f32 %v418, %v826
        %v989 = vadd.f32 %v419, %v826
        %v990 = vadd.f32 %v420, %v831
        %v991 = vadd.f32 %v421, %v831
        %v992 = vadd.f32 %v420, %v836
        %v993 = vadd.f32 %v421, %v836
        %v994 = vadd.f32 %v422, %v841
        %v995 = vadd.f32 %v423, %v841
        %v996 = vadd.f32 %v422, %v846
        %v997 = vadd.f32 %v423, %v846
        %v998 = vadd.f32 %v424, %v851
        %v999 = vadd.f32 %v425, %v851
        %v1000 = vadd.f32 %v424, %v856
        %v1001 = vadd.f32 %v425, %v856
        %v1002 = vand.u32 2147483647, %v858
        %v1003 = vand.u32 2147483647, %v859
        %v1004 = vand.u32 2147483647, %v860
        %v1005 = vand.u32 2147483647, %v861
        %v1006 = vand.u32 2147483647, %v862
        %v1007 = vand.u32 2147483647, %v863
        %v1008 = vand.u32 2147483647, %v864
        %v1009 = vand.u32 2147483647, %v865
        %v1010 = vand.u32 2147483647, %v866
        %v1011 = vand.u32 2147483647, %v867
        %v1012 = vand.u32 2147483647, %v868
        %v1013 = vand.u32 2147483647, %v869
        %v1014 = vand.u32 2147483647, %v870
        %v1015 = vand.u32 2147483647, %v871
        %v1016 = vand.u32 2147483647, %v872
        %v1017 = vand.u32 2147483647, %v873
        %v1018 = vand.u32 2147483647, %v874
        %v1019 = vand.u32 2147483647, %v875
        %v1020 = vand.u32 2147483647, %v876
        %v1021 = vand.u32 2147483647, %v877
        %v1022 = vand.u32 2147483647, %v878
        %v1023 = vand.u32 2147483647, %v879
        %v1024 = vand.u32 2147483647, %v880
        %v1025 = vand.u32 2147483647, %v881
        %v1026 = vand.u32 2147483647, %v882
        %v1027 = vand.u32 2147483647, %v883
        %v1028 = vand.u32 2147483647, %v884
        %v1029 = vand.u32 2147483647, %v885
        %v1030 = vand.u32 2147483647, %v886
        %v1031 = vand.u32 2147483647, %v887
        %v1032 = vand.u32 2147483647, %v888
        %v1033 = vand.u32 2147483647, %v889
        %v1034 = vand.u32 2147483647, %v890
        %v1035 = vand.u32 2147483647, %v891
        %v1036 = vand.u32 2147483647, %v892
        %v1037 = vand.u32 2147483647, %v893
        %v1038 = vand.u32 2147483647, %v894
        %v1039 = vand.u32 2147483647, %v895
        %v1040 = vand.u32 2147483647, %v896
        %v1041 = vand.u32 2147483647, %v897
        %v1042 = vand.u32 2147483647, %v898
        %v1043 = vand.u32 2147483647, %v899
        %v1044 = vand.u32 2147483647, %v900
        %v1045 = vand.u32 2147483647, %v901
        %v1046 = vand.u32 2147483647, %v902
        %v1047 = vand.u32 2147483647, %v903
        %v1048 = vand.u32 2147483647, %v904
        %v1049 = vand.u32 2147483647, %v905
        %v1050 = vand.u32 2147483647, %v906
        %v1051 = vand.u32 2147483647, %v907
        %v1052 = vand.u32 2147483647, %v908
        %v1053 = vand.u32 2147483647, %v909
        %v1054 = vand.u32 2147483647, %v910
        %v1055 = vand.u32 2147483647, %v911
        %v1056 = vand.u32 2147483647, %v912
        %v1057 = vand.u32 2147483647, %v913
        %v1058 = vand.u32 2147483647, %v914
        %v1059 = vand.u32 2147483647, %v915
        %v1060 = vand.u32 2147483647, %v916
        %v1061 = vand.u32 2147483647, %v917
        %v1062 = vand.u32 2147483647, %v918
        %v1063 = vand.u32 2147483647, %v919
        %v1064 = vand.u32 2147483647, %v920
        %v1065 = vand.u32 2147483647, %v921
        %v1066 = vand.u32 2147483647, %v922
        %v1067 = vand.u32 2147483647, %v923
        %v1068 = vand.u32 2147483647, %v924
        %v1069 = vand.u32 2147483647, %v925
        %v1070 = vand.u32 2147483647, %v926
        %v1071 = vand.u32 2147483647, %v927
        %v1072 = vand.u32 2147483647, %v928
        %v1073 = vand.u32 2147483647, %v929
        %v1074 = vand.u32 2147483647, %v930
        %v1075 = vand.u32 2147483647, %v931
        %v1076 = vand.u32 2147483647, %v932
        %v1077 = vand.u32 2147483647, %v933
        %v1078 = vand.u32 2147483647, %v934
        %v1079 = vand.u32 2147483647, %v935
        %v1080 = vand.u32 2147483647, %v936
        %v1081 = vand.u32 2147483647, %v937
        %v1082 = vand.u32 2147483647, %v938
        %v1083 = vand.u32 2147483647, %v939
        %v1084 = vand.u32 2147483647, %v940
        %v1085 = vand.u32 2147483647, %v941
        %v1086 = vand.u32 2147483647, %v942
        %v1087 = vand.u32 2147483647, %v943
        %v1088 = vand.u32 2147483647, %v944
        %v1089 = vand.u32 2147483647, %v945
        %v1090 = vand.u32 2147483647, %v946
        %v1091 = vand.u32 2147483647, %v947
        %v1092 = vand.u32 2147483647, %v948
        %v1093 = vand.u32 2147483647, %v949
        %v1094 = vand.u32 2147483647, %v950
        %v1095 = vand.u32 2147483647, %v951
        %v1096 = vand.u32 2147483647, %v952
        %v1097 = vand.u32 2147483647, %v953
        %v1098 = vand.u32 2147483647, %v954
        %v1099 = vand.u32 2147483647, %v955
        %v1100 = vand.u32 2147483647, %v956
        %v1101 = vand.u32 2147483647, %v957
        %v1102 = vand.u32 2147483647, %v958
        %v1103 = vand.u32 2147483647, %v959
        %v1104 = vand.u32 2147483647, %v960
        %v1105 = vand.u32 2147483647, %v961
        %v1106 = vand.u32 2147483647, %v962
        %v1107 = vand.u32 2147483647, %v963
        %v1108 = vand.u32 2147483647, %v964
        %v1109 = vand.u32 2147483647, %v965
        %v1110 = vand.u32 2147483647, %v966
        %v1111 = vand.u32 2147483647, %v967
        %v1112 = vand.u32 2147483647, %v968
        %v1113 = vand.u32 2147483647, %v969
        %v1114 = vand.u32 2147483647, %v970
        %v1115 = vand.u32 2147483647, %v971
        %v1116 = vand.u32 2147483647, %v972
        %v1117 = vand.u32 2147483647, %v973
        %v1118 = vand.u32 2147483647, %v974
        %v1119 = vand.u32 2147483647, %v975
        %v1120 = vand.u32 2147483647, %v976
        %v1121 = vand.u32 2147483647, %v977
        %v1122 = vand.u32 2147483647, %v978
        %v1123 = vand.u32 2147483647, %v979
        %v1124 = vand.u32 2147483647, %v980
        %v1125 = vand.u32 2147483647, %v981
        %v1126 = vand.u32 2147483647, %v982
        %v1127 = vand.u32 2147483647, %v983
        %v1128 = vand.u32 2147483647, %v984
        %v1129 = vand.u32 2147483647, %v985
        %v1130 = vand.u32 2147483647, %v986
        %v1131 = vand.u32 2147483647, %v987
        %v1132 = vand.u32 2147483647, %v988
        %v1133 = vand.u32 2147483647, %v989
        %v1134 = vand.u32 2147483647, %v990
        %v1135 = vand.u32 2147483647, %v991
        %v1136 = vand.u32 2147483647, %v992
        %v1137 = vand.u32 2147483647, %v993
        %v1138 = vand.u32 2147483647, %v994
        %v1139 = vand.u32 2147483647, %v995
        %v1140 = vand.u32 2147483647, %v996
        %v1141 = vand.u32 2147483647, %v997
        %v1142 = vand.u32 2147483647, %v998
        %v1143 = vand.u32 2147483647, %v999
        %v1144 = vand.u32 2147483647, %v1000
        %v1145 = vand.u32 2147483647, %v1001
        %1146 = vst [vmem:[#allocation2] sm:$0xff] %v1002
        %1147 = vst [vmem:[#allocation2 + $0x8] sm:$0xff] %v1003
        %1148 = vst [vmem:[#allocation2 + $0x10] sm:$0xff] %v1004
        %1149 = vst [vmem:[#allocation2 + $0x18] sm:$0xff] %v1005
        %1150 = vst [vmem:[#allocation2 + $0x20] sm:$0xff] %v1006
        %1151 = vst [vmem:[#allocation2 + $0x28] sm:$0xff] %v1007
        %1152 = vst [vmem:[#allocation2 + $0x30] sm:$0xff] %v1008
        %1153 = vst [vmem:[#allocation2 + $0x38] sm:$0xff] %v1009
        %1154 = vst [vmem:[#allocation2 + $0x40] sm:$0xff] %v1010
        %1155 = vst [vmem:[#allocation2 + $0x48] sm:$0xff] %v1011
        %1156 = vst [vmem:[#allocation2 + $0x50] sm:$0xff] %v1012
        %1157 = vst [vmem:[#allocation2 + $0x58] sm:$0xff] %v1013
        %1158 = vst [vmem:[#allocation2 + $0x60] sm:$0xff] %v1014
        %1159 = vst [vmem:[#allocation2 + $0x68] sm:$0xff] %v1015
        %1160 = vst [vmem:[#allocation2 + $0x70] sm:$0xff] %v1016
        %1161 = vst [vmem:[#allocation2 + $0x78] sm:$0xff] %v1017
        %1162 = vst [vmem:[#allocation2 + $0x80] sm:$0xff] %v1018
        %1163 = vst [vmem:[#allocation2 + $0x88] sm:$0xff] %v1019
        %1164 = vst [vmem:[#allocation2 + $0x90] sm:$0xff] %v1020
        %1165 = vst [vmem:[#allocation2 + $0x98] sm:$0xff] %v1021
        %1166 = vst [vmem:[#allocation2 + $0xa0] sm:$0xff] %v1022
        %1167 = vst [vmem:[#allocation2 + $0xa8] sm:$0xff] %v1023
        %1168 = vst [vmem:[#allocation2 + $0xb0] sm:$0xff] %v1024
        %1169 = vst [vmem:[#allocation2 + $0xb8] sm:$0xff] %v1025
        %1170 = vst [vmem:[#allocation2 + $0xc0] sm:$0xff] %v1026
        %1171 = vst [vmem:[#allocation2 + $0xc8] sm:$0xff] %v1027
        %1172 = vst [vmem:[#allocation2 + $0xd0] sm:$0xff] %v1028
        %1173 = vst [vmem:[#allocation2 + $0xd8] sm:$0xff] %v1029
        %1174 = vst [vmem:[#allocation2 + $0xe0] sm:$0xff] %v1030
        %1175 = vst [vmem:[#allocation2 + $0xe8] sm:$0xff] %v1031
        %1176 = vst [vmem:[#allocation2 + $0xf0] sm:$0xff] %v1032
        %1177 = vst [vmem:[#allocation2 + $0xf8] sm:$0xff] %v1033
        %1178 = vst [vmem:[#allocation2 + $0x100] sm:$0xff] %v1034
        %1179 = vst [vmem:[#allocation2 + $0x108] sm:$0xff] %v1035
        %1180 = vst [vmem:[#allocation2 + $0x110] sm:$0xff] %v1036
        %1181 = vst [vmem:[#allocation2 + $0x118] sm:$0xff] %v1037
        %1182 = vst [vmem:[#allocation2 + $0x120] sm:$0xff] %v1038
        %1183 = vst [vmem:[#allocation2 + $0x128] sm:$0xff] %v1039
        %1184 = vst [vmem:[#allocation2 + $0x130] sm:$0xff] %v1040
        %1185 = vst [vmem:[#allocation2 + $0x138] sm:$0xff] %v1041
        %1186 = vst [vmem:[#allocation2 + $0x140] sm:$0xff] %v1042
        %1187 = vst [vmem:[#allocation2 + $0x148] sm:$0xff] %v1043
        %1188 = vst [vmem:[#allocation2 + $0x150] sm:$0xff] %v1044
        %1189 = vst [vmem:[#allocation2 + $0x158] sm:$0xff] %v1045
        %1190 = vst [vmem:[#allocation2 + $0x160] sm:$0xff] %v1046
        %1191 = vst [vmem:[#allocation2 + $0x168] sm:$0xff] %v1047
        %1192 = vst [vmem:[#allocation2 + $0x170] sm:$0xff] %v1048
        %1193 = vst [vmem:[#allocation2 + $0x178] sm:$0xff] %v1049
        %1194 = vst [vmem:[#allocation2 + $0x180] sm:$0xff] %v1050
        %1195 = vst [vmem:[#allocation2 + $0x188] sm:$0xff] %v1051
        %1196 = vst [vmem:[#allocation2 + $0x190] sm:$0xff] %v1052
        %1197 = vst [vmem:[#allocation2 + $0x198] sm:$0xff] %v1053
        %1198 = vst [vmem:[#allocation2 + $0x1a0] sm:$0xff] %v1054
        %1199 = vst [vmem:[#allocation2 + $0x1a8] sm:$0xff] %v1055
        %1200 = vst [vmem:[#allocation2 + $0x1b0] sm:$0xff] %v1056
        %1201 = vst [vmem:[#allocation2 + $0x1b8] sm:$0xff] %v1057
        %1202 = vst [vmem:[#allocation2 + $0x1c0] sm:$0xff] %v1058
        %1203 = vst [vmem:[#allocation2 + $0x1c8] sm:$0xff] %v1059
        %1204 = vst [vmem:[#allocation2 + $0x1d0] sm:$0xff] %v1060
        %1205 = vst [vmem:[#allocation2 + $0x1d8] sm:$0xff] %v1061
        %1206 = vst [vmem:[#allocation2 + $0x1e0] sm:$0xff] %v1062
        %1207 = vst [vmem:[#allocation2 + $0x1e8] sm:$0xff] %v1063
        %1208 = vst [vmem:[#allocation2 + $0x1f0] sm:$0xff] %v1064
        %1209 = vst [vmem:[#allocation2 + $0x1f8] sm:$0xff] %v1065
        %1210 = vst [vmem:[#allocation2 + $0x200] sm:$0xff] %v1066
        %1211 = vst [vmem:[#allocation2 + $0x208] sm:$0xff] %v1067
        %1212 = vst [vmem:[#allocation2 + $0x210] sm:$0xff] %v1068
        %1213 = vst [vmem:[#allocation2 + $0x218] sm:$0xff] %v1069
        %1214 = vst [vmem:[#allocation2 + $0x220] sm:$0xff] %v1070
        %1215 = vst [vmem:[#allocation2 + $0x228] sm:$0xff] %v1071
        %1216 = vst [vmem:[#allocation2 + $0x230] sm:$0xff] %v1072
        %1217 = vst [vmem:[#allocation2 + $0x238] sm:$0xff] %v1073
        %1218 = vst [vmem:[#allocation2 + $0x240] sm:$0xff] %v1074
        %1219 = vst [vmem:[#allocation2 + $0x248] sm:$0xff] %v1075
        %1220 = vst [vmem:[#allocation2 + $0x250] sm:$0xff] %v1076
        %1221 = vst [vmem:[#allocation2 + $0x258] sm:$0xff] %v1077
        %1222 = vst [vmem:[#allocation2 + $0x260] sm:$0xff] %v1078
        %1223 = vst [vmem:[#allocation2 + $0x268] sm:$0xff] %v1079
        %1224 = vst [vmem:[#allocation2 + $0x270] sm:$0xff] %v1080
        %1225 = vst [vmem:[#allocation2 + $0x278] sm:$0xff] %v1081
        %1226 = vst [vmem:[#allocation2 + $0x280] sm:$0xff] %v1082
        %1227 = vst [vmem:[#allocation2 + $0x288] sm:$0xff] %v1083
        %1228 = vst [vmem:[#allocation2 + $0x290] sm:$0xff] %v1084
        %1229 = vst [vmem:[#allocation2 + $0x298] sm:$0xff] %v1085
        %1230 = vst [vmem:[#allocation2 + $0x2a0] sm:$0xff] %v1086
        %1231 = vst [vmem:[#allocation2 + $0x2a8] sm:$0xff] %v1087
        %1232 = vst [vmem:[#allocation2 + $0x2b0] sm:$0xff] %v1088
        %1233 = vst [vmem:[#allocation2 + $0x2b8] sm:$0xff] %v1089
        %1234 = vst [vmem:[#allocation2 + $0x2c0] sm:$0xff] %v1090
        %1235 = vst [vmem:[#allocation2 + $0x2c8] sm:$0xff] %v1091
        %1236 = vst [vmem:[#allocation2 + $0x2d0] sm:$0xff] %v1092
        %1237 = vst [vmem:[#allocation2 + $0x2d8] sm:$0xff] %v1093
        %1238 = vst [vmem:[#allocation2 + $0x2e0] sm:$0xff] %v1094
        %1239 = vst [vmem:[#allocation2 + $0x2e8] sm:$0xff] %v1095
        %1240 = vst [vmem:[#allocation2 + $0x2f0] sm:$0xff] %v1096
        %1241 = vst [vmem:[#allocation2 + $0x2f8] sm:$0xff] %v1097
        %1242 = vst [vmem:[#allocation2 + $0x300] sm:$0xff] %v1098
        %1243 = vst [vmem:[#allocation2 + $0x308] sm:$0xff] %v1099
        %1244 = vst [vmem:[#allocation2 + $0x310] sm:$0xff] %v1100
        %1245 = vst [vmem:[#allocation2 + $0x318] sm:$0xff] %v1101
        %1246 = vst [vmem:[#allocation2 + $0x320] sm:$0xff] %v1102
        %1247 = vst [vmem:[#allocation2 + $0x328] sm:$0xff] %v1103
        %1248 = vst [vmem:[#allocation2 + $0x330] sm:$0xff] %v1104
        %1249 = vst [vmem:[#allocation2 + $0x338] sm:$0xff] %v1105
        %1250 = vst [vmem:[#allocation2 + $0x340] sm:$0xff] %v1106
        %1251 = vst [vmem:[#allocation2 + $0x348] sm:$0xff] %v1107
        %1252 = vst [vmem:[#allocation2 + $0x350] sm:$0xff] %v1108
        %1253 = vst [vmem:[#allocation2 + $0x358] sm:$0xff] %v1109
        %1254 = vst [vmem:[#allocation2 + $0x360] sm:$0xff] %v1110
        %1255 = vst [vmem:[#allocation2 + $0x368] sm:$0xff] %v1111
        %1256 = vst [vmem:[#allocation2 + $0x370] sm:$0xff] %v1112
        %1257 = vst [vmem:[#allocation2 + $0x378] sm:$0xff] %v1113
        %1258 = vst [vmem:[#allocation2 + $0x380] sm:$0xff] %v1114
        %1259 = vst [vmem:[#allocation2 + $0x388] sm:$0xff] %v1115
        %1260 = vst [vmem:[#allocation2 + $0x390] sm:$0xff] %v1116
        %1261 = vst [vmem:[#allocation2 + $0x398] sm:$0xff] %v1117
        %1262 = vst [vmem:[#allocation2 + $0x3a0] sm:$0xff] %v1118
        %1263 = vst [vmem:[#allocation2 + $0x3a8] sm:$0xff] %v1119
        %1264 = vst [vmem:[#allocation2 + $0x3b0] sm:$0xff] %v1120
        %1265 = vst [vmem:[#allocation2 + $0x3b8] sm:$0xff] %v1121
        %1266 = vst [vmem:[#allocation2 + $0x3c0] sm:$0xff] %v1122
        %1267 = vst [vmem:[#allocation2 + $0x3c8] sm:$0xff] %v1123
        %1268 = vst [vmem:[#allocation2 + $0x3d0] sm:$0xff] %v1124
        %1269 = vst [vmem:[#allocation2 + $0x3d8] sm:$0xff] %v1125
        %1270 = vst [vmem:[#allocation2 + $0x3e0] sm:$0xff] %v1126
        %1271 = vst [vmem:[#allocation2 + $0x3e8] sm:$0xff] %v1127
        %1272 = vst [vmem:[#allocation2 + $0x3f0] sm:$0xff] %v1128
        %1273 = vst [vmem:[#allocation2 + $0x3f8] sm:$0xff] %v1129
        %1274 = vst [vmem:[#allocation2 + $0x400] sm:$0xff] %v1130
        %1275 = vst [vmem:[#allocation2 + $0x408] sm:$0xff] %v1131
        %1276 = vst [vmem:[#allocation2 + $0x410] sm:$0xff] %v1132
        %1277 = vst [vmem:[#allocation2 + $0x418] sm:$0xff] %v1133
        %1278 = vst [vmem:[#allocation2 + $0x420] sm:$0xff] %v1134
        %1279 = vst [vmem:[#allocation2 + $0x428] sm:$0xff] %v1135
        %1280 = vst [vmem:[#allocation2 + $0x430] sm:$0xff] %v1136
        %1281 = vst [vmem:[#allocation2 + $0x438] sm:$0xff] %v1137
        %1282 = vst [vmem:[#allocation2 + $0x440] sm:$0xff] %v1138
        %1283 = vst [vmem:[#allocation2 + $0x448] sm:$0xff] %v1139
        %1284 = vst [vmem:[#allocation2 + $0x450] sm:$0xff] %v1140
        %1285 = vst [vmem:[#allocation2 + $0x458] sm:$0xff] %v1141
        %1286 = vst [vmem:[#allocation2 + $0x460] sm:$0xff] %v1142
        %1287 = vst [vmem:[#allocation2 + $0x468] sm:$0xff] %v1143
        %1288 = vst [vmem:[#allocation2 + $0x470] sm:$0xff] %v1144
        %1289 = vst [vmem:[#allocation2 + $0x478] sm:$0xff] %v1145
        loop: start=0, step=1, limit=9
        $region52: #{tpu_custom_call.1} parent=46 // loop_pre_header
          _
        $region53: #{tpu_custom_call.1} parent=46 // loop_header
          %s1291 = sphi 0, %s1295
          %p1292 = scmp.ge.s32.totalorder %s1291, 9
          %v1296 = vphi 0.0, %v3003
          %v1297 = vphi 0.0, %v3004
          %v1298 = vphi 0.0, %v3005
          %v1299 = vphi 0.0, %v3006
          %v1300 = vphi 0.0, %v3015
          %v1301 = vphi 0.0, %v3016
          %v1302 = vphi 0.0, %v3017
          %v1303 = vphi 0.0, %v3018
        $region54: #{tpu_custom_call.1} parent=46 // loop_header_branch
          %1294 = sbr.rel (%p1292) target = $region58
        $region55: #{tpu_custom_call.1} parent=46 // loop_body
          %s1304 = smul.u32 %s1291, 4
          %s1305 = smul.u32 %s1304, 4
          %s1306 = smul.addr %s1305, 8
          %s1307 = scalar_lea.vmem [#allocation2], %s1306
          %v1308 = vld [vmem:[%s1307] sm:$0xff]
          %v1309 = vld [vmem:[%s1307 + $0x8] sm:$0xff]
          %v1310 = vld [vmem:[%s1307 + $0x10] sm:$0xff]
          %v1311 = vld [vmem:[%s1307 + $0x18] sm:$0xff]
          %s1312 = sadd.s32 %s1304, 1
          %s1313 = smul.u32 %s1312, 4
          %s1314 = smul.addr %s1313, 8
          %s1315 = scalar_lea.vmem [#allocation2], %s1314
          %v1316 = vld [vmem:[%s1315] sm:$0xff]
          %v1317 = vld [vmem:[%s1315 + $0x8] sm:$0xff]
          %v1318 = vld [vmem:[%s1315 + $0x10] sm:$0xff]
          %v1319 = vld [vmem:[%s1315 + $0x18] sm:$0xff]
          %s1320 = sadd.s32 %s1304, 2
          %s1321 = smul.u32 %s1320, 4
          %s1322 = smul.addr %s1321, 8
          %s1323 = scalar_lea.vmem [#allocation2], %s1322
          %v1324 = vld [vmem:[%s1323] sm:$0xff]
          %v1325 = vld [vmem:[%s1323 + $0x8] sm:$0xff]
          %v1326 = vld [vmem:[%s1323 + $0x10] sm:$0xff]
          %v1327 = vld [vmem:[%s1323 + $0x18] sm:$0xff]
          %s1328 = sadd.s32 %s1304, 3
          %s1329 = smul.u32 %s1328, 4
          %s1330 = smul.addr %s1329, 8
          %s1331 = scalar_lea.vmem [#allocation2], %s1330
          %v1332 = vld [vmem:[%s1331] sm:$0xff]
          %v1333 = vld [vmem:[%s1331 + $0x8] sm:$0xff]
          %v1334 = vld [vmem:[%s1331 + $0x10] sm:$0xff]
          %v1335 = vld [vmem:[%s1331 + $0x18] sm:$0xff]
          %v1336 = vld [vmem:[#allocation2] sm:$0xff]
          %v1337 = vld [vmem:[#allocation2 + $0x8] sm:$0xff]
          %v1338 = vld [vmem:[#allocation2 + $0x10] sm:$0xff]
          %v1339 = vld [vmem:[#allocation2 + $0x18] sm:$0xff]
          %v1340 = vmax.f32 %v1336, %v1308
          %v1341 = vmax.f32 %v1337, %v1309
          %v1342 = vmax.f32 %v1338, %v1310
          %v1343 = vmax.f32 %v1339, %v1311
          %v1344 = vadd.f32 %v1340, 0.0
          %v1345 = vadd.f32 %v1341, 0.0
          %v1346 = vadd.f32 %v1342, 0.0
          %v1347 = vadd.f32 %v1343, 0.0
          %v1348 = vmax.f32 %v1336, %v1316
          %v1349 = vmax.f32 %v1337, %v1317
          %v1350 = vmax.f32 %v1338, %v1318
          %v1351 = vmax.f32 %v1339, %v1319
          %v1352 = vadd.f32 %v1348, 0.0
          %v1353 = vadd.f32 %v1349, 0.0
          %v1354 = vadd.f32 %v1350, 0.0
          %v1355 = vadd.f32 %v1351, 0.0
          %v1356 = vmax.f32 %v1336, %v1324
          %v1357 = vmax.f32 %v1337, %v1325
          %v1358 = vmax.f32 %v1338, %v1326
          %v1359 = vmax.f32 %v1339, %v1327
          %v1360 = vadd.f32 %v1356, 0.0
          %v1361 = vadd.f32 %v1357, 0.0
          %v1362 = vadd.f32 %v1358, 0.0
          %v1363 = vadd.f32 %v1359, 0.0
          %v1364 = vmax.f32 %v1336, %v1332
          %v1365 = vmax.f32 %v1337, %v1333
          %v1366 = vmax.f32 %v1338, %v1334
          %v1367 = vmax.f32 %v1339, %v1335
          %v1368 = vadd.f32 %v1364, 0.0
          %v1369 = vadd.f32 %v1365, 0.0
          %v1370 = vadd.f32 %v1366, 0.0
          %v1371 = vadd.f32 %v1367, 0.0
          %s1372 = scalar_lea.vmem [#allocation2], 32
          %v1373 = vld [vmem:[%s1372] sm:$0xff]
          %v1374 = vld [vmem:[%s1372 + $0x8] sm:$0xff]
          %v1375 = vld [vmem:[%s1372 + $0x10] sm:$0xff]
          %v1376 = vld [vmem:[%s1372 + $0x18] sm:$0xff]
          %v1377 = vmax.f32 %v1373, %v1308
          %v1378 = vmax.f32 %v1374, %v1309
          %v1379 = vmax.f32 %v1375, %v1310
          %v1380 = vmax.f32 %v1376, %v1311
          %v1381 = vadd.f32 %v1344, %v1377
          %v1382 = vadd.f32 %v1345, %v1378
          %v1383 = vadd.f32 %v1346, %v1379
          %v1384 = vadd.f32 %v1347, %v1380
          %v1385 = vmax.f32 %v1373, %v1316
          %v1386 = vmax.f32 %v1374, %v1317
          %v1387 = vmax.f32 %v1375, %v1318
          %v1388 = vmax.f32 %v1376, %v1319
          %v1389 = vadd.f32 %v1352, %v1385
          %v1390 = vadd.f32 %v1353, %v1386
          %v1391 = vadd.f32 %v1354, %v1387
          %v1392 = vadd.f32 %v1355, %v1388
          %v1393 = vmax.f32 %v1373, %v1324
          %v1394 = vmax.f32 %v1374, %v1325
          %v1395 = vmax.f32 %v1375, %v1326
          %v1396 = vmax.f32 %v1376, %v1327
          %v1397 = vadd.f32 %v1360, %v1393
          %v1398 = vadd.f32 %v1361, %v1394
          %v1399 = vadd.f32 %v1362, %v1395
          %v1400 = vadd.f32 %v1363, %v1396
          %v1401 = vmax.f32 %v1373, %v1332
          %v1402 = vmax.f32 %v1374, %v1333
          %v1403 = vmax.f32 %v1375, %v1334
          %v1404 = vmax.f32 %v1376, %v1335
          %v1405 = vadd.f32 %v1368, %v1401
          %v1406 = vadd.f32 %v1369, %v1402
          %v1407 = vadd.f32 %v1370, %v1403
          %v1408 = vadd.f32 %v1371, %v1404
          %s1409 = scalar_lea.vmem [#allocation2], 64
          %v1410 = vld [vmem:[%s1409] sm:$0xff]
          %v1411 = vld [vmem:[%s1409 + $0x8] sm:$0xff]
          %v1412 = vld [vmem:[%s1409 + $0x10] sm:$0xff]
          %v1413 = vld [vmem:[%s1409 + $0x18] sm:$0xff]
          %v1414 = vmax.f32 %v1410, %v1308
          %v1415 = vmax.f32 %v1411, %v1309
          %v1416 = vmax.f32 %v1412, %v1310
          %v1417 = vmax.f32 %v1413, %v1311
          %v1418 = vadd.f32 %v1381, %v1414
          %v1419 = vadd.f32 %v1382, %v1415
          %v1420 = vadd.f32 %v1383, %v1416
          %v1421 = vadd.f32 %v1384, %v1417
          %v1422 = vmax.f32 %v1410, %v1316
          %v1423 = vmax.f32 %v1411, %v1317
          %v1424 = vmax.f32 %v1412, %v1318
          %v1425 = vmax.f32 %v1413, %v1319
          %v1426 = vadd.f32 %v1389, %v1422
          %v1427 = vadd.f32 %v1390, %v1423
          %v1428 = vadd.f32 %v1391, %v1424
          %v1429 = vadd.f32 %v1392, %v1425
          %v1430 = vmax.f32 %v1410, %v1324
          %v1431 = vmax.f32 %v1411, %v1325
          %v1432 = vmax.f32 %v1412, %v1326
          %v1433 = vmax.f32 %v1413, %v1327
          %v1434 = vadd.f32 %v1397, %v1430
          %v1435 = vadd.f32 %v1398, %v1431
          %v1436 = vadd.f32 %v1399, %v1432
          %v1437 = vadd.f32 %v1400, %v1433
          %v1438 = vmax.f32 %v1410, %v1332
          %v1439 = vmax.f32 %v1411, %v1333
          %v1440 = vmax.f32 %v1412, %v1334
          %v1441 = vmax.f32 %v1413, %v1335
          %v1442 = vadd.f32 %v1405, %v1438
          %v1443 = vadd.f32 %v1406, %v1439
          %v1444 = vadd.f32 %v1407, %v1440
          %v1445 = vadd.f32 %v1408, %v1441
          %s1446 = scalar_lea.vmem [#allocation2], 96
          %v1447 = vld [vmem:[%s1446] sm:$0xff]
          %v1448 = vld [vmem:[%s1446 + $0x8] sm:$0xff]
          %v1449 = vld [vmem:[%s1446 + $0x10] sm:$0xff]
          %v1450 = vld [vmem:[%s1446 + $0x18] sm:$0xff]
          %v1451 = vmax.f32 %v1447, %v1308
          %v1452 = vmax.f32 %v1448, %v1309
          %v1453 = vmax.f32 %v1449, %v1310
          %v1454 = vmax.f32 %v1450, %v1311
          %v1455 = vadd.f32 %v1418, %v1451
          %v1456 = vadd.f32 %v1419, %v1452
          %v1457 = vadd.f32 %v1420, %v1453
          %v1458 = vadd.f32 %v1421, %v1454
          %v1459 = vmax.f32 %v1447, %v1316
          %v1460 = vmax.f32 %v1448, %v1317
          %v1461 = vmax.f32 %v1449, %v1318
          %v1462 = vmax.f32 %v1450, %v1319
          %v1463 = vadd.f32 %v1426, %v1459
          %v1464 = vadd.f32 %v1427, %v1460
          %v1465 = vadd.f32 %v1428, %v1461
          %v1466 = vadd.f32 %v1429, %v1462
          %v1467 = vmax.f32 %v1447, %v1324
          %v1468 = vmax.f32 %v1448, %v1325
          %v1469 = vmax.f32 %v1449, %v1326
          %v1470 = vmax.f32 %v1450, %v1327
          %v1471 = vadd.f32 %v1434, %v1467
          %v1472 = vadd.f32 %v1435, %v1468
          %v1473 = vadd.f32 %v1436, %v1469
          %v1474 = vadd.f32 %v1437, %v1470
          %v1475 = vmax.f32 %v1447, %v1332
          %v1476 = vmax.f32 %v1448, %v1333
          %v1477 = vmax.f32 %v1449, %v1334
          %v1478 = vmax.f32 %v1450, %v1335
          %v1479 = vadd.f32 %v1442, %v1475
          %v1480 = vadd.f32 %v1443, %v1476
          %v1481 = vadd.f32 %v1444, %v1477
          %v1482 = vadd.f32 %v1445, %v1478
          %s1483 = scalar_lea.vmem [#allocation2], 128
          %v1484 = vld [vmem:[%s1483] sm:$0xff]
          %v1485 = vld [vmem:[%s1483 + $0x8] sm:$0xff]
          %v1486 = vld [vmem:[%s1483 + $0x10] sm:$0xff]
          %v1487 = vld [vmem:[%s1483 + $0x18] sm:$0xff]
          %v1488 = vmax.f32 %v1484, %v1308
          %v1489 = vmax.f32 %v1485, %v1309
          %v1490 = vmax.f32 %v1486, %v1310
          %v1491 = vmax.f32 %v1487, %v1311
          %v1492 = vadd.f32 %v1455, %v1488
          %v1493 = vadd.f32 %v1456, %v1489
          %v1494 = vadd.f32 %v1457, %v1490
          %v1495 = vadd.f32 %v1458, %v1491
          %v1496 = vmax.f32 %v1484, %v1316
          %v1497 = vmax.f32 %v1485, %v1317
          %v1498 = vmax.f32 %v1486, %v1318
          %v1499 = vmax.f32 %v1487, %v1319
          %v1500 = vadd.f32 %v1463, %v1496
          %v1501 = vadd.f32 %v1464, %v1497
          %v1502 = vadd.f32 %v1465, %v1498
          %v1503 = vadd.f32 %v1466, %v1499
          %v1504 = vmax.f32 %v1484, %v1324
          %v1505 = vmax.f32 %v1485, %v1325
          %v1506 = vmax.f32 %v1486, %v1326
          %v1507 = vmax.f32 %v1487, %v1327
          %v1508 = vadd.f32 %v1471, %v1504
          %v1509 = vadd.f32 %v1472, %v1505
          %v1510 = vadd.f32 %v1473, %v1506
          %v1511 = vadd.f32 %v1474, %v1507
          %v1512 = vmax.f32 %v1484, %v1332
          %v1513 = vmax.f32 %v1485, %v1333
          %v1514 = vmax.f32 %v1486, %v1334
          %v1515 = vmax.f32 %v1487, %v1335
          %v1516 = vadd.f32 %v1479, %v1512
          %v1517 = vadd.f32 %v1480, %v1513
          %v1518 = vadd.f32 %v1481, %v1514
          %v1519 = vadd.f32 %v1482, %v1515
          %s1520 = scalar_lea.vmem [#allocation2], 160
          %v1521 = vld [vmem:[%s1520] sm:$0xff]
          %v1522 = vld [vmem:[%s1520 + $0x8] sm:$0xff]
          %v1523 = vld [vmem:[%s1520 + $0x10] sm:$0xff]
          %v1524 = vld [vmem:[%s1520 + $0x18] sm:$0xff]
          %v1525 = vmax.f32 %v1521, %v1308
          %v1526 = vmax.f32 %v1522, %v1309
          %v1527 = vmax.f32 %v1523, %v1310
          %v1528 = vmax.f32 %v1524, %v1311
          %v1529 = vadd.f32 %v1492, %v1525
          %v1530 = vadd.f32 %v1493, %v1526
          %v1531 = vadd.f32 %v1494, %v1527
          %v1532 = vadd.f32 %v1495, %v1528
          %v1533 = vmax.f32 %v1521, %v1316
          %v1534 = vmax.f32 %v1522, %v1317
          %v1535 = vmax.f32 %v1523, %v1318
          %v1536 = vmax.f32 %v1524, %v1319
          %v1537 = vadd.f32 %v1500, %v1533
          %v1538 = vadd.f32 %v1501, %v1534
          %v1539 = vadd.f32 %v1502, %v1535
          %v1540 = vadd.f32 %v1503, %v1536
          %v1541 = vmax.f32 %v1521, %v1324
          %v1542 = vmax.f32 %v1522, %v1325
          %v1543 = vmax.f32 %v1523, %v1326
          %v1544 = vmax.f32 %v1524, %v1327
          %v1545 = vadd.f32 %v1508, %v1541
          %v1546 = vadd.f32 %v1509, %v1542
          %v1547 = vadd.f32 %v1510, %v1543
          %v1548 = vadd.f32 %v1511, %v1544
          %v1549 = vmax.f32 %v1521, %v1332
          %v1550 = vmax.f32 %v1522, %v1333
          %v1551 = vmax.f32 %v1523, %v1334
          %v1552 = vmax.f32 %v1524, %v1335
          %v1553 = vadd.f32 %v1516, %v1549
          %v1554 = vadd.f32 %v1517, %v1550
          %v1555 = vadd.f32 %v1518, %v1551
          %v1556 = vadd.f32 %v1519, %v1552
          %s1557 = scalar_lea.vmem [#allocation2], 192
          %v1558 = vld [vmem:[%s1557] sm:$0xff]
          %v1559 = vld [vmem:[%s1557 + $0x8] sm:$0xff]
          %v1560 = vld [vmem:[%s1557 + $0x10] sm:$0xff]
          %v1561 = vld [vmem:[%s1557 + $0x18] sm:$0xff]
          %v1562 = vmax.f32 %v1558, %v1308
          %v1563 = vmax.f32 %v1559, %v1309
          %v1564 = vmax.f32 %v1560, %v1310
          %v1565 = vmax.f32 %v1561, %v1311
          %v1566 = vadd.f32 %v1529, %v1562
          %v1567 = vadd.f32 %v1530, %v1563
          %v1568 = vadd.f32 %v1531, %v1564
          %v1569 = vadd.f32 %v1532, %v1565
          %v1570 = vmax.f32 %v1558, %v1316
          %v1571 = vmax.f32 %v1559, %v1317
          %v1572 = vmax.f32 %v1560, %v1318
          %v1573 = vmax.f32 %v1561, %v1319
          %v1574 = vadd.f32 %v1537, %v1570
          %v1575 = vadd.f32 %v1538, %v1571
          %v1576 = vadd.f32 %v1539, %v1572
          %v1577 = vadd.f32 %v1540, %v1573
          %v1578 = vmax.f32 %v1558, %v1324
          %v1579 = vmax.f32 %v1559, %v1325
          %v1580 = vmax.f32 %v1560, %v1326
          %v1581 = vmax.f32 %v1561, %v1327
          %v1582 = vadd.f32 %v1545, %v1578
          %v1583 = vadd.f32 %v1546, %v1579
          %v1584 = vadd.f32 %v1547, %v1580
          %v1585 = vadd.f32 %v1548, %v1581
          %v1586 = vmax.f32 %v1558, %v1332
          %v1587 = vmax.f32 %v1559, %v1333
          %v1588 = vmax.f32 %v1560, %v1334
          %v1589 = vmax.f32 %v1561, %v1335
          %v1590 = vadd.f32 %v1553, %v1586
          %v1591 = vadd.f32 %v1554, %v1587
          %v1592 = vadd.f32 %v1555, %v1588
          %v1593 = vadd.f32 %v1556, %v1589
          %s1594 = scalar_lea.vmem [#allocation2], 224
          %v1595 = vld [vmem:[%s1594] sm:$0xff]
          %v1596 = vld [vmem:[%s1594 + $0x8] sm:$0xff]
          %v1597 = vld [vmem:[%s1594 + $0x10] sm:$0xff]
          %v1598 = vld [vmem:[%s1594 + $0x18] sm:$0xff]
          %v1599 = vmax.f32 %v1595, %v1308
          %v1600 = vmax.f32 %v1596, %v1309
          %v1601 = vmax.f32 %v1597, %v1310
          %v1602 = vmax.f32 %v1598, %v1311
          %v1603 = vadd.f32 %v1566, %v1599
          %v1604 = vadd.f32 %v1567, %v1600
          %v1605 = vadd.f32 %v1568, %v1601
          %v1606 = vadd.f32 %v1569, %v1602
          %v1607 = vmax.f32 %v1595, %v1316
          %v1608 = vmax.f32 %v1596, %v1317
          %v1609 = vmax.f32 %v1597, %v1318
          %v1610 = vmax.f32 %v1598, %v1319
          %v1611 = vadd.f32 %v1574, %v1607
          %v1612 = vadd.f32 %v1575, %v1608
          %v1613 = vadd.f32 %v1576, %v1609
          %v1614 = vadd.f32 %v1577, %v1610
          %v1615 = vmax.f32 %v1595, %v1324
          %v1616 = vmax.f32 %v1596, %v1325
          %v1617 = vmax.f32 %v1597, %v1326
          %v1618 = vmax.f32 %v1598, %v1327
          %v1619 = vadd.f32 %v1582, %v1615
          %v1620 = vadd.f32 %v1583, %v1616
          %v1621 = vadd.f32 %v1584, %v1617
          %v1622 = vadd.f32 %v1585, %v1618
          %v1623 = vmax.f32 %v1595, %v1332
          %v1624 = vmax.f32 %v1596, %v1333
          %v1625 = vmax.f32 %v1597, %v1334
          %v1626 = vmax.f32 %v1598, %v1335
          %v1627 = vadd.f32 %v1590, %v1623
          %v1628 = vadd.f32 %v1591, %v1624
          %v1629 = vadd.f32 %v1592, %v1625
          %v1630 = vadd.f32 %v1593, %v1626
          %s1631 = scalar_lea.vmem [#allocation2], 256
          %v1632 = vld [vmem:[%s1631] sm:$0xff]
          %v1633 = vld [vmem:[%s1631 + $0x8] sm:$0xff]
          %v1634 = vld [vmem:[%s1631 + $0x10] sm:$0xff]
          %v1635 = vld [vmem:[%s1631 + $0x18] sm:$0xff]
          %v1636 = vmax.f32 %v1632, %v1308
          %v1637 = vmax.f32 %v1633, %v1309
          %v1638 = vmax.f32 %v1634, %v1310
          %v1639 = vmax.f32 %v1635, %v1311
          %v1640 = vadd.f32 %v1603, %v1636
          %v1641 = vadd.f32 %v1604, %v1637
          %v1642 = vadd.f32 %v1605, %v1638
          %v1643 = vadd.f32 %v1606, %v1639
          %v1644 = vmax.f32 %v1632, %v1316
          %v1645 = vmax.f32 %v1633, %v1317
          %v1646 = vmax.f32 %v1634, %v1318
          %v1647 = vmax.f32 %v1635, %v1319
          %v1648 = vadd.f32 %v1611, %v1644
          %v1649 = vadd.f32 %v1612, %v1645
          %v1650 = vadd.f32 %v1613, %v1646
          %v1651 = vadd.f32 %v1614, %v1647
          %v1652 = vmax.f32 %v1632, %v1324
          %v1653 = vmax.f32 %v1633, %v1325
          %v1654 = vmax.f32 %v1634, %v1326
          %v1655 = vmax.f32 %v1635, %v1327
          %v1656 = vadd.f32 %v1619, %v1652
          %v1657 = vadd.f32 %v1620, %v1653
          %v1658 = vadd.f32 %v1621, %v1654
          %v1659 = vadd.f32 %v1622, %v1655
          %v1660 = vmax.f32 %v1632, %v1332
          %v1661 = vmax.f32 %v1633, %v1333
          %v1662 = vmax.f32 %v1634, %v1334
          %v1663 = vmax.f32 %v1635, %v1335
          %v1664 = vadd.f32 %v1627, %v1660
          %v1665 = vadd.f32 %v1628, %v1661
          %v1666 = vadd.f32 %v1629, %v1662
          %v1667 = vadd.f32 %v1630, %v1663
          %s1668 = scalar_lea.vmem [#allocation2], 288
          %v1669 = vld [vmem:[%s1668] sm:$0xff]
          %v1670 = vld [vmem:[%s1668 + $0x8] sm:$0xff]
          %v1671 = vld [vmem:[%s1668 + $0x10] sm:$0xff]
          %v1672 = vld [vmem:[%s1668 + $0x18] sm:$0xff]
          %v1673 = vmax.f32 %v1669, %v1308
          %v1674 = vmax.f32 %v1670, %v1309
          %v1675 = vmax.f32 %v1671, %v1310
          %v1676 = vmax.f32 %v1672, %v1311
          %v1677 = vadd.f32 %v1640, %v1673
          %v1678 = vadd.f32 %v1641, %v1674
          %v1679 = vadd.f32 %v1642, %v1675
          %v1680 = vadd.f32 %v1643, %v1676
          %v1681 = vmax.f32 %v1669, %v1316
          %v1682 = vmax.f32 %v1670, %v1317
          %v1683 = vmax.f32 %v1671, %v1318
          %v1684 = vmax.f32 %v1672, %v1319
          %v1685 = vadd.f32 %v1648, %v1681
          %v1686 = vadd.f32 %v1649, %v1682
          %v1687 = vadd.f32 %v1650, %v1683
          %v1688 = vadd.f32 %v1651, %v1684
          %v1689 = vmax.f32 %v1669, %v1324
          %v1690 = vmax.f32 %v1670, %v1325
          %v1691 = vmax.f32 %v1671, %v1326
          %v1692 = vmax.f32 %v1672, %v1327
          %v1693 = vadd.f32 %v1656, %v1689
          %v1694 = vadd.f32 %v1657, %v1690
          %v1695 = vadd.f32 %v1658, %v1691
          %v1696 = vadd.f32 %v1659, %v1692
          %v1697 = vmax.f32 %v1669, %v1332
          %v1698 = vmax.f32 %v1670, %v1333
          %v1699 = vmax.f32 %v1671, %v1334
          %v1700 = vmax.f32 %v1672, %v1335
          %v1701 = vadd.f32 %v1664, %v1697
          %v1702 = vadd.f32 %v1665, %v1698
          %v1703 = vadd.f32 %v1666, %v1699
          %v1704 = vadd.f32 %v1667, %v1700
          %s1705 = scalar_lea.vmem [#allocation2], 320
          %v1706 = vld [vmem:[%s1705] sm:$0xff]
          %v1707 = vld [vmem:[%s1705 + $0x8] sm:$0xff]
          %v1708 = vld [vmem:[%s1705 + $0x10] sm:$0xff]
          %v1709 = vld [vmem:[%s1705 + $0x18] sm:$0xff]
          %v1710 = vmax.f32 %v1706, %v1308
          %v1711 = vmax.f32 %v1707, %v1309
          %v1712 = vmax.f32 %v1708, %v1310
          %v1713 = vmax.f32 %v1709, %v1311
          %v1714 = vadd.f32 %v1677, %v1710
          %v1715 = vadd.f32 %v1678, %v1711
          %v1716 = vadd.f32 %v1679, %v1712
          %v1717 = vadd.f32 %v1680, %v1713
          %v1718 = vmax.f32 %v1706, %v1316
          %v1719 = vmax.f32 %v1707, %v1317
          %v1720 = vmax.f32 %v1708, %v1318
          %v1721 = vmax.f32 %v1709, %v1319
          %v1722 = vadd.f32 %v1685, %v1718
          %v1723 = vadd.f32 %v1686, %v1719
          %v1724 = vadd.f32 %v1687, %v1720
          %v1725 = vadd.f32 %v1688, %v1721
          %v1726 = vmax.f32 %v1706, %v1324
          %v1727 = vmax.f32 %v1707, %v1325
          %v1728 = vmax.f32 %v1708, %v1326
          %v1729 = vmax.f32 %v1709, %v1327
          %v1730 = vadd.f32 %v1693, %v1726
          %v1731 = vadd.f32 %v1694, %v1727
          %v1732 = vadd.f32 %v1695, %v1728
          %v1733 = vadd.f32 %v1696, %v1729
          %v1734 = vmax.f32 %v1706, %v1332
          %v1735 = vmax.f32 %v1707, %v1333
          %v1736 = vmax.f32 %v1708, %v1334
          %v1737 = vmax.f32 %v1709, %v1335
          %v1738 = vadd.f32 %v1701, %v1734
          %v1739 = vadd.f32 %v1702, %v1735
          %v1740 = vadd.f32 %v1703, %v1736
          %v1741 = vadd.f32 %v1704, %v1737
          %s1742 = scalar_lea.vmem [#allocation2], 352
          %v1743 = vld [vmem:[%s1742] sm:$0xff]
          %v1744 = vld [vmem:[%s1742 + $0x8] sm:$0xff]
          %v1745 = vld [vmem:[%s1742 + $0x10] sm:$0xff]
          %v1746 = vld [vmem:[%s1742 + $0x18] sm:$0xff]
          %v1747 = vmax.f32 %v1743, %v1308
          %v1748 = vmax.f32 %v1744, %v1309
          %v1749 = vmax.f32 %v1745, %v1310
          %v1750 = vmax.f32 %v1746, %v1311
          %v1751 = vadd.f32 %v1714, %v1747
          %v1752 = vadd.f32 %v1715, %v1748
          %v1753 = vadd.f32 %v1716, %v1749
          %v1754 = vadd.f32 %v1717, %v1750
          %v1755 = vmax.f32 %v1743, %v1316
          %v1756 = vmax.f32 %v1744, %v1317
          %v1757 = vmax.f32 %v1745, %v1318
          %v1758 = vmax.f32 %v1746, %v1319
          %v1759 = vadd.f32 %v1722, %v1755
          %v1760 = vadd.f32 %v1723, %v1756
          %v1761 = vadd.f32 %v1724, %v1757
          %v1762 = vadd.f32 %v1725, %v1758
          %v1763 = vmax.f32 %v1743, %v1324
          %v1764 = vmax.f32 %v1744, %v1325
          %v1765 = vmax.f32 %v1745, %v1326
          %v1766 = vmax.f32 %v1746, %v1327
          %v1767 = vadd.f32 %v1730, %v1763
          %v1768 = vadd.f32 %v1731, %v1764
          %v1769 = vadd.f32 %v1732, %v1765
          %v1770 = vadd.f32 %v1733, %v1766
          %v1771 = vmax.f32 %v1743, %v1332
          %v1772 = vmax.f32 %v1744, %v1333
          %v1773 = vmax.f32 %v1745, %v1334
          %v1774 = vmax.f32 %v1746, %v1335
          %v1775 = vadd.f32 %v1738, %v1771
          %v1776 = vadd.f32 %v1739, %v1772
          %v1777 = vadd.f32 %v1740, %v1773
          %v1778 = vadd.f32 %v1741, %v1774
          %s1779 = scalar_lea.vmem [#allocation2], 384
          %v1780 = vld [vmem:[%s1779] sm:$0xff]
          %v1781 = vld [vmem:[%s1779 + $0x8] sm:$0xff]
          %v1782 = vld [vmem:[%s1779 + $0x10] sm:$0xff]
          %v1783 = vld [vmem:[%s1779 + $0x18] sm:$0xff]
          %v1784 = vmax.f32 %v1780, %v1308
          %v1785 = vmax.f32 %v1781, %v1309
          %v1786 = vmax.f32 %v1782, %v1310
          %v1787 = vmax.f32 %v1783, %v1311
          %v1788 = vadd.f32 %v1751, %v1784
          %v1789 = vadd.f32 %v1752, %v1785
          %v1790 = vadd.f32 %v1753, %v1786
          %v1791 = vadd.f32 %v1754, %v1787
          %v1792 = vmax.f32 %v1780, %v1316
          %v1793 = vmax.f32 %v1781, %v1317
          %v1794 = vmax.f32 %v1782, %v1318
          %v1795 = vmax.f32 %v1783, %v1319
          %v1796 = vadd.f32 %v1759, %v1792
          %v1797 = vadd.f32 %v1760, %v1793
          %v1798 = vadd.f32 %v1761, %v1794
          %v1799 = vadd.f32 %v1762, %v1795
          %v1800 = vmax.f32 %v1780, %v1324
          %v1801 = vmax.f32 %v1781, %v1325
          %v1802 = vmax.f32 %v1782, %v1326
          %v1803 = vmax.f32 %v1783, %v1327
          %v1804 = vadd.f32 %v1767, %v1800
          %v1805 = vadd.f32 %v1768, %v1801
          %v1806 = vadd.f32 %v1769, %v1802
          %v1807 = vadd.f32 %v1770, %v1803
          %v1808 = vmax.f32 %v1780, %v1332
          %v1809 = vmax.f32 %v1781, %v1333
          %v1810 = vmax.f32 %v1782, %v1334
          %v1811 = vmax.f32 %v1783, %v1335
          %v1812 = vadd.f32 %v1775, %v1808
          %v1813 = vadd.f32 %v1776, %v1809
          %v1814 = vadd.f32 %v1777, %v1810
          %v1815 = vadd.f32 %v1778, %v1811
          %s1816 = scalar_lea.vmem [#allocation2], 416
          %v1817 = vld [vmem:[%s1816] sm:$0xff]
          %v1818 = vld [vmem:[%s1816 + $0x8] sm:$0xff]
          %v1819 = vld [vmem:[%s1816 + $0x10] sm:$0xff]
          %v1820 = vld [vmem:[%s1816 + $0x18] sm:$0xff]
          %v1821 = vmax.f32 %v1817, %v1308
          %v1822 = vmax.f32 %v1818, %v1309
          %v1823 = vmax.f32 %v1819, %v1310
          %v1824 = vmax.f32 %v1820, %v1311
          %v1825 = vadd.f32 %v1788, %v1821
          %v1826 = vadd.f32 %v1789, %v1822
          %v1827 = vadd.f32 %v1790, %v1823
          %v1828 = vadd.f32 %v1791, %v1824
          %v1829 = vmax.f32 %v1817, %v1316
          %v1830 = vmax.f32 %v1818, %v1317
          %v1831 = vmax.f32 %v1819, %v1318
          %v1832 = vmax.f32 %v1820, %v1319
          %v1833 = vadd.f32 %v1796, %v1829
          %v1834 = vadd.f32 %v1797, %v1830
          %v1835 = vadd.f32 %v1798, %v1831
          %v1836 = vadd.f32 %v1799, %v1832
          %v1837 = vmax.f32 %v1817, %v1324
          %v1838 = vmax.f32 %v1818, %v1325
          %v1839 = vmax.f32 %v1819, %v1326
          %v1840 = vmax.f32 %v1820, %v1327
          %v1841 = vadd.f32 %v1804, %v1837
          %v1842 = vadd.f32 %v1805, %v1838
          %v1843 = vadd.f32 %v1806, %v1839
          %v1844 = vadd.f32 %v1807, %v1840
          %v1845 = vmax.f32 %v1817, %v1332
          %v1846 = vmax.f32 %v1818, %v1333
          %v1847 = vmax.f32 %v1819, %v1334
          %v1848 = vmax.f32 %v1820, %v1335
          %v1849 = vadd.f32 %v1812, %v1845
          %v1850 = vadd.f32 %v1813, %v1846
          %v1851 = vadd.f32 %v1814, %v1847
          %v1852 = vadd.f32 %v1815, %v1848
          %s1853 = scalar_lea.vmem [#allocation2], 448
          %v1854 = vld [vmem:[%s1853] sm:$0xff]
          %v1855 = vld [vmem:[%s1853 + $0x8] sm:$0xff]
          %v1856 = vld [vmem:[%s1853 + $0x10] sm:$0xff]
          %v1857 = vld [vmem:[%s1853 + $0x18] sm:$0xff]
          %v1858 = vmax.f32 %v1854, %v1308
          %v1859 = vmax.f32 %v1855, %v1309
          %v1860 = vmax.f32 %v1856, %v1310
          %v1861 = vmax.f32 %v1857, %v1311
          %v1862 = vadd.f32 %v1825, %v1858
          %v1863 = vadd.f32 %v1826, %v1859
          %v1864 = vadd.f32 %v1827, %v1860
          %v1865 = vadd.f32 %v1828, %v1861
          %v1866 = vmax.f32 %v1854, %v1316
          %v1867 = vmax.f32 %v1855, %v1317
          %v1868 = vmax.f32 %v1856, %v1318
          %v1869 = vmax.f32 %v1857, %v1319
          %v1870 = vadd.f32 %v1833, %v1866
          %v1871 = vadd.f32 %v1834, %v1867
          %v1872 = vadd.f32 %v1835, %v1868
          %v1873 = vadd.f32 %v1836, %v1869
          %v1874 = vmax.f32 %v1854, %v1324
          %v1875 = vmax.f32 %v1855, %v1325
          %v1876 = vmax.f32 %v1856, %v1326
          %v1877 = vmax.f32 %v1857, %v1327
          %v1878 = vadd.f32 %v1841, %v1874
          %v1879 = vadd.f32 %v1842, %v1875
          %v1880 = vadd.f32 %v1843, %v1876
          %v1881 = vadd.f32 %v1844, %v1877
          %v1882 = vmax.f32 %v1854, %v1332
          %v1883 = vmax.f32 %v1855, %v1333
          %v1884 = vmax.f32 %v1856, %v1334
          %v1885 = vmax.f32 %v1857, %v1335
          %v1886 = vadd.f32 %v1849, %v1882
          %v1887 = vadd.f32 %v1850, %v1883
          %v1888 = vadd.f32 %v1851, %v1884
          %v1889 = vadd.f32 %v1852, %v1885
          %s1890 = scalar_lea.vmem [#allocation2], 480
          %v1891 = vld [vmem:[%s1890] sm:$0xff]
          %v1892 = vld [vmem:[%s1890 + $0x8] sm:$0xff]
          %v1893 = vld [vmem:[%s1890 + $0x10] sm:$0xff]
          %v1894 = vld [vmem:[%s1890 + $0x18] sm:$0xff]
          %v1895 = vmax.f32 %v1891, %v1308
          %v1896 = vmax.f32 %v1892, %v1309
          %v1897 = vmax.f32 %v1893, %v1310
          %v1898 = vmax.f32 %v1894, %v1311
          %v1899 = vadd.f32 %v1862, %v1895
          %v1900 = vadd.f32 %v1863, %v1896
          %v1901 = vadd.f32 %v1864, %v1897
          %v1902 = vadd.f32 %v1865, %v1898
          %v1903 = vmax.f32 %v1891, %v1316
          %v1904 = vmax.f32 %v1892, %v1317
          %v1905 = vmax.f32 %v1893, %v1318
          %v1906 = vmax.f32 %v1894, %v1319
          %v1907 = vadd.f32 %v1870, %v1903
          %v1908 = vadd.f32 %v1871, %v1904
          %v1909 = vadd.f32 %v1872, %v1905
          %v1910 = vadd.f32 %v1873, %v1906
          %v1911 = vmax.f32 %v1891, %v1324
          %v1912 = vmax.f32 %v1892, %v1325
          %v1913 = vmax.f32 %v1893, %v1326
          %v1914 = vmax.f32 %v1894, %v1327
          %v1915 = vadd.f32 %v1878, %v1911
          %v1916 = vadd.f32 %v1879, %v1912
          %v1917 = vadd.f32 %v1880, %v1913
          %v1918 = vadd.f32 %v1881, %v1914
          %v1919 = vmax.f32 %v1891, %v1332
          %v1920 = vmax.f32 %v1892, %v1333
          %v1921 = vmax.f32 %v1893, %v1334
          %v1922 = vmax.f32 %v1894, %v1335
          %v1923 = vadd.f32 %v1886, %v1919
          %v1924 = vadd.f32 %v1887, %v1920
          %v1925 = vadd.f32 %v1888, %v1921
          %v1926 = vadd.f32 %v1889, %v1922
          %s1927 = scalar_lea.vmem [#allocation2], 512
          %v1928 = vld [vmem:[%s1927] sm:$0xff]
          %v1929 = vld [vmem:[%s1927 + $0x8] sm:$0xff]
          %v1930 = vld [vmem:[%s1927 + $0x10] sm:$0xff]
          %v1931 = vld [vmem:[%s1927 + $0x18] sm:$0xff]
          %v1932 = vmax.f32 %v1928, %v1308
          %v1933 = vmax.f32 %v1929, %v1309
          %v1934 = vmax.f32 %v1930, %v1310
          %v1935 = vmax.f32 %v1931, %v1311
          %v1936 = vadd.f32 %v1899, %v1932
          %v1937 = vadd.f32 %v1900, %v1933
          %v1938 = vadd.f32 %v1901, %v1934
          %v1939 = vadd.f32 %v1902, %v1935
          %v1940 = vmax.f32 %v1928, %v1316
          %v1941 = vmax.f32 %v1929, %v1317
          %v1942 = vmax.f32 %v1930, %v1318
          %v1943 = vmax.f32 %v1931, %v1319
          %v1944 = vadd.f32 %v1907, %v1940
          %v1945 = vadd.f32 %v1908, %v1941
          %v1946 = vadd.f32 %v1909, %v1942
          %v1947 = vadd.f32 %v1910, %v1943
          %v1948 = vmax.f32 %v1928, %v1324
          %v1949 = vmax.f32 %v1929, %v1325
          %v1950 = vmax.f32 %v1930, %v1326
          %v1951 = vmax.f32 %v1931, %v1327
          %v1952 = vadd.f32 %v1915, %v1948
          %v1953 = vadd.f32 %v1916, %v1949
          %v1954 = vadd.f32 %v1917, %v1950
          %v1955 = vadd.f32 %v1918, %v1951
          %v1956 = vmax.f32 %v1928, %v1332
          %v1957 = vmax.f32 %v1929, %v1333
          %v1958 = vmax.f32 %v1930, %v1334
          %v1959 = vmax.f32 %v1931, %v1335
          %v1960 = vadd.f32 %v1923, %v1956
          %v1961 = vadd.f32 %v1924, %v1957
          %v1962 = vadd.f32 %v1925, %v1958
          %v1963 = vadd.f32 %v1926, %v1959
          %s1964 = scalar_lea.vmem [#allocation2], 544
          %v1965 = vld [vmem:[%s1964] sm:$0xff]
          %v1966 = vld [vmem:[%s1964 + $0x8] sm:$0xff]
          %v1967 = vld [vmem:[%s1964 + $0x10] sm:$0xff]
          %v1968 = vld [vmem:[%s1964 + $0x18] sm:$0xff]
          %v1969 = vmax.f32 %v1965, %v1308
          %v1970 = vmax.f32 %v1966, %v1309
          %v1971 = vmax.f32 %v1967, %v1310
          %v1972 = vmax.f32 %v1968, %v1311
          %v1973 = vadd.f32 %v1936, %v1969
          %v1974 = vadd.f32 %v1937, %v1970
          %v1975 = vadd.f32 %v1938, %v1971
          %v1976 = vadd.f32 %v1939, %v1972
          %v1977 = vmax.f32 %v1965, %v1316
          %v1978 = vmax.f32 %v1966, %v1317
          %v1979 = vmax.f32 %v1967, %v1318
          %v1980 = vmax.f32 %v1968, %v1319
          %v1981 = vadd.f32 %v1944, %v1977
          %v1982 = vadd.f32 %v1945, %v1978
          %v1983 = vadd.f32 %v1946, %v1979
          %v1984 = vadd.f32 %v1947, %v1980
          %v1985 = vmax.f32 %v1965, %v1324
          %v1986 = vmax.f32 %v1966, %v1325
          %v1987 = vmax.f32 %v1967, %v1326
          %v1988 = vmax.f32 %v1968, %v1327
          %v1989 = vadd.f32 %v1952, %v1985
          %v1990 = vadd.f32 %v1953, %v1986
          %v1991 = vadd.f32 %v1954, %v1987
          %v1992 = vadd.f32 %v1955, %v1988
          %v1993 = vmax.f32 %v1965, %v1332
          %v1994 = vmax.f32 %v1966, %v1333
          %v1995 = vmax.f32 %v1967, %v1334
          %v1996 = vmax.f32 %v1968, %v1335
          %v1997 = vadd.f32 %v1960, %v1993
          %v1998 = vadd.f32 %v1961, %v1994
          %v1999 = vadd.f32 %v1962, %v1995
          %v2000 = vadd.f32 %v1963, %v1996
          %s2001 = scalar_lea.vmem [#allocation2], 576
          %v2002 = vld [vmem:[%s2001] sm:$0xff]
          %v2003 = vld [vmem:[%s2001 + $0x8] sm:$0xff]
          %v2004 = vld [vmem:[%s2001 + $0x10] sm:$0xff]
          %v2005 = vld [vmem:[%s2001 + $0x18] sm:$0xff]
          %v2006 = vmax.f32 %v2002, %v1308
          %v2007 = vmax.f32 %v2003, %v1309
          %v2008 = vmax.f32 %v2004, %v1310
          %v2009 = vmax.f32 %v2005, %v1311
          %v2010 = vadd.f32 %v1973, %v2006
          %v2011 = vadd.f32 %v1974, %v2007
          %v2012 = vadd.f32 %v1975, %v2008
          %v2013 = vadd.f32 %v1976, %v2009
          %v2014 = vmax.f32 %v2002, %v1316
          %v2015 = vmax.f32 %v2003, %v1317
          %v2016 = vmax.f32 %v2004, %v1318
          %v2017 = vmax.f32 %v2005, %v1319
          %v2018 = vadd.f32 %v1981, %v2014
          %v2019 = vadd.f32 %v1982, %v2015
          %v2020 = vadd.f32 %v1983, %v2016
          %v2021 = vadd.f32 %v1984, %v2017
          %v2022 = vmax.f32 %v2002, %v1324
          %v2023 = vmax.f32 %v2003, %v1325
          %v2024 = vmax.f32 %v2004, %v1326
          %v2025 = vmax.f32 %v2005, %v1327
          %v2026 = vadd.f32 %v1989, %v2022
          %v2027 = vadd.f32 %v1990, %v2023
          %v2028 = vadd.f32 %v1991, %v2024
          %v2029 = vadd.f32 %v1992, %v2025
          %v2030 = vmax.f32 %v2002, %v1332
          %v2031 = vmax.f32 %v2003, %v1333
          %v2032 = vmax.f32 %v2004, %v1334
          %v2033 = vmax.f32 %v2005, %v1335
          %v2034 = vadd.f32 %v1997, %v2030
          %v2035 = vadd.f32 %v1998, %v2031
          %v2036 = vadd.f32 %v1999, %v2032
          %v2037 = vadd.f32 %v2000, %v2033
          %s2038 = scalar_lea.vmem [#allocation2], 608
          %v2039 = vld [vmem:[%s2038] sm:$0xff]
          %v2040 = vld [vmem:[%s2038 + $0x8] sm:$0xff]
          %v2041 = vld [vmem:[%s2038 + $0x10] sm:$0xff]
          %v2042 = vld [vmem:[%s2038 + $0x18] sm:$0xff]
          %v2043 = vmax.f32 %v2039, %v1308
          %v2044 = vmax.f32 %v2040, %v1309
          %v2045 = vmax.f32 %v2041, %v1310
          %v2046 = vmax.f32 %v2042, %v1311
          %v2047 = vadd.f32 %v2010, %v2043
          %v2048 = vadd.f32 %v2011, %v2044
          %v2049 = vadd.f32 %v2012, %v2045
          %v2050 = vadd.f32 %v2013, %v2046
          %v2051 = vmax.f32 %v2039, %v1316
          %v2052 = vmax.f32 %v2040, %v1317
          %v2053 = vmax.f32 %v2041, %v1318
          %v2054 = vmax.f32 %v2042, %v1319
          %v2055 = vadd.f32 %v2018, %v2051
          %v2056 = vadd.f32 %v2019, %v2052
          %v2057 = vadd.f32 %v2020, %v2053
          %v2058 = vadd.f32 %v2021, %v2054
          %v2059 = vmax.f32 %v2039, %v1324
          %v2060 = vmax.f32 %v2040, %v1325
          %v2061 = vmax.f32 %v2041, %v1326
          %v2062 = vmax.f32 %v2042, %v1327
          %v2063 = vadd.f32 %v2026, %v2059
          %v2064 = vadd.f32 %v2027, %v2060
          %v2065 = vadd.f32 %v2028, %v2061
          %v2066 = vadd.f32 %v2029, %v2062
          %v2067 = vmax.f32 %v2039, %v1332
          %v2068 = vmax.f32 %v2040, %v1333
          %v2069 = vmax.f32 %v2041, %v1334
          %v2070 = vmax.f32 %v2042, %v1335
          %v2071 = vadd.f32 %v2034, %v2067
          %v2072 = vadd.f32 %v2035, %v2068
          %v2073 = vadd.f32 %v2036, %v2069
          %v2074 = vadd.f32 %v2037, %v2070
          %s2075 = scalar_lea.vmem [#allocation2], 640
          %v2076 = vld [vmem:[%s2075] sm:$0xff]
          %v2077 = vld [vmem:[%s2075 + $0x8] sm:$0xff]
          %v2078 = vld [vmem:[%s2075 + $0x10] sm:$0xff]
          %v2079 = vld [vmem:[%s2075 + $0x18] sm:$0xff]
          %v2080 = vmax.f32 %v2076, %v1308
          %v2081 = vmax.f32 %v2077, %v1309
          %v2082 = vmax.f32 %v2078, %v1310
          %v2083 = vmax.f32 %v2079, %v1311
          %v2084 = vadd.f32 %v2047, %v2080
          %v2085 = vadd.f32 %v2048, %v2081
          %v2086 = vadd.f32 %v2049, %v2082
          %v2087 = vadd.f32 %v2050, %v2083
          %v2088 = vmax.f32 %v2076, %v1316
          %v2089 = vmax.f32 %v2077, %v1317
          %v2090 = vmax.f32 %v2078, %v1318
          %v2091 = vmax.f32 %v2079, %v1319
          %v2092 = vadd.f32 %v2055, %v2088
          %v2093 = vadd.f32 %v2056, %v2089
          %v2094 = vadd.f32 %v2057, %v2090
          %v2095 = vadd.f32 %v2058, %v2091
          %v2096 = vmax.f32 %v2076, %v1324
          %v2097 = vmax.f32 %v2077, %v1325
          %v2098 = vmax.f32 %v2078, %v1326
          %v2099 = vmax.f32 %v2079, %v1327
          %v2100 = vadd.f32 %v2063, %v2096
          %v2101 = vadd.f32 %v2064, %v2097
          %v2102 = vadd.f32 %v2065, %v2098
          %v2103 = vadd.f32 %v2066, %v2099
          %v2104 = vmax.f32 %v2076, %v1332
          %v2105 = vmax.f32 %v2077, %v1333
          %v2106 = vmax.f32 %v2078, %v1334
          %v2107 = vmax.f32 %v2079, %v1335
          %v2108 = vadd.f32 %v2071, %v2104
          %v2109 = vadd.f32 %v2072, %v2105
          %v2110 = vadd.f32 %v2073, %v2106
          %v2111 = vadd.f32 %v2074, %v2107
          %s2112 = scalar_lea.vmem [#allocation2], 672
          %v2113 = vld [vmem:[%s2112] sm:$0xff]
          %v2114 = vld [vmem:[%s2112 + $0x8] sm:$0xff]
          %v2115 = vld [vmem:[%s2112 + $0x10] sm:$0xff]
          %v2116 = vld [vmem:[%s2112 + $0x18] sm:$0xff]
          %v2117 = vmax.f32 %v2113, %v1308
          %v2118 = vmax.f32 %v2114, %v1309
          %v2119 = vmax.f32 %v2115, %v1310
          %v2120 = vmax.f32 %v2116, %v1311
          %v2121 = vadd.f32 %v2084, %v2117
          %v2122 = vadd.f32 %v2085, %v2118
          %v2123 = vadd.f32 %v2086, %v2119
          %v2124 = vadd.f32 %v2087, %v2120
          %v2125 = vmax.f32 %v2113, %v1316
          %v2126 = vmax.f32 %v2114, %v1317
          %v2127 = vmax.f32 %v2115, %v1318
          %v2128 = vmax.f32 %v2116, %v1319
          %v2129 = vadd.f32 %v2092, %v2125
          %v2130 = vadd.f32 %v2093, %v2126
          %v2131 = vadd.f32 %v2094, %v2127
          %v2132 = vadd.f32 %v2095, %v2128
          %v2133 = vmax.f32 %v2113, %v1324
          %v2134 = vmax.f32 %v2114, %v1325
          %v2135 = vmax.f32 %v2115, %v1326
          %v2136 = vmax.f32 %v2116, %v1327
          %v2137 = vadd.f32 %v2100, %v2133
          %v2138 = vadd.f32 %v2101, %v2134
          %v2139 = vadd.f32 %v2102, %v2135
          %v2140 = vadd.f32 %v2103, %v2136
          %v2141 = vmax.f32 %v2113, %v1332
          %v2142 = vmax.f32 %v2114, %v1333
          %v2143 = vmax.f32 %v2115, %v1334
          %v2144 = vmax.f32 %v2116, %v1335
          %v2145 = vadd.f32 %v2108, %v2141
          %v2146 = vadd.f32 %v2109, %v2142
          %v2147 = vadd.f32 %v2110, %v2143
          %v2148 = vadd.f32 %v2111, %v2144
          %s2149 = scalar_lea.vmem [#allocation2], 704
          %v2150 = vld [vmem:[%s2149] sm:$0xff]
          %v2151 = vld [vmem:[%s2149 + $0x8] sm:$0xff]
          %v2152 = vld [vmem:[%s2149 + $0x10] sm:$0xff]
          %v2153 = vld [vmem:[%s2149 + $0x18] sm:$0xff]
          %v2154 = vmax.f32 %v2150, %v1308
          %v2155 = vmax.f32 %v2151, %v1309
          %v2156 = vmax.f32 %v2152, %v1310
          %v2157 = vmax.f32 %v2153, %v1311
          %v2158 = vadd.f32 %v2121, %v2154
          %v2159 = vadd.f32 %v2122, %v2155
          %v2160 = vadd.f32 %v2123, %v2156
          %v2161 = vadd.f32 %v2124, %v2157
          %v2162 = vmax.f32 %v2150, %v1316
          %v2163 = vmax.f32 %v2151, %v1317
          %v2164 = vmax.f32 %v2152, %v1318
          %v2165 = vmax.f32 %v2153, %v1319
          %v2166 = vadd.f32 %v2129, %v2162
          %v2167 = vadd.f32 %v2130, %v2163
          %v2168 = vadd.f32 %v2131, %v2164
          %v2169 = vadd.f32 %v2132, %v2165
          %v2170 = vmax.f32 %v2150, %v1324
          %v2171 = vmax.f32 %v2151, %v1325
          %v2172 = vmax.f32 %v2152, %v1326
          %v2173 = vmax.f32 %v2153, %v1327
          %v2174 = vadd.f32 %v2137, %v2170
          %v2175 = vadd.f32 %v2138, %v2171
          %v2176 = vadd.f32 %v2139, %v2172
          %v2177 = vadd.f32 %v2140, %v2173
          %v2178 = vmax.f32 %v2150, %v1332
          %v2179 = vmax.f32 %v2151, %v1333
          %v2180 = vmax.f32 %v2152, %v1334
          %v2181 = vmax.f32 %v2153, %v1335
          %v2182 = vadd.f32 %v2145, %v2178
          %v2183 = vadd.f32 %v2146, %v2179
          %v2184 = vadd.f32 %v2147, %v2180
          %v2185 = vadd.f32 %v2148, %v2181
          %s2186 = scalar_lea.vmem [#allocation2], 736
          %v2187 = vld [vmem:[%s2186] sm:$0xff]
          %v2188 = vld [vmem:[%s2186 + $0x8] sm:$0xff]
          %v2189 = vld [vmem:[%s2186 + $0x10] sm:$0xff]
          %v2190 = vld [vmem:[%s2186 + $0x18] sm:$0xff]
          %v2191 = vmax.f32 %v2187, %v1308
          %v2192 = vmax.f32 %v2188, %v1309
          %v2193 = vmax.f32 %v2189, %v1310
          %v2194 = vmax.f32 %v2190, %v1311
          %v2195 = vadd.f32 %v2158, %v2191
          %v2196 = vadd.f32 %v2159, %v2192
          %v2197 = vadd.f32 %v2160, %v2193
          %v2198 = vadd.f32 %v2161, %v2194
          %v2199 = vmax.f32 %v2187, %v1316
          %v2200 = vmax.f32 %v2188, %v1317
          %v2201 = vmax.f32 %v2189, %v1318
          %v2202 = vmax.f32 %v2190, %v1319
          %v2203 = vadd.f32 %v2166, %v2199
          %v2204 = vadd.f32 %v2167, %v2200
          %v2205 = vadd.f32 %v2168, %v2201
          %v2206 = vadd.f32 %v2169, %v2202
          %v2207 = vmax.f32 %v2187, %v1324
          %v2208 = vmax.f32 %v2188, %v1325
          %v2209 = vmax.f32 %v2189, %v1326
          %v2210 = vmax.f32 %v2190, %v1327
          %v2211 = vadd.f32 %v2174, %v2207
          %v2212 = vadd.f32 %v2175, %v2208
          %v2213 = vadd.f32 %v2176, %v2209
          %v2214 = vadd.f32 %v2177, %v2210
          %v2215 = vmax.f32 %v2187, %v1332
          %v2216 = vmax.f32 %v2188, %v1333
          %v2217 = vmax.f32 %v2189, %v1334
          %v2218 = vmax.f32 %v2190, %v1335
          %v2219 = vadd.f32 %v2182, %v2215
          %v2220 = vadd.f32 %v2183, %v2216
          %v2221 = vadd.f32 %v2184, %v2217
          %v2222 = vadd.f32 %v2185, %v2218
          %s2223 = scalar_lea.vmem [#allocation2], 768
          %v2224 = vld [vmem:[%s2223] sm:$0xff]
          %v2225 = vld [vmem:[%s2223 + $0x8] sm:$0xff]
          %v2226 = vld [vmem:[%s2223 + $0x10] sm:$0xff]
          %v2227 = vld [vmem:[%s2223 + $0x18] sm:$0xff]
          %v2228 = vmax.f32 %v2224, %v1308
          %v2229 = vmax.f32 %v2225, %v1309
          %v2230 = vmax.f32 %v2226, %v1310
          %v2231 = vmax.f32 %v2227, %v1311
          %v2232 = vadd.f32 %v2195, %v2228
          %v2233 = vadd.f32 %v2196, %v2229
          %v2234 = vadd.f32 %v2197, %v2230
          %v2235 = vadd.f32 %v2198, %v2231
          %v2236 = vmax.f32 %v2224, %v1316
          %v2237 = vmax.f32 %v2225, %v1317
          %v2238 = vmax.f32 %v2226, %v1318
          %v2239 = vmax.f32 %v2227, %v1319
          %v2240 = vadd.f32 %v2203, %v2236
          %v2241 = vadd.f32 %v2204, %v2237
          %v2242 = vadd.f32 %v2205, %v2238
          %v2243 = vadd.f32 %v2206, %v2239
          %v2244 = vmax.f32 %v2224, %v1324
          %v2245 = vmax.f32 %v2225, %v1325
          %v2246 = vmax.f32 %v2226, %v1326
          %v2247 = vmax.f32 %v2227, %v1327
          %v2248 = vadd.f32 %v2211, %v2244
          %v2249 = vadd.f32 %v2212, %v2245
          %v2250 = vadd.f32 %v2213, %v2246
          %v2251 = vadd.f32 %v2214, %v2247
          %v2252 = vmax.f32 %v2224, %v1332
          %v2253 = vmax.f32 %v2225, %v1333
          %v2254 = vmax.f32 %v2226, %v1334
          %v2255 = vmax.f32 %v2227, %v1335
          %v2256 = vadd.f32 %v2219, %v2252
          %v2257 = vadd.f32 %v2220, %v2253
          %v2258 = vadd.f32 %v2221, %v2254
          %v2259 = vadd.f32 %v2222, %v2255
          %s2260 = scalar_lea.vmem [#allocation2], 800
          %v2261 = vld [vmem:[%s2260] sm:$0xff]
          %v2262 = vld [vmem:[%s2260 + $0x8] sm:$0xff]
          %v2263 = vld [vmem:[%s2260 + $0x10] sm:$0xff]
          %v2264 = vld [vmem:[%s2260 + $0x18] sm:$0xff]
          %v2265 = vmax.f32 %v2261, %v1308
          %v2266 = vmax.f32 %v2262, %v1309
          %v2267 = vmax.f32 %v2263, %v1310
          %v2268 = vmax.f32 %v2264, %v1311
          %v2269 = vadd.f32 %v2232, %v2265
          %v2270 = vadd.f32 %v2233, %v2266
          %v2271 = vadd.f32 %v2234, %v2267
          %v2272 = vadd.f32 %v2235, %v2268
          %v2273 = vmax.f32 %v2261, %v1316
          %v2274 = vmax.f32 %v2262, %v1317
          %v2275 = vmax.f32 %v2263, %v1318
          %v2276 = vmax.f32 %v2264, %v1319
          %v2277 = vadd.f32 %v2240, %v2273
          %v2278 = vadd.f32 %v2241, %v2274
          %v2279 = vadd.f32 %v2242, %v2275
          %v2280 = vadd.f32 %v2243, %v2276
          %v2281 = vmax.f32 %v2261, %v1324
          %v2282 = vmax.f32 %v2262, %v1325
          %v2283 = vmax.f32 %v2263, %v1326
          %v2284 = vmax.f32 %v2264, %v1327
          %v2285 = vadd.f32 %v2248, %v2281
          %v2286 = vadd.f32 %v2249, %v2282
          %v2287 = vadd.f32 %v2250, %v2283
          %v2288 = vadd.f32 %v2251, %v2284
          %v2289 = vmax.f32 %v2261, %v1332
          %v2290 = vmax.f32 %v2262, %v1333
          %v2291 = vmax.f32 %v2263, %v1334
          %v2292 = vmax.f32 %v2264, %v1335
          %v2293 = vadd.f32 %v2256, %v2289
          %v2294 = vadd.f32 %v2257, %v2290
          %v2295 = vadd.f32 %v2258, %v2291
          %v2296 = vadd.f32 %v2259, %v2292
          %s2297 = scalar_lea.vmem [#allocation2], 832
          %v2298 = vld [vmem:[%s2297] sm:$0xff]
          %v2299 = vld [vmem:[%s2297 + $0x8] sm:$0xff]
          %v2300 = vld [vmem:[%s2297 + $0x10] sm:$0xff]
          %v2301 = vld [vmem:[%s2297 + $0x18] sm:$0xff]
          %v2302 = vmax.f32 %v2298, %v1308
          %v2303 = vmax.f32 %v2299, %v1309
          %v2304 = vmax.f32 %v2300, %v1310
          %v2305 = vmax.f32 %v2301, %v1311
          %v2306 = vadd.f32 %v2269, %v2302
          %v2307 = vadd.f32 %v2270, %v2303
          %v2308 = vadd.f32 %v2271, %v2304
          %v2309 = vadd.f32 %v2272, %v2305
          %v2310 = vmax.f32 %v2298, %v1316
          %v2311 = vmax.f32 %v2299, %v1317
          %v2312 = vmax.f32 %v2300, %v1318
          %v2313 = vmax.f32 %v2301, %v1319
          %v2314 = vadd.f32 %v2277, %v2310
          %v2315 = vadd.f32 %v2278, %v2311
          %v2316 = vadd.f32 %v2279, %v2312
          %v2317 = vadd.f32 %v2280, %v2313
          %v2318 = vmax.f32 %v2298, %v1324
          %v2319 = vmax.f32 %v2299, %v1325
          %v2320 = vmax.f32 %v2300, %v1326
          %v2321 = vmax.f32 %v2301, %v1327
          %v2322 = vadd.f32 %v2285, %v2318
          %v2323 = vadd.f32 %v2286, %v2319
          %v2324 = vadd.f32 %v2287, %v2320
          %v2325 = vadd.f32 %v2288, %v2321
          %v2326 = vmax.f32 %v2298, %v1332
          %v2327 = vmax.f32 %v2299, %v1333
          %v2328 = vmax.f32 %v2300, %v1334
          %v2329 = vmax.f32 %v2301, %v1335
          %v2330 = vadd.f32 %v2293, %v2326
          %v2331 = vadd.f32 %v2294, %v2327
          %v2332 = vadd.f32 %v2295, %v2328
          %v2333 = vadd.f32 %v2296, %v2329
          %s2334 = scalar_lea.vmem [#allocation2], 864
          %v2335 = vld [vmem:[%s2334] sm:$0xff]
          %v2336 = vld [vmem:[%s2334 + $0x8] sm:$0xff]
          %v2337 = vld [vmem:[%s2334 + $0x10] sm:$0xff]
          %v2338 = vld [vmem:[%s2334 + $0x18] sm:$0xff]
          %v2339 = vmax.f32 %v2335, %v1308
          %v2340 = vmax.f32 %v2336, %v1309
          %v2341 = vmax.f32 %v2337, %v1310
          %v2342 = vmax.f32 %v2338, %v1311
          %v2343 = vadd.f32 %v2306, %v2339
          %v2344 = vadd.f32 %v2307, %v2340
          %v2345 = vadd.f32 %v2308, %v2341
          %v2346 = vadd.f32 %v2309, %v2342
          %v2347 = vmax.f32 %v2335, %v1316
          %v2348 = vmax.f32 %v2336, %v1317
          %v2349 = vmax.f32 %v2337, %v1318
          %v2350 = vmax.f32 %v2338, %v1319
          %v2351 = vadd.f32 %v2314, %v2347
          %v2352 = vadd.f32 %v2315, %v2348
          %v2353 = vadd.f32 %v2316, %v2349
          %v2354 = vadd.f32 %v2317, %v2350
          %v2355 = vmax.f32 %v2335, %v1324
          %v2356 = vmax.f32 %v2336, %v1325
          %v2357 = vmax.f32 %v2337, %v1326
          %v2358 = vmax.f32 %v2338, %v1327
          %v2359 = vadd.f32 %v2322, %v2355
          %v2360 = vadd.f32 %v2323, %v2356
          %v2361 = vadd.f32 %v2324, %v2357
          %v2362 = vadd.f32 %v2325, %v2358
          %v2363 = vmax.f32 %v2335, %v1332
          %v2364 = vmax.f32 %v2336, %v1333
          %v2365 = vmax.f32 %v2337, %v1334
          %v2366 = vmax.f32 %v2338, %v1335
          %v2367 = vadd.f32 %v2330, %v2363
          %v2368 = vadd.f32 %v2331, %v2364
          %v2369 = vadd.f32 %v2332, %v2365
          %v2370 = vadd.f32 %v2333, %v2366
          %s2371 = scalar_lea.vmem [#allocation2], 896
          %v2372 = vld [vmem:[%s2371] sm:$0xff]
          %v2373 = vld [vmem:[%s2371 + $0x8] sm:$0xff]
          %v2374 = vld [vmem:[%s2371 + $0x10] sm:$0xff]
          %v2375 = vld [vmem:[%s2371 + $0x18] sm:$0xff]
          %v2376 = vmax.f32 %v2372, %v1308
          %v2377 = vmax.f32 %v2373, %v1309
          %v2378 = vmax.f32 %v2374, %v1310
          %v2379 = vmax.f32 %v2375, %v1311
          %v2380 = vadd.f32 %v2343, %v2376
          %v2381 = vadd.f32 %v2344, %v2377
          %v2382 = vadd.f32 %v2345, %v2378
          %v2383 = vadd.f32 %v2346, %v2379
          %v2384 = vmax.f32 %v2372, %v1316
          %v2385 = vmax.f32 %v2373, %v1317
          %v2386 = vmax.f32 %v2374, %v1318
          %v2387 = vmax.f32 %v2375, %v1319
          %v2388 = vadd.f32 %v2351, %v2384
          %v2389 = vadd.f32 %v2352, %v2385
          %v2390 = vadd.f32 %v2353, %v2386
          %v2391 = vadd.f32 %v2354, %v2387
          %v2392 = vmax.f32 %v2372, %v1324
          %v2393 = vmax.f32 %v2373, %v1325
          %v2394 = vmax.f32 %v2374, %v1326
          %v2395 = vmax.f32 %v2375, %v1327
          %v2396 = vadd.f32 %v2359, %v2392
          %v2397 = vadd.f32 %v2360, %v2393
          %v2398 = vadd.f32 %v2361, %v2394
          %v2399 = vadd.f32 %v2362, %v2395
          %v2400 = vmax.f32 %v2372, %v1332
          %v2401 = vmax.f32 %v2373, %v1333
          %v2402 = vmax.f32 %v2374, %v1334
          %v2403 = vmax.f32 %v2375, %v1335
          %v2404 = vadd.f32 %v2367, %v2400
          %v2405 = vadd.f32 %v2368, %v2401
          %v2406 = vadd.f32 %v2369, %v2402
          %v2407 = vadd.f32 %v2370, %v2403
          %s2408 = scalar_lea.vmem [#allocation2], 928
          %v2409 = vld [vmem:[%s2408] sm:$0xff]
          %v2410 = vld [vmem:[%s2408 + $0x8] sm:$0xff]
          %v2411 = vld [vmem:[%s2408 + $0x10] sm:$0xff]
          %v2412 = vld [vmem:[%s2408 + $0x18] sm:$0xff]
          %v2413 = vmax.f32 %v2409, %v1308
          %v2414 = vmax.f32 %v2410, %v1309
          %v2415 = vmax.f32 %v2411, %v1310
          %v2416 = vmax.f32 %v2412, %v1311
          %v2417 = vadd.f32 %v2380, %v2413
          %v2418 = vadd.f32 %v2381, %v2414
          %v2419 = vadd.f32 %v2382, %v2415
          %v2420 = vadd.f32 %v2383, %v2416
          %v2421 = vmax.f32 %v2409, %v1316
          %v2422 = vmax.f32 %v2410, %v1317
          %v2423 = vmax.f32 %v2411, %v1318
          %v2424 = vmax.f32 %v2412, %v1319
          %v2425 = vadd.f32 %v2388, %v2421
          %v2426 = vadd.f32 %v2389, %v2422
          %v2427 = vadd.f32 %v2390, %v2423
          %v2428 = vadd.f32 %v2391, %v2424
          %v2429 = vmax.f32 %v2409, %v1324
          %v2430 = vmax.f32 %v2410, %v1325
          %v2431 = vmax.f32 %v2411, %v1326
          %v2432 = vmax.f32 %v2412, %v1327
          %v2433 = vadd.f32 %v2396, %v2429
          %v2434 = vadd.f32 %v2397, %v2430
          %v2435 = vadd.f32 %v2398, %v2431
          %v2436 = vadd.f32 %v2399, %v2432
          %v2437 = vmax.f32 %v2409, %v1332
          %v2438 = vmax.f32 %v2410, %v1333
          %v2439 = vmax.f32 %v2411, %v1334
          %v2440 = vmax.f32 %v2412, %v1335
          %v2441 = vadd.f32 %v2404, %v2437
          %v2442 = vadd.f32 %v2405, %v2438
          %v2443 = vadd.f32 %v2406, %v2439
          %v2444 = vadd.f32 %v2407, %v2440
          %s2445 = scalar_lea.vmem [#allocation2], 960
          %v2446 = vld [vmem:[%s2445] sm:$0xff]
          %v2447 = vld [vmem:[%s2445 + $0x8] sm:$0xff]
          %v2448 = vld [vmem:[%s2445 + $0x10] sm:$0xff]
          %v2449 = vld [vmem:[%s2445 + $0x18] sm:$0xff]
          %v2450 = vmax.f32 %v2446, %v1308
          %v2451 = vmax.f32 %v2447, %v1309
          %v2452 = vmax.f32 %v2448, %v1310
          %v2453 = vmax.f32 %v2449, %v1311
          %v2454 = vadd.f32 %v2417, %v2450
          %v2455 = vadd.f32 %v2418, %v2451
          %v2456 = vadd.f32 %v2419, %v2452
          %v2457 = vadd.f32 %v2420, %v2453
          %v2458 = vmax.f32 %v2446, %v1316
          %v2459 = vmax.f32 %v2447, %v1317
          %v2460 = vmax.f32 %v2448, %v1318
          %v2461 = vmax.f32 %v2449, %v1319
          %v2462 = vadd.f32 %v2425, %v2458
          %v2463 = vadd.f32 %v2426, %v2459
          %v2464 = vadd.f32 %v2427, %v2460
          %v2465 = vadd.f32 %v2428, %v2461
          %v2466 = vmax.f32 %v2446, %v1324
          %v2467 = vmax.f32 %v2447, %v1325
          %v2468 = vmax.f32 %v2448, %v1326
          %v2469 = vmax.f32 %v2449, %v1327
          %v2470 = vadd.f32 %v2433, %v2466
          %v2471 = vadd.f32 %v2434, %v2467
          %v2472 = vadd.f32 %v2435, %v2468
          %v2473 = vadd.f32 %v2436, %v2469
          %v2474 = vmax.f32 %v2446, %v1332
          %v2475 = vmax.f32 %v2447, %v1333
          %v2476 = vmax.f32 %v2448, %v1334
          %v2477 = vmax.f32 %v2449, %v1335
          %v2478 = vadd.f32 %v2441, %v2474
          %v2479 = vadd.f32 %v2442, %v2475
          %v2480 = vadd.f32 %v2443, %v2476
          %v2481 = vadd.f32 %v2444, %v2477
          %s2482 = scalar_lea.vmem [#allocation2], 992
          %v2483 = vld [vmem:[%s2482] sm:$0xff]
          %v2484 = vld [vmem:[%s2482 + $0x8] sm:$0xff]
          %v2485 = vld [vmem:[%s2482 + $0x10] sm:$0xff]
          %v2486 = vld [vmem:[%s2482 + $0x18] sm:$0xff]
          %v2487 = vmax.f32 %v2483, %v1308
          %v2488 = vmax.f32 %v2484, %v1309
          %v2489 = vmax.f32 %v2485, %v1310
          %v2490 = vmax.f32 %v2486, %v1311
          %v2491 = vadd.f32 %v2454, %v2487
          %v2492 = vadd.f32 %v2455, %v2488
          %v2493 = vadd.f32 %v2456, %v2489
          %v2494 = vadd.f32 %v2457, %v2490
          %v2495 = vmax.f32 %v2483, %v1316
          %v2496 = vmax.f32 %v2484, %v1317
          %v2497 = vmax.f32 %v2485, %v1318
          %v2498 = vmax.f32 %v2486, %v1319
          %v2499 = vadd.f32 %v2462, %v2495
          %v2500 = vadd.f32 %v2463, %v2496
          %v2501 = vadd.f32 %v2464, %v2497
          %v2502 = vadd.f32 %v2465, %v2498
          %v2503 = vmax.f32 %v2483, %v1324
          %v2504 = vmax.f32 %v2484, %v1325
          %v2505 = vmax.f32 %v2485, %v1326
          %v2506 = vmax.f32 %v2486, %v1327
          %v2507 = vadd.f32 %v2470, %v2503
          %v2508 = vadd.f32 %v2471, %v2504
          %v2509 = vadd.f32 %v2472, %v2505
          %v2510 = vadd.f32 %v2473, %v2506
          %v2511 = vmax.f32 %v2483, %v1332
          %v2512 = vmax.f32 %v2484, %v1333
          %v2513 = vmax.f32 %v2485, %v1334
          %v2514 = vmax.f32 %v2486, %v1335
          %v2515 = vadd.f32 %v2478, %v2511
          %v2516 = vadd.f32 %v2479, %v2512
          %v2517 = vadd.f32 %v2480, %v2513
          %v2518 = vadd.f32 %v2481, %v2514
          %s2519 = scalar_lea.vmem [#allocation2], 1024
          %v2520 = vld [vmem:[%s2519] sm:$0xff]
          %v2521 = vld [vmem:[%s2519 + $0x8] sm:$0xff]
          %v2522 = vld [vmem:[%s2519 + $0x10] sm:$0xff]
          %v2523 = vld [vmem:[%s2519 + $0x18] sm:$0xff]
          %v2524 = vmax.f32 %v2520, %v1308
          %v2525 = vmax.f32 %v2521, %v1309
          %v2526 = vmax.f32 %v2522, %v1310
          %v2527 = vmax.f32 %v2523, %v1311
          %v2528 = vadd.f32 %v2491, %v2524
          %v2529 = vadd.f32 %v2492, %v2525
          %v2530 = vadd.f32 %v2493, %v2526
          %v2531 = vadd.f32 %v2494, %v2527
          %v2532 = vmax.f32 %v2520, %v1316
          %v2533 = vmax.f32 %v2521, %v1317
          %v2534 = vmax.f32 %v2522, %v1318
          %v2535 = vmax.f32 %v2523, %v1319
          %v2536 = vadd.f32 %v2499, %v2532
          %v2537 = vadd.f32 %v2500, %v2533
          %v2538 = vadd.f32 %v2501, %v2534
          %v2539 = vadd.f32 %v2502, %v2535
          %v2540 = vmax.f32 %v2520, %v1324
          %v2541 = vmax.f32 %v2521, %v1325
          %v2542 = vmax.f32 %v2522, %v1326
          %v2543 = vmax.f32 %v2523, %v1327
          %v2544 = vadd.f32 %v2507, %v2540
          %v2545 = vadd.f32 %v2508, %v2541
          %v2546 = vadd.f32 %v2509, %v2542
          %v2547 = vadd.f32 %v2510, %v2543
          %v2548 = vmax.f32 %v2520, %v1332
          %v2549 = vmax.f32 %v2521, %v1333
          %v2550 = vmax.f32 %v2522, %v1334
          %v2551 = vmax.f32 %v2523, %v1335
          %v2552 = vadd.f32 %v2515, %v2548
          %v2553 = vadd.f32 %v2516, %v2549
          %v2554 = vadd.f32 %v2517, %v2550
          %v2555 = vadd.f32 %v2518, %v2551
          %s2556 = scalar_lea.vmem [#allocation2], 1056
          %v2557 = vld [vmem:[%s2556] sm:$0xff]
          %v2558 = vld [vmem:[%s2556 + $0x8] sm:$0xff]
          %v2559 = vld [vmem:[%s2556 + $0x10] sm:$0xff]
          %v2560 = vld [vmem:[%s2556 + $0x18] sm:$0xff]
          %v2561 = vmax.f32 %v2557, %v1308
          %v2562 = vmax.f32 %v2558, %v1309
          %v2563 = vmax.f32 %v2559, %v1310
          %v2564 = vmax.f32 %v2560, %v1311
          %v2565 = vadd.f32 %v2528, %v2561
          %v2566 = vadd.f32 %v2529, %v2562
          %v2567 = vadd.f32 %v2530, %v2563
          %v2568 = vadd.f32 %v2531, %v2564
          %v2569 = vmax.f32 %v2557, %v1316
          %v2570 = vmax.f32 %v2558, %v1317
          %v2571 = vmax.f32 %v2559, %v1318
          %v2572 = vmax.f32 %v2560, %v1319
          %v2573 = vadd.f32 %v2536, %v2569
          %v2574 = vadd.f32 %v2537, %v2570
          %v2575 = vadd.f32 %v2538, %v2571
          %v2576 = vadd.f32 %v2539, %v2572
          %v2577 = vmax.f32 %v2557, %v1324
          %v2578 = vmax.f32 %v2558, %v1325
          %v2579 = vmax.f32 %v2559, %v1326
          %v2580 = vmax.f32 %v2560, %v1327
          %v2581 = vadd.f32 %v2544, %v2577
          %v2582 = vadd.f32 %v2545, %v2578
          %v2583 = vadd.f32 %v2546, %v2579
          %v2584 = vadd.f32 %v2547, %v2580
          %v2585 = vmax.f32 %v2557, %v1332
          %v2586 = vmax.f32 %v2558, %v1333
          %v2587 = vmax.f32 %v2559, %v1334
          %v2588 = vmax.f32 %v2560, %v1335
          %v2589 = vadd.f32 %v2552, %v2585
          %v2590 = vadd.f32 %v2553, %v2586
          %v2591 = vadd.f32 %v2554, %v2587
          %v2592 = vadd.f32 %v2555, %v2588
          %s2593 = scalar_lea.vmem [#allocation2], 1088
          %v2594 = vld [vmem:[%s2593] sm:$0xff]
          %v2595 = vld [vmem:[%s2593 + $0x8] sm:$0xff]
          %v2596 = vld [vmem:[%s2593 + $0x10] sm:$0xff]
          %v2597 = vld [vmem:[%s2593 + $0x18] sm:$0xff]
          %v2598 = vmax.f32 %v2594, %v1308
          %v2599 = vmax.f32 %v2595, %v1309
          %v2600 = vmax.f32 %v2596, %v1310
          %v2601 = vmax.f32 %v2597, %v1311
          %v2602 = vadd.f32 %v2565, %v2598
          %v2603 = vadd.f32 %v2566, %v2599
          %v2604 = vadd.f32 %v2567, %v2600
          %v2605 = vadd.f32 %v2568, %v2601
          %v2606 = vmax.f32 %v2594, %v1316
          %v2607 = vmax.f32 %v2595, %v1317
          %v2608 = vmax.f32 %v2596, %v1318
          %v2609 = vmax.f32 %v2597, %v1319
          %v2610 = vadd.f32 %v2573, %v2606
          %v2611 = vadd.f32 %v2574, %v2607
          %v2612 = vadd.f32 %v2575, %v2608
          %v2613 = vadd.f32 %v2576, %v2609
          %v2614 = vmax.f32 %v2594, %v1324
          %v2615 = vmax.f32 %v2595, %v1325
          %v2616 = vmax.f32 %v2596, %v1326
          %v2617 = vmax.f32 %v2597, %v1327
          %v2618 = vadd.f32 %v2581, %v2614
          %v2619 = vadd.f32 %v2582, %v2615
          %v2620 = vadd.f32 %v2583, %v2616
          %v2621 = vadd.f32 %v2584, %v2617
          %v2622 = vmax.f32 %v2594, %v1332
          %v2623 = vmax.f32 %v2595, %v1333
          %v2624 = vmax.f32 %v2596, %v1334
          %v2625 = vmax.f32 %v2597, %v1335
          %v2626 = vadd.f32 %v2589, %v2622
          %v2627 = vadd.f32 %v2590, %v2623
          %v2628 = vadd.f32 %v2591, %v2624
          %v2629 = vadd.f32 %v2592, %v2625
          %s2630 = scalar_lea.vmem [#allocation2], 1120
          %v2631 = vld [vmem:[%s2630] sm:$0xff]
          %v2632 = vld [vmem:[%s2630 + $0x8] sm:$0xff]
          %v2633 = vld [vmem:[%s2630 + $0x10] sm:$0xff]
          %v2634 = vld [vmem:[%s2630 + $0x18] sm:$0xff]
          %v2635 = vmax.f32 %v2631, %v1308
          %v2636 = vmax.f32 %v2632, %v1309
          %v2637 = vmax.f32 %v2633, %v1310
          %v2638 = vmax.f32 %v2634, %v1311
          %v2639 = vadd.f32 %v2602, %v2635
          %v2640 = vadd.f32 %v2603, %v2636
          %v2641 = vadd.f32 %v2604, %v2637
          %v2642 = vadd.f32 %v2605, %v2638
          %v2643 = vmax.f32 %v2631, %v1316
          %v2644 = vmax.f32 %v2632, %v1317
          %v2645 = vmax.f32 %v2633, %v1318
          %v2646 = vmax.f32 %v2634, %v1319
          %v2647 = vadd.f32 %v2610, %v2643
          %v2648 = vadd.f32 %v2611, %v2644
          %v2649 = vadd.f32 %v2612, %v2645
          %v2650 = vadd.f32 %v2613, %v2646
          %v2651 = vmax.f32 %v2631, %v1324
          %v2652 = vmax.f32 %v2632, %v1325
          %v2653 = vmax.f32 %v2633, %v1326
          %v2654 = vmax.f32 %v2634, %v1327
          %v2655 = vadd.f32 %v2618, %v2651
          %v2656 = vadd.f32 %v2619, %v2652
          %v2657 = vadd.f32 %v2620, %v2653
          %v2658 = vadd.f32 %v2621, %v2654
          %v2659 = vmax.f32 %v2631, %v1332
          %v2660 = vmax.f32 %v2632, %v1333
          %v2661 = vmax.f32 %v2633, %v1334
          %v2662 = vmax.f32 %v2634, %v1335
          %v2663 = vadd.f32 %v2626, %v2659
          %v2664 = vadd.f32 %v2627, %v2660
          %v2665 = vadd.f32 %v2628, %v2661
          %v2666 = vadd.f32 %v2629, %v2662
          %s2667 = sshra.s32 %s1304, 3
          %s2668 = sand.u32 %s1304, 7
          %s2669 = sshra.s32 %s1304, 3
          %s2670 = sand.u32 %s1304, 7
          %s2671 = smul.u32 %s2667, 2
          %s2672 = smul.u32 %s2671, 8
          %s2673 = sadd.s32 %s2672, %s2670
          %s2674 = scalar_lea.vmem %s161, %s2673 [#allocation3]
          %v2675 = vld [vmem:[%s2674] ss:$8 sm:$0x3]
          %s2676 = smul.u32 %s1304, 16
          %s2677 = scalar_lea.vmem %s1, %s2676
          %v2678 = vld [vmem:[%s2677] sm:$0xff]
          %v2679 = vld [vmem:[%s2677 + $0x8] sm:$0xff]
          %v2681 = vperm.slane %v2675, 0
          %v2682 = vperm.slane %v2675, 1
          %2686 = vset.pattern.permute.xlu0 0
          %2687 = vperm.xlu0 %2686, %v2678
          %v2688 = vpop.permute.xlu0 %2687
          %2691 = vset.pattern.permute.xlu0 0
          %2692 = vperm.xlu0 %2691, %v2679
          %v2693 = vpop.permute.xlu0 %2692
          %v2695 = vadd.f32 %v2681, %v2688
          %v2696 = vadd.f32 %v2682, %v2688
          %v2697 = vadd.f32 %v2681, %v2693
          %v2698 = vadd.f32 %v2682, %v2693
          %v2699 = vmul.f32 %v2695, 36.0
          %v2700 = vmul.f32 %v2696, 36.0
          %v2701 = vmul.f32 %v2697, 36.0
          %v2702 = vmul.f32 %v2698, 36.0
          %v2703 = vsub.f32 %v2639, %v2699
          %v2704 = vsub.f32 %v2640, %v2700
          %v2705 = vsub.f32 %v2641, %v2701
          %v2706 = vsub.f32 %v2642, %v2702
          %v2707 = vadd.f32 %v2639, %v2699
          %v2708 = vadd.f32 %v2640, %v2700
          %v2709 = vadd.f32 %v2641, %v2701
          %v2710 = vadd.f32 %v2642, %v2702
          %vm2711 = vcmp.le.f32.partialorder %v2703, 1.0
          %vm2712 = vcmp.le.f32.partialorder %v2704, 1.0
          %vm2713 = vcmp.le.f32.partialorder %v2705, 1.0
          %vm2714 = vcmp.le.f32.partialorder %v2706, 1.0
          %v2715 = vsel %vm2711, 1, 0
          %v2716 = vsel %vm2712, 1, 0
          %v2717 = vsel %vm2713, 1, 0
          %v2718 = vsel %vm2714, 1, 0
          %v2719 = vcvt.s32.f32 %v2715
          %v2720 = vcvt.s32.f32 %v2716
          %v2721 = vcvt.s32.f32 %v2717
          %v2722 = vcvt.s32.f32 %v2718
          %vm2723 = vcmp.le.f32.partialorder %v2707, 1.0
          %vm2724 = vcmp.le.f32.partialorder %v2708, 1.0
          %vm2725 = vcmp.le.f32.partialorder %v2709, 1.0
          %vm2726 = vcmp.le.f32.partialorder %v2710, 1.0
          %v2727 = vsel %vm2723, 1, 0
          %v2728 = vsel %vm2724, 1, 0
          %v2729 = vsel %vm2725, 1, 0
          %v2730 = vsel %vm2726, 1, 0
          %v2731 = vcvt.s32.f32 %v2727
          %v2732 = vcvt.s32.f32 %v2728
          %v2733 = vcvt.s32.f32 %v2729
          %v2734 = vcvt.s32.f32 %v2730
          %v2735 = vadd.f32 %v2719, %v2731
          %v2736 = vadd.f32 %v2720, %v2732
          %v2737 = vadd.f32 %v2721, %v2733
          %v2738 = vadd.f32 %v2722, %v2734
          %v2739 = vadd.f32 %v1296, %v2735
          %v2740 = vadd.f32 %v1297, %v2736
          %v2741 = vadd.f32 %v1298, %v2737
          %v2742 = vadd.f32 %v1299, %v2738
          %v2743 = vsub.f32 %v2719, %v2731
          %v2744 = vsub.f32 %v2720, %v2732
          %v2745 = vsub.f32 %v2721, %v2733
          %v2746 = vsub.f32 %v2722, %v2734
          %v2747 = vmul.f32 %v2695, %v2743
          %v2748 = vmul.f32 %v2696, %v2744
          %v2749 = vmul.f32 %v2697, %v2745
          %v2750 = vmul.f32 %v2698, %v2746
          %v2751 = vadd.f32 %v1300, %v2747
          %v2752 = vadd.f32 %v1301, %v2748
          %v2753 = vadd.f32 %v1302, %v2749
          %v2754 = vadd.f32 %v1303, %v2750
          %s2755 = sshra.s32 %s1312, 3
          %s2756 = sand.u32 %s1312, 7
          %s2757 = sshra.s32 %s1312, 3
          %s2758 = sand.u32 %s1312, 7
          %s2759 = smul.u32 %s2755, 2
          %s2760 = smul.u32 %s2759, 8
          %s2761 = sadd.s32 %s2760, %s2758
          %s2762 = scalar_lea.vmem %s161, %s2761 [#allocation3]
          %v2763 = vld [vmem:[%s2762] ss:$8 sm:$0x3]
          %s2764 = smul.u32 %s1312, 16
          %s2765 = scalar_lea.vmem %s1, %s2764
          %v2766 = vld [vmem:[%s2765] sm:$0xff]
          %v2767 = vld [vmem:[%s2765 + $0x8] sm:$0xff]
          %v2769 = vperm.slane %v2763, 0
          %v2770 = vperm.slane %v2763, 1
          %2774 = vset.pattern.permute.xlu0 0
          %2775 = vperm.xlu0 %2774, %v2766
          %v2776 = vpop.permute.xlu0 %2775
          %2779 = vset.pattern.permute.xlu0 0
          %2780 = vperm.xlu0 %2779, %v2767
          %v2781 = vpop.permute.xlu0 %2780
          %v2783 = vadd.f32 %v2769, %v2776
          %v2784 = vadd.f32 %v2770, %v2776
          %v2785 = vadd.f32 %v2769, %v2781
          %v2786 = vadd.f32 %v2770, %v2781
          %v2787 = vmul.f32 %v2783, 36.0
          %v2788 = vmul.f32 %v2784, 36.0
          %v2789 = vmul.f32 %v2785, 36.0
          %v2790 = vmul.f32 %v2786, 36.0
          %v2791 = vsub.f32 %v2647, %v2787
          %v2792 = vsub.f32 %v2648, %v2788
          %v2793 = vsub.f32 %v2649, %v2789
          %v2794 = vsub.f32 %v2650, %v2790
          %v2795 = vadd.f32 %v2647, %v2787
          %v2796 = vadd.f32 %v2648, %v2788
          %v2797 = vadd.f32 %v2649, %v2789
          %v2798 = vadd.f32 %v2650, %v2790
          %vm2799 = vcmp.le.f32.partialorder %v2791, 1.0
          %vm2800 = vcmp.le.f32.partialorder %v2792, 1.0
          %vm2801 = vcmp.le.f32.partialorder %v2793, 1.0
          %vm2802 = vcmp.le.f32.partialorder %v2794, 1.0
          %v2803 = vsel %vm2799, 1, 0
          %v2804 = vsel %vm2800, 1, 0
          %v2805 = vsel %vm2801, 1, 0
          %v2806 = vsel %vm2802, 1, 0
          %v2807 = vcvt.s32.f32 %v2803
          %v2808 = vcvt.s32.f32 %v2804
          %v2809 = vcvt.s32.f32 %v2805
          %v2810 = vcvt.s32.f32 %v2806
          %vm2811 = vcmp.le.f32.partialorder %v2795, 1.0
          %vm2812 = vcmp.le.f32.partialorder %v2796, 1.0
          %vm2813 = vcmp.le.f32.partialorder %v2797, 1.0
          %vm2814 = vcmp.le.f32.partialorder %v2798, 1.0
          %v2815 = vsel %vm2811, 1, 0
          %v2816 = vsel %vm2812, 1, 0
          %v2817 = vsel %vm2813, 1, 0
          %v2818 = vsel %vm2814, 1, 0
          %v2819 = vcvt.s32.f32 %v2815
          %v2820 = vcvt.s32.f32 %v2816
          %v2821 = vcvt.s32.f32 %v2817
          %v2822 = vcvt.s32.f32 %v2818
          %v2823 = vadd.f32 %v2807, %v2819
          %v2824 = vadd.f32 %v2808, %v2820
          %v2825 = vadd.f32 %v2809, %v2821
          %v2826 = vadd.f32 %v2810, %v2822
          %v2827 = vadd.f32 %v2739, %v2823
          %v2828 = vadd.f32 %v2740, %v2824
          %v2829 = vadd.f32 %v2741, %v2825
          %v2830 = vadd.f32 %v2742, %v2826
          %v2831 = vsub.f32 %v2807, %v2819
          %v2832 = vsub.f32 %v2808, %v2820
          %v2833 = vsub.f32 %v2809, %v2821
          %v2834 = vsub.f32 %v2810, %v2822
          %v2835 = vmul.f32 %v2783, %v2831
          %v2836 = vmul.f32 %v2784, %v2832
          %v2837 = vmul.f32 %v2785, %v2833
          %v2838 = vmul.f32 %v2786, %v2834
          %v2839 = vadd.f32 %v2751, %v2835
          %v2840 = vadd.f32 %v2752, %v2836
          %v2841 = vadd.f32 %v2753, %v2837
          %v2842 = vadd.f32 %v2754, %v2838
          %s2843 = sshra.s32 %s1320, 3
          %s2844 = sand.u32 %s1320, 7
          %s2845 = sshra.s32 %s1320, 3
          %s2846 = sand.u32 %s1320, 7
          %s2847 = smul.u32 %s2843, 2
          %s2848 = smul.u32 %s2847, 8
          %s2849 = sadd.s32 %s2848, %s2846
          %s2850 = scalar_lea.vmem %s161, %s2849 [#allocation3]
          %v2851 = vld [vmem:[%s2850] ss:$8 sm:$0x3]
          %s2852 = smul.u32 %s1320, 16
          %s2853 = scalar_lea.vmem %s1, %s2852
          %v2854 = vld [vmem:[%s2853] sm:$0xff]
          %v2855 = vld [vmem:[%s2853 + $0x8] sm:$0xff]
          %v2857 = vperm.slane %v2851, 0
          %v2858 = vperm.slane %v2851, 1
          %2862 = vset.pattern.permute.xlu0 0
          %2863 = vperm.xlu0 %2862, %v2854
          %v2864 = vpop.permute.xlu0 %2863
          %2867 = vset.pattern.permute.xlu0 0
          %2868 = vperm.xlu0 %2867, %v2855
          %v2869 = vpop.permute.xlu0 %2868
          %v2871 = vadd.f32 %v2857, %v2864
          %v2872 = vadd.f32 %v2858, %v2864
          %v2873 = vadd.f32 %v2857, %v2869
          %v2874 = vadd.f32 %v2858, %v2869
          %v2875 = vmul.f32 %v2871, 36.0
          %v2876 = vmul.f32 %v2872, 36.0
          %v2877 = vmul.f32 %v2873, 36.0
          %v2878 = vmul.f32 %v2874, 36.0
          %v2879 = vsub.f32 %v2655, %v2875
          %v2880 = vsub.f32 %v2656, %v2876
          %v2881 = vsub.f32 %v2657, %v2877
          %v2882 = vsub.f32 %v2658, %v2878
          %v2883 = vadd.f32 %v2655, %v2875
          %v2884 = vadd.f32 %v2656, %v2876
          %v2885 = vadd.f32 %v2657, %v2877
          %v2886 = vadd.f32 %v2658, %v2878
          %vm2887 = vcmp.le.f32.partialorder %v2879, 1.0
          %vm2888 = vcmp.le.f32.partialorder %v2880, 1.0
          %vm2889 = vcmp.le.f32.partialorder %v2881, 1.0
          %vm2890 = vcmp.le.f32.partialorder %v2882, 1.0
          %v2891 = vsel %vm2887, 1, 0
          %v2892 = vsel %vm2888, 1, 0
          %v2893 = vsel %vm2889, 1, 0
          %v2894 = vsel %vm2890, 1, 0
          %v2895 = vcvt.s32.f32 %v2891
          %v2896 = vcvt.s32.f32 %v2892
          %v2897 = vcvt.s32.f32 %v2893
          %v2898 = vcvt.s32.f32 %v2894
          %vm2899 = vcmp.le.f32.partialorder %v2883, 1.0
          %vm2900 = vcmp.le.f32.partialorder %v2884, 1.0
          %vm2901 = vcmp.le.f32.partialorder %v2885, 1.0
          %vm2902 = vcmp.le.f32.partialorder %v2886, 1.0
          %v2903 = vsel %vm2899, 1, 0
          %v2904 = vsel %vm2900, 1, 0
          %v2905 = vsel %vm2901, 1, 0
          %v2906 = vsel %vm2902, 1, 0
          %v2907 = vcvt.s32.f32 %v2903
          %v2908 = vcvt.s32.f32 %v2904
          %v2909 = vcvt.s32.f32 %v2905
          %v2910 = vcvt.s32.f32 %v2906
          %v2911 = vadd.f32 %v2895, %v2907
          %v2912 = vadd.f32 %v2896, %v2908
          %v2913 = vadd.f32 %v2897, %v2909
          %v2914 = vadd.f32 %v2898, %v2910
          %v2915 = vadd.f32 %v2827, %v2911
          %v2916 = vadd.f32 %v2828, %v2912
          %v2917 = vadd.f32 %v2829, %v2913
          %v2918 = vadd.f32 %v2830, %v2914
          %v2919 = vsub.f32 %v2895, %v2907
          %v2920 = vsub.f32 %v2896, %v2908
          %v2921 = vsub.f32 %v2897, %v2909
          %v2922 = vsub.f32 %v2898, %v2910
          %v2923 = vmul.f32 %v2871, %v2919
          %v2924 = vmul.f32 %v2872, %v2920
          %v2925 = vmul.f32 %v2873, %v2921
          %v2926 = vmul.f32 %v2874, %v2922
          %v2927 = vadd.f32 %v2839, %v2923
          %v2928 = vadd.f32 %v2840, %v2924
          %v2929 = vadd.f32 %v2841, %v2925
          %v2930 = vadd.f32 %v2842, %v2926
          %s2931 = sshra.s32 %s1328, 3
          %s2932 = sand.u32 %s1328, 7
          %s2933 = sshra.s32 %s1328, 3
          %s2934 = sand.u32 %s1328, 7
          %s2935 = smul.u32 %s2931, 2
          %s2936 = smul.u32 %s2935, 8
          %s2937 = sadd.s32 %s2936, %s2934
          %s2938 = scalar_lea.vmem %s161, %s2937 [#allocation3]
          %v2939 = vld [vmem:[%s2938] ss:$8 sm:$0x3]
          %s2940 = smul.u32 %s1328, 16
          %s2941 = scalar_lea.vmem %s1, %s2940
          %v2942 = vld [vmem:[%s2941] sm:$0xff]
          %v2943 = vld [vmem:[%s2941 + $0x8] sm:$0xff]
          %v2945 = vperm.slane %v2939, 0
          %v2946 = vperm.slane %v2939, 1
          %2950 = vset.pattern.permute.xlu0 0
          %2951 = vperm.xlu0 %2950, %v2942
          %v2952 = vpop.permute.xlu0 %2951
          %2955 = vset.pattern.permute.xlu0 0
          %2956 = vperm.xlu0 %2955, %v2943
          %v2957 = vpop.permute.xlu0 %2956
          %v2959 = vadd.f32 %v2945, %v2952
          %v2960 = vadd.f32 %v2946, %v2952
          %v2961 = vadd.f32 %v2945, %v2957
          %v2962 = vadd.f32 %v2946, %v2957
          %v2963 = vmul.f32 %v2959, 36.0
          %v2964 = vmul.f32 %v2960, 36.0
          %v2965 = vmul.f32 %v2961, 36.0
          %v2966 = vmul.f32 %v2962, 36.0
          %v2967 = vsub.f32 %v2663, %v2963
          %v2968 = vsub.f32 %v2664, %v2964
          %v2969 = vsub.f32 %v2665, %v2965
          %v2970 = vsub.f32 %v2666, %v2966
          %v2971 = vadd.f32 %v2663, %v2963
          %v2972 = vadd.f32 %v2664, %v2964
          %v2973 = vadd.f32 %v2665, %v2965
          %v2974 = vadd.f32 %v2666, %v2966
          %vm2975 = vcmp.le.f32.partialorder %v2967, 1.0
          %vm2976 = vcmp.le.f32.partialorder %v2968, 1.0
          %vm2977 = vcmp.le.f32.partialorder %v2969, 1.0
          %vm2978 = vcmp.le.f32.partialorder %v2970, 1.0
          %v2979 = vsel %vm2975, 1, 0
          %v2980 = vsel %vm2976, 1, 0
          %v2981 = vsel %vm2977, 1, 0
          %v2982 = vsel %vm2978, 1, 0
          %v2983 = vcvt.s32.f32 %v2979
          %v2984 = vcvt.s32.f32 %v2980
          %v2985 = vcvt.s32.f32 %v2981
          %v2986 = vcvt.s32.f32 %v2982
          %vm2987 = vcmp.le.f32.partialorder %v2971, 1.0
          %vm2988 = vcmp.le.f32.partialorder %v2972, 1.0
          %vm2989 = vcmp.le.f32.partialorder %v2973, 1.0
          %vm2990 = vcmp.le.f32.partialorder %v2974, 1.0
          %v2991 = vsel %vm2987, 1, 0
          %v2992 = vsel %vm2988, 1, 0
          %v2993 = vsel %vm2989, 1, 0
          %v2994 = vsel %vm2990, 1, 0
          %v2995 = vcvt.s32.f32 %v2991
          %v2996 = vcvt.s32.f32 %v2992
          %v2997 = vcvt.s32.f32 %v2993
          %v2998 = vcvt.s32.f32 %v2994
          %v2999 = vadd.f32 %v2983, %v2995
          %v3000 = vadd.f32 %v2984, %v2996
          %v3001 = vadd.f32 %v2985, %v2997
          %v3002 = vadd.f32 %v2986, %v2998
          %v3003 = vadd.f32 %v2915, %v2999
          %v3004 = vadd.f32 %v2916, %v3000
          %v3005 = vadd.f32 %v2917, %v3001
          %v3006 = vadd.f32 %v2918, %v3002
          %v3007 = vsub.f32 %v2983, %v2995
          %v3008 = vsub.f32 %v2984, %v2996
          %v3009 = vsub.f32 %v2985, %v2997
          %v3010 = vsub.f32 %v2986, %v2998
          %v3011 = vmul.f32 %v2959, %v3007
          %v3012 = vmul.f32 %v2960, %v3008
          %v3013 = vmul.f32 %v2961, %v3009
          %v3014 = vmul.f32 %v2962, %v3010
          %v3015 = vadd.f32 %v2927, %v3011
          %v3016 = vadd.f32 %v2928, %v3012
          %v3017 = vadd.f32 %v2929, %v3013
          %v3018 = vadd.f32 %v2930, %v3014
        $region56: #{tpu_custom_call.1} parent=46 // loop_footer
          %s1295 = sadd.s32 1, %s1291
        $region57: #{tpu_custom_call.1} parent=46 // loop_footer_branch
          %1290 = sbr.rel target = $region53
        $region58: #{tpu_custom_call.1} parent=46 // loop_exit
          _
        %v3019 = vmax.f32 %v1296, 1.0
        %v3020 = vmax.f32 %v1297, 1.0
        %v3021 = vmax.f32 %v1298, 1.0
        %v3022 = vmax.f32 %v1299, 1.0
        %v3023 = vrcp.pop %v3019
        %v3024 = vmul.f32 %v3019, %v3023
        %v3025 = vsub.f32 1.0, %v3024
        %v3026 = vmul.f32 %v3023, %v3025
        %v3027 = vadd.f32 %v3023, %v3026
        %vm3028 = vweird.f32 %v3019
        %vm3029 = vweird.f32 %v3023
        %vm3030 = vmor %vm3028, %vm3029
        %v3031 = vsel %vm3030, %v3023, %v3027
        %v3032 = vand.u32 2147483647, %v3019
        %vm3033 = vcmp.eq.f32.partialorder %v3032, 8.507059e+37
        %v3034 = vand.u32 %v3019, 2147483648
        %v3035 = vor.u32 1.1754944e-38, %v3034
        %v3036 = vsel %vm3033, %v3035, %v3031
        %v3037 = vrcp.pop %v3020
        %v3038 = vmul.f32 %v3020, %v3037
        %v3039 = vsub.f32 1.0, %v3038
        %v3040 = vmul.f32 %v3037, %v3039
        %v3041 = vadd.f32 %v3037, %v3040
        %vm3042 = vweird.f32 %v3020
        %vm3043 = vweird.f32 %v3037
        %vm3044 = vmor %vm3042, %vm3043
        %v3045 = vsel %vm3044, %v3037, %v3041
        %v3046 = vand.u32 2147483647, %v3020
        %vm3047 = vcmp.eq.f32.partialorder %v3046, 8.507059e+37
        %v3048 = vand.u32 %v3020, 2147483648
        %v3049 = vor.u32 1.1754944e-38, %v3048
        %v3050 = vsel %vm3047, %v3049, %v3045
        %v3051 = vrcp.pop %v3021
        %v3052 = vmul.f32 %v3021, %v3051
        %v3053 = vsub.f32 1.0, %v3052
        %v3054 = vmul.f32 %v3051, %v3053
        %v3055 = vadd.f32 %v3051, %v3054
        %vm3056 = vweird.f32 %v3021
        %vm3057 = vweird.f32 %v3051
        %vm3058 = vmor %vm3056, %vm3057
        %v3059 = vsel %vm3058, %v3051, %v3055
        %v3060 = vand.u32 2147483647, %v3021
        %vm3061 = vcmp.eq.f32.partialorder %v3060, 8.507059e+37
        %v3062 = vand.u32 %v3021, 2147483648
        %v3063 = vor.u32 1.1754944e-38, %v3062
        %v3064 = vsel %vm3061, %v3063, %v3059
        %v3065 = vrcp.pop %v3022
        %v3066 = vmul.f32 %v3022, %v3065
        %v3067 = vsub.f32 1.0, %v3066
        %v3068 = vmul.f32 %v3065, %v3067
        %v3069 = vadd.f32 %v3065, %v3068
        %vm3070 = vweird.f32 %v3022
        %vm3071 = vweird.f32 %v3065
        %vm3072 = vmor %vm3070, %vm3071
        %v3073 = vsel %vm3072, %v3065, %v3069
        %v3074 = vand.u32 2147483647, %v3022
        %vm3075 = vcmp.eq.f32.partialorder %v3074, 8.507059e+37
        %v3076 = vand.u32 %v3022, 2147483648
        %v3077 = vor.u32 1.1754944e-38, %v3076
        %v3078 = vsel %vm3075, %v3077, %v3073
        %v3079 = vsub.f32 %v1300, 1.0
        %v3080 = vsub.f32 %v1301, 1.0
        %v3081 = vsub.f32 %v1302, 1.0
        %v3082 = vsub.f32 %v1303, 1.0
        %v3083 = vmul.f32 %v3079, %v3036
        %v3084 = vmul.f32 %v3080, %v3050
        %v3085 = vmul.f32 %v3081, %v3064
        %v3086 = vmul.f32 %v3082, %v3078
        %vm3087 = vcmp.gt.f32.partialorder %v1296, 0.0
        %vm3088 = vcmp.gt.f32.partialorder %v1297, 0.0
        %vm3089 = vcmp.gt.f32.partialorder %v1298, 0.0
        %vm3090 = vcmp.gt.f32.partialorder %v1299, 0.0
        %v3091 = vmul.f32 %v3083, 72.0
        %v3092 = vmul.f32 %v3084, 72.0
        %v3093 = vmul.f32 %v3085, 72.0
        %v3094 = vmul.f32 %v3086, 72.0
        %v3095 = vsel %vm3087, %v3091, 0.0
        %v3096 = vsel %vm3088, %v3092, 0.0
        %v3097 = vsel %vm3089, %v3093, 0.0
        %v3098 = vsel %vm3090, %v3094, 0.0
        %v3099 = vsub.f32 %v3095, %v3097
        %v3100 = vsub.f32 %v3096, %v3098
        %v3101 = vmul.f32 %v3099, 0.5
        %v3102 = vmul.f32 %v3100, 0.5
        %3103 = vst [vmem:[%s179] sm:$0xff] %v3101
        %3104 = vst [vmem:[%s179 + $0x8] sm:$0xff] %v3102
        %s3105 = sand.u32 %s71, 1
        %s3106 = scalar_lea.sflag [#allocation5], %s3105
        %s3107 = sand.u32 %s71, 1
        %s3108 = smul.addr %s3107, 16
        %s3109 = scalar_lea.vmem [#allocation4], %s3108
        // Predicated region
        $region59: #{tpu_custom_call.1} parent=46 // pred_check
          %p3110 = pneg %p81
        $region60: #{tpu_custom_call.1} parent=46 // pred_check_branch
          %3112 = sbr.rel (%p3110) target = $region62
        $region61: #{tpu_custom_call.1} parent=46 // pred_region
          %s3113 = smul.u32 2, %s16
          %3115 = vsyncadd %s3106, 0
          %s3116 = smul.addr %s3113, 8
          %s3117 = scalar_lea.hbm %s2, %s3116
          %s3119 = sshll.u32 %s3109, 4
          %s3120 = int_to_ptr.vmem [resolvable:$true] %s3119
          %s3121 = sshll.u32 %s3117, 4
          %s3122 = int_to_ptr.hbm [resolvable:$true] %s3121
          %3124 = dma.vmem_to_hbm [thread:$0]  %s3120, 256, %s3122, %s3106
        $region62: #{tpu_custom_call.1} parent=46 // pred_fallthru
          _
      $region47: #{tpu_custom_call.1} parent=5 // pred_fallthru
        _
      %p3125 = scmp.le.s32.totalorder 2, %s11
      // Predicated region
      $region63: #{tpu_custom_call.1} parent=5 // pred_check
        %p3126 = pneg %p3125
      $region64: #{tpu_custom_call.1} parent=5 // pred_check_branch
        %3128 = sbr.rel (%p3126) target = $region66
      $region65: #{tpu_custom_call.1} parent=5 // pred_region
        %s3129 = ssub.s32 %s11, 2
        // Predicated region
        $region67: #{tpu_custom_call.1} parent=65 // pred_check
          %p3130 = pneg %p87
        $region68: #{tpu_custom_call.1} parent=65 // pred_check_branch
          %3132 = sbr.rel (%p3130) target = $region70
        $region69: #{tpu_custom_call.1} parent=65 // pred_region
          %s3133 = sand.u32 %s72, 1
          %s3134 = scalar_lea.sflag [#allocation5], %s3133
          %s3135 = sand.u32 %s72, 1
          %s3136 = smul.addr %s3135, 16
          %s3137 = scalar_lea.vmem [#allocation4], %s3136
          %3139 = dma.done %s3134, 256
        $region70: #{tpu_custom_call.1} parent=65 // pred_fallthru
          _
      $region66: #{tpu_custom_call.1} parent=5 // pred_fallthru
        _
    $region6: #{tpu_custom_call.1} parent=1 // loop_footer
      %s15 = sadd.s32 1, %s11
    $region7: #{tpu_custom_call.1} parent=1 // loop_footer_branch
      %10 = sbr.rel target = $region3
    $region8: #{tpu_custom_call.1} parent=1 // loop_exit
      _
    %3140 = vsyncpa [#allocation5], 1
    %s3141 = scalar_lea.sflag [#allocation5], 1
    %3142 = vsyncpa %s3141, 1

</llo_original>
